<compile_context>
chip_gen: v5e
topology: v5e:2x2
jax: 0.10.0
libtpu: 0.0.40
codegen_flags: <defaults>
</compile_context>

<pallas_src>
import functools

import jax
import jax.numpy as jnp
from jax.experimental import pallas as pl
from jax.experimental.pallas import tpu as pltpu

D = 512          # feature dim fixed by the module (Linear(512, 512))
EPS = 1e-5       # nn.LayerNorm default eps
SLOPE = 0.01     # nn.LeakyReLU default negative_slope


def _leaky(v):
    return jnp.where(v >= 0, v, SLOPE * v)


# --------------------------------------------------------------------------
# Prologue kernel: mod = f_add(identity) + f_mul(identity), batched over B.
# identity is passed flattened as (B, 512); LayerNorm([1,512]) on a (B,1,512)
# input is a per-row normalization over the 512 features.
# --------------------------------------------------------------------------
def _branch_kernel(id_ref,
                   wa1_ref, ba1_ref, wa2_ref, ba2_ref, ga_ref, bea_ref,
                   wm1_ref, bm1_ref, wm2_ref, bm2_ref, gm_ref, bem_ref,
                   mod_ref):
    ident = id_ref[...].astype(jnp.bfloat16)                      # (bt, D)

    def branch(wA, bA, wB, bB, g, be):
        h = jnp.dot(ident, wA[...], preferred_element_type=jnp.float32) + bA[...]
        h = jnp.dot(h.astype(jnp.bfloat16), wB[...],
                    preferred_element_type=jnp.float32) + bB[...]
        m = jnp.mean(h, axis=-1, keepdims=True)
        v = jnp.mean(jnp.square(h - m), axis=-1, keepdims=True)
        hn = (h - m) * jax.lax.rsqrt(v + EPS) * g[...] + be[...]
        return _leaky(hn)

    mod = branch(wa1_ref, ba1_ref, wa2_ref, ba2_ref, ga_ref, bea_ref) \
        + branch(wm1_ref, bm1_ref, wm2_ref, bm2_ref, gm_ref, bem_ref)
    mod_ref[...] = mod.astype(mod_ref.dtype)


# --------------------------------------------------------------------------
# Main kernel: linear_layer + LayerNorm([num,512]) + add modulation + LeakyReLU
# --------------------------------------------------------------------------
def _main_kernel(x_ref, mod_ref, w1_ref, b1_ref, gn_ref, bn_ref, out_ref,
                 *, bt, num):
    # (Bt, num, D) -> (Bt*num, D) so the matmul fills the MXU rows.
    x2 = x_ref[...].reshape(bt * num, D).astype(jnp.bfloat16)
    y = jnp.dot(x2, w1_ref[...], preferred_element_type=jnp.float32) + b1_ref[...]
    y = y.reshape(bt, num, D)

    # LayerNorm([num, 512]): per-sample normalization over (num, D).
    # Fused single pass: sum and sum-of-squares, scaled by 1/(num*D).
    n_inv = 1.0 / float(num * D)
    s1 = jnp.sum(y, axis=(1, 2), keepdims=True)                   # (bt,1,1)
    s2 = jnp.sum(y * y, axis=(1, 2), keepdims=True)               # (bt,1,1)
    mean = s1 * n_inv
    var = jnp.maximum(s2 * n_inv - mean * mean, 0.0)
    x_norm = (y - mean) * jax.lax.rsqrt(var + EPS) * gn_ref[...] + bn_ref[...]

    out = _leaky(x_norm + mod_ref[...])                           # (bt,num,D)+(bt,1,D)
    out_ref[...] = out.astype(out_ref.dtype)


def _pick_tile(total, target, align=1):
    """Largest t<=target that divides `total` (and is a multiple of `align`
    unless it equals `total`)."""
    t = max(1, min(total, target))
    while t > 1 and (total % t or (t % align and t != total)):
        t -= 1
    return t


def mapper_block_forward(x, identity, p):
    B, num, d = x.shape
    assert d == D and identity.shape == (B, 1, D)
    bf16 = jnp.bfloat16

    # ---------------- prologue: batched modulation term ----------------
    id2 = identity.reshape(B, D)
    bt_mod = _pick_tile(B, 256, align=8)
    w_spec = pl.BlockSpec((D, D), lambda i: (0, 0))
    r_spec = pl.BlockSpec((1, D), lambda i: (0, 0))

    mod2 = pl.pallas_call(
        _branch_kernel,
        out_shape=jax.ShapeDtypeStruct((B, D), jnp.float32),
        grid_spec=pltpu.PrefetchScalarGridSpec(
            num_scalar_prefetch=0,
            grid=(B // bt_mod,),
            in_specs=[pl.BlockSpec((bt_mod, D), lambda i: (i, 0)),
                      w_spec, r_spec, w_spec, r_spec, r_spec, r_spec,
                      w_spec, r_spec, w_spec, r_spec, r_spec, r_spec],
            out_specs=pl.BlockSpec((bt_mod, D), lambda i: (i, 0)),
        ),
        compiler_params=pltpu.CompilerParams(
            dimension_semantics=("parallel",),
            vmem_limit_bytes=32 * 1024 * 1024),
    )(
        id2,
        p["wa1"].astype(bf16), p["ba1"], p["wa2"].astype(bf16), p["ba2"],
        p["ga"], p["bea"],
        p["wm1"].astype(bf16), p["bm1"], p["wm2"].astype(bf16), p["bm2"],
        p["gm"], p["bem"],
    )
    mod = mod2.reshape(B, 1, D)

    # ---------------- main kernel: batch-tiled over B ----------------
    # Aim for ~256 rows (Bt*num) per step to fill the MXU, but keep at least
    # 2 grid steps when possible so both v7x TensorCores get work.
    bt = _pick_tile(B, max(1, 256 // max(num, 1)))
    if B // bt < 2 and B > 1:
        bt = _pick_tile(B, pl.cdiv(B, 2))
    nb = B // bt

    kernel = functools.partial(_main_kernel, bt=bt, num=num)
    return pl.pallas_call(
        kernel,
        out_shape=jax.ShapeDtypeStruct((B, num, D), x.dtype),
        grid_spec=pltpu.PrefetchScalarGridSpec(
            num_scalar_prefetch=0,
            grid=(nb,),
            in_specs=[
                pl.BlockSpec((bt, num, D), lambda b: (b, 0, 0)),  # x
                pl.BlockSpec((bt, 1, D), lambda b: (b, 0, 0)),    # modulation term
                pl.BlockSpec((D, D), lambda b: (0, 0)),           # w1 (bf16)
                pl.BlockSpec((1, D), lambda b: (0, 0)),           # b1
                pl.BlockSpec((num, D), lambda b: (0, 0)),         # LN gamma
                pl.BlockSpec((num, D), lambda b: (0, 0)),         # LN beta
            ],
            out_specs=pl.BlockSpec((bt, num, D), lambda b: (b, 0, 0)),
        ),
        compiler_params=pltpu.CompilerParams(
            dimension_semantics=("parallel",),
            vmem_limit_bytes=32 * 1024 * 1024),
    )(x, mod, p["w1"].astype(bf16), p["b1"], p["gn"], p["bn"])


def reference_forward(x, identity, p):
    """Pure-JAX reference mirroring the PyTorch module semantics (and the
    kernel's bf16-input / f32-accumulate matmul precision)."""
    def mm(a, w):
        return jnp.dot(a.astype(jnp.bfloat16), w.astype(jnp.bfloat16),
                       preferred_element_type=jnp.float32)

    B, num, _ = x.shape
    y = mm(x.reshape(B * num, D), p["w1"]).reshape(B, num, D) + p["b1"]
    mean = jnp.mean(y, axis=(1, 2), keepdims=True)
    var = jnp.mean(jnp.square(y - mean), axis=(1, 2), keepdims=True)
    x_norm = (y - mean) / jnp.sqrt(var + EPS) * p["gn"] + p["bn"]

    id2 = identity.reshape(B, D)

    def branch(wA, bA, wB, bB, g, be):
        h = mm(id2, wA) + bA
        h = mm(h, wB) + bB
        m = jnp.mean(h, axis=-1, keepdims=True)
        v = jnp.mean(jnp.square(h - m), axis=-1, keepdims=True)
        hn = (h - m) / jnp.sqrt(v + EPS) * g + be
        return _leaky(hn)

    mod = branch(p["wa1"], p["ba1"], p["wa2"], p["ba2"], p["ga"], p["bea"]) \
        + branch(p["wm1"], p["bm1"], p["wm2"], p["bm2"], p["gm"], p["bem"])
    return _leaky(x_norm + mod.reshape(B, 1, D))


def init_params(key, num):
    ks = jax.random.split(key, 12)
    s = 0.02
    return {
        "w1": jax.random.normal(ks[0], (D, D), jnp.float32) * s,
        "b1": jax.random.normal(ks[1], (1, D), jnp.float32) * s,
        # LayerNorm([num, 512]) affine params
        "gn": jnp.ones((num, D), jnp.float32)
              + jax.random.normal(ks[2], (num, D), jnp.float32) * s,
        "bn": jax.random.normal(ks[3], (num, D), jnp.float32) * s,
        # f_add
        "wa1": jax.random.normal(ks[4], (D, D), jnp.float32) * s,
        "ba1": jax.random.normal(ks[5], (1, D), jnp.float32) * s,
        "wa2": jax.random.normal(ks[6], (D, D), jnp.float32) * s,
        "ba2": jax.random.normal(ks[7], (1, D), jnp.float32) * s,
        "ga": jnp.ones((1, D), jnp.float32),
        "bea": jnp.zeros((1, D), jnp.float32),
        # f_mul
        "wm1": jax.random.normal(ks[8], (D, D), jnp.float32) * s,
        "bm1": jax.random.normal(ks[9], (1, D), jnp.float32) * s,
        "wm2": jax.random.normal(ks[10], (D, D), jnp.float32) * s,
        "bm2": jax.random.normal(ks[11], (1, D), jnp.float32) * s,
        "gm": jnp.ones((1, D), jnp.float32),
        "bem": jnp.zeros((1, D), jnp.float32),
    }


if __name__ == "__main__":
    B, NUM = 2, 8
    key = jax.random.PRNGKey(0)
    kx, kid, kp = jax.random.split(key, 3)

    x = jax.random.normal(kx, (B, NUM, D), jnp.float32)
    identity = jax.random.normal(kid, (B, 1, D), jnp.float32)
    params = init_params(kp, NUM)

    out = jax.block_until_ready(mapper_block_forward(x, identity, params))
    ref = jax.block_until_ready(reference_forward(x, identity, params))

    assert out.shape == (B, NUM, D)
    assert jnp.allclose(out, ref, rtol=2e-3, atol=2e-3), "mismatch vs JAX reference"

    print("KERNEL_OK")
</pallas_src>

<mosaic_0001>
module attributes {stable_mosaic.version = 11 : i64} {
  func.func @_branch_kernel(%arg0: i32, %arg1: memref<2x512xf32, #tpu.memory_space<vmem>>, %arg2: memref<512x512xbf16, #tpu.memory_space<vmem>>, %arg3: memref<1x512xf32, #tpu.memory_space<vmem>>, %arg4: memref<512x512xbf16, #tpu.memory_space<vmem>>, %arg5: memref<1x512xf32, #tpu.memory_space<vmem>>, %arg6: memref<1x512xf32, #tpu.memory_space<vmem>>, %arg7: memref<1x512xf32, #tpu.memory_space<vmem>>, %arg8: memref<512x512xbf16, #tpu.memory_space<vmem>>, %arg9: memref<1x512xf32, #tpu.memory_space<vmem>>, %arg10: memref<512x512xbf16, #tpu.memory_space<vmem>>, %arg11: memref<1x512xf32, #tpu.memory_space<vmem>>, %arg12: memref<1x512xf32, #tpu.memory_space<vmem>>, %arg13: memref<1x512xf32, #tpu.memory_space<vmem>>, %arg14: memref<2x512xf32, #tpu.memory_space<vmem>>) attributes {dimension_semantics = [#tpu.dimension_semantics<parallel>], iteration_bounds = array<i64: 1>, scalar_prefetch = 0 : i64, scratch_operands = 0 : i64, tpu.core_type = #tpu.core_type<tc>, window_params = [{transform_indices = @transform_0, window_bounds = array<i64: 2, 512>}, {pipeline_mode = #tpu.pipeline_mode<synchronous>, transform_indices = @transform_1, window_bounds = array<i64: 512, 512>}, {pipeline_mode = #tpu.pipeline_mode<synchronous>, transform_indices = @transform_2, window_bounds = array<i64: 1, 512>}, {pipeline_mode = #tpu.pipeline_mode<synchronous>, transform_indices = @transform_3, window_bounds = array<i64: 512, 512>}, {pipeline_mode = #tpu.pipeline_mode<synchronous>, transform_indices = @transform_4, window_bounds = array<i64: 1, 512>}, {pipeline_mode = #tpu.pipeline_mode<synchronous>, transform_indices = @transform_5, window_bounds = array<i64: 1, 512>}, {pipeline_mode = #tpu.pipeline_mode<synchronous>, transform_indices = @transform_6, window_bounds = array<i64: 1, 512>}, {pipeline_mode = #tpu.pipeline_mode<synchronous>, transform_indices = @transform_7, window_bounds = array<i64: 512, 512>}, {pipeline_mode = #tpu.pipeline_mode<synchronous>, transform_indices = @transform_8, window_bounds = array<i64: 1, 512>}, {pipeline_mode = #tpu.pipeline_mode<synchronous>, transform_indices = @transform_9, window_bounds = array<i64: 512, 512>}, {pipeline_mode = #tpu.pipeline_mode<synchronous>, transform_indices = @transform_10, window_bounds = array<i64: 1, 512>}, {pipeline_mode = #tpu.pipeline_mode<synchronous>, transform_indices = @transform_11, window_bounds = array<i64: 1, 512>}, {pipeline_mode = #tpu.pipeline_mode<synchronous>, transform_indices = @transform_12, window_bounds = array<i64: 1, 512>}, {transform_indices = @transform_13, window_bounds = array<i64: 2, 512>}]} {
    %c0 = arith.constant 0 : index
    %c0_0 = arith.constant 0 : index
    %0 = vector.load %arg1[%c0, %c0_0] : memref<2x512xf32, #tpu.memory_space<vmem>>, vector<2x512xf32>
    %1 = arith.truncf %0 : vector<2x512xf32> to vector<2x512xbf16>
    %c0_1 = arith.constant 0 : index
    %c0_2 = arith.constant 0 : index
    %2 = vector.load %arg2[%c0_1, %c0_2] : memref<512x512xbf16, #tpu.memory_space<vmem>>, vector<512x512xbf16>
    %cst = arith.constant dense<0.000000e+00> : vector<2x512xf32>
    %3 = tpu.matmul %1, %2, %cst {dimension_numbers = #tpu.dot_dimension_numbers<[1], [0], [0], [1], [0, 0, 1, 1], [], []>} : vector<2x512xbf16>, vector<512x512xbf16>, vector<2x512xf32> -> vector<2x512xf32>
    %c0_3 = arith.constant 0 : index
    %c0_4 = arith.constant 0 : index
    %4 = vector.load %arg3[%c0_3, %c0_4] : memref<1x512xf32, #tpu.memory_space<vmem>>, vector<1x512xf32>
    %5 = vector.broadcast %4 : vector<1x512xf32> to vector<2x512xf32>
    %6 = arith.addf %3, %5 : vector<2x512xf32>
    %7 = arith.truncf %6 : vector<2x512xf32> to vector<2x512xbf16>
    %c0_5 = arith.constant 0 : index
    %c0_6 = arith.constant 0 : index
    %8 = vector.load %arg4[%c0_5, %c0_6] : memref<512x512xbf16, #tpu.memory_space<vmem>>, vector<512x512xbf16>
    %cst_7 = arith.constant dense<0.000000e+00> : vector<2x512xf32>
    %9 = tpu.matmul %7, %8, %cst_7 {dimension_numbers = #tpu.dot_dimension_numbers<[1], [0], [0], [1], [0, 0, 1, 1], [], []>} : vector<2x512xbf16>, vector<512x512xbf16>, vector<2x512xf32> -> vector<2x512xf32>
    %c0_8 = arith.constant 0 : index
    %c0_9 = arith.constant 0 : index
    %10 = vector.load %arg5[%c0_8, %c0_9] : memref<1x512xf32, #tpu.memory_space<vmem>>, vector<1x512xf32>
    %11 = vector.broadcast %10 : vector<1x512xf32> to vector<2x512xf32>
    %12 = arith.addf %9, %11 : vector<2x512xf32>
    %cst_10 = arith.constant dense<0.000000e+00> : vector<2xf32>
    %13 = vector.multi_reduction <add>, %12, %cst_10 [1] : vector<2x512xf32> to vector<2xf32>
    %14 = vector.shape_cast %13 : vector<2xf32> to vector<2x1xf32>
    %cst_11 = arith.constant 5.120000e+02 : f32
    %15 = vector.broadcast %cst_11 : f32 to vector<2x1xf32>
    %16 = arith.divf %14, %15 : vector<2x1xf32>
    %17 = vector.broadcast %16 : vector<2x1xf32> to vector<2x512xf32>
    %18 = arith.subf %12, %17 : vector<2x512xf32>
    %19 = arith.mulf %18, %18 : vector<2x512xf32>
    %cst_12 = arith.constant dense<0.000000e+00> : vector<2xf32>
    %20 = vector.multi_reduction <add>, %19, %cst_12 [1] : vector<2x512xf32> to vector<2xf32>
    %21 = vector.shape_cast %20 : vector<2xf32> to vector<2x1xf32>
    %cst_13 = arith.constant 5.120000e+02 : f32
    %22 = vector.broadcast %cst_13 : f32 to vector<2x1xf32>
    %23 = arith.divf %21, %22 : vector<2x1xf32>
    %24 = vector.broadcast %16 : vector<2x1xf32> to vector<2x512xf32>
    %25 = arith.subf %12, %24 : vector<2x512xf32>
    %cst_14 = arith.constant 9.99999974E-6 : f32
    %26 = vector.broadcast %cst_14 : f32 to vector<2x1xf32>
    %27 = arith.addf %23, %26 : vector<2x1xf32>
    %28 = math.rsqrt %27 : vector<2x1xf32>
    %29 = vector.broadcast %28 : vector<2x1xf32> to vector<2x512xf32>
    %30 = arith.mulf %25, %29 : vector<2x512xf32>
    %c0_15 = arith.constant 0 : index
    %c0_16 = arith.constant 0 : index
    %31 = vector.load %arg6[%c0_15, %c0_16] : memref<1x512xf32, #tpu.memory_space<vmem>>, vector<1x512xf32>
    %32 = vector.broadcast %31 : vector<1x512xf32> to vector<2x512xf32>
    %33 = arith.mulf %30, %32 : vector<2x512xf32>
    %c0_17 = arith.constant 0 : index
    %c0_18 = arith.constant 0 : index
    %34 = vector.load %arg7[%c0_17, %c0_18] : memref<1x512xf32, #tpu.memory_space<vmem>>, vector<1x512xf32>
    %35 = vector.broadcast %34 : vector<1x512xf32> to vector<2x512xf32>
    %36 = arith.addf %33, %35 : vector<2x512xf32>
    %cst_19 = arith.constant 0.000000e+00 : f32
    %37 = vector.broadcast %cst_19 : f32 to vector<2x512xf32>
    %38 = arith.cmpf oge, %36, %37 : vector<2x512xf32>
    %cst_20 = arith.constant 0.00999999977 : f32
    %39 = vector.broadcast %cst_20 : f32 to vector<2x512xf32>
    %40 = arith.mulf %39, %36 : vector<2x512xf32>
    %41 = arith.select %38, %36, %40 : vector<2x512xi1>, vector<2x512xf32>
    %c0_21 = arith.constant 0 : index
    %c0_22 = arith.constant 0 : index
    %42 = vector.load %arg8[%c0_21, %c0_22] : memref<512x512xbf16, #tpu.memory_space<vmem>>, vector<512x512xbf16>
    %cst_23 = arith.constant dense<0.000000e+00> : vector<2x512xf32>
    %43 = tpu.matmul %1, %42, %cst_23 {dimension_numbers = #tpu.dot_dimension_numbers<[1], [0], [0], [1], [0, 0, 1, 1], [], []>} : vector<2x512xbf16>, vector<512x512xbf16>, vector<2x512xf32> -> vector<2x512xf32>
    %c0_24 = arith.constant 0 : index
    %c0_25 = arith.constant 0 : index
    %44 = vector.load %arg9[%c0_24, %c0_25] : memref<1x512xf32, #tpu.memory_space<vmem>>, vector<1x512xf32>
    %45 = vector.broadcast %44 : vector<1x512xf32> to vector<2x512xf32>
    %46 = arith.addf %43, %45 : vector<2x512xf32>
    %47 = arith.truncf %46 : vector<2x512xf32> to vector<2x512xbf16>
    %c0_26 = arith.constant 0 : index
    %c0_27 = arith.constant 0 : index
    %48 = vector.load %arg10[%c0_26, %c0_27] : memref<512x512xbf16, #tpu.memory_space<vmem>>, vector<512x512xbf16>
    %cst_28 = arith.constant dense<0.000000e+00> : vector<2x512xf32>
    %49 = tpu.matmul %47, %48, %cst_28 {dimension_numbers = #tpu.dot_dimension_numbers<[1], [0], [0], [1], [0, 0, 1, 1], [], []>} : vector<2x512xbf16>, vector<512x512xbf16>, vector<2x512xf32> -> vector<2x512xf32>
    %c0_29 = arith.constant 0 : index
    %c0_30 = arith.constant 0 : index
    %50 = vector.load %arg11[%c0_29, %c0_30] : memref<1x512xf32, #tpu.memory_space<vmem>>, vector<1x512xf32>
    %51 = vector.broadcast %50 : vector<1x512xf32> to vector<2x512xf32>
    %52 = arith.addf %49, %51 : vector<2x512xf32>
    %cst_31 = arith.constant dense<0.000000e+00> : vector<2xf32>
    %53 = vector.multi_reduction <add>, %52, %cst_31 [1] : vector<2x512xf32> to vector<2xf32>
    %54 = vector.shape_cast %53 : vector<2xf32> to vector<2x1xf32>
    %cst_32 = arith.constant 5.120000e+02 : f32
    %55 = vector.broadcast %cst_32 : f32 to vector<2x1xf32>
    %56 = arith.divf %54, %55 : vector<2x1xf32>
    %57 = vector.broadcast %56 : vector<2x1xf32> to vector<2x512xf32>
    %58 = arith.subf %52, %57 : vector<2x512xf32>
    %59 = arith.mulf %58, %58 : vector<2x512xf32>
    %cst_33 = arith.constant dense<0.000000e+00> : vector<2xf32>
    %60 = vector.multi_reduction <add>, %59, %cst_33 [1] : vector<2x512xf32> to vector<2xf32>
    %61 = vector.shape_cast %60 : vector<2xf32> to vector<2x1xf32>
    %cst_34 = arith.constant 5.120000e+02 : f32
    %62 = vector.broadcast %cst_34 : f32 to vector<2x1xf32>
    %63 = arith.divf %61, %62 : vector<2x1xf32>
    %64 = vector.broadcast %56 : vector<2x1xf32> to vector<2x512xf32>
    %65 = arith.subf %52, %64 : vector<2x512xf32>
    %cst_35 = arith.constant 9.99999974E-6 : f32
    %66 = vector.broadcast %cst_35 : f32 to vector<2x1xf32>
    %67 = arith.addf %63, %66 : vector<2x1xf32>
    %68 = math.rsqrt %67 : vector<2x1xf32>
    %69 = vector.broadcast %68 : vector<2x1xf32> to vector<2x512xf32>
    %70 = arith.mulf %65, %69 : vector<2x512xf32>
    %c0_36 = arith.constant 0 : index
    %c0_37 = arith.constant 0 : index
    %71 = vector.load %arg12[%c0_36, %c0_37] : memref<1x512xf32, #tpu.memory_space<vmem>>, vector<1x512xf32>
    %72 = vector.broadcast %71 : vector<1x512xf32> to vector<2x512xf32>
    %73 = arith.mulf %70, %72 : vector<2x512xf32>
    %c0_38 = arith.constant 0 : index
    %c0_39 = arith.constant 0 : index
    %74 = vector.load %arg13[%c0_38, %c0_39] : memref<1x512xf32, #tpu.memory_space<vmem>>, vector<1x512xf32>
    %75 = vector.broadcast %74 : vector<1x512xf32> to vector<2x512xf32>
    %76 = arith.addf %73, %75 : vector<2x512xf32>
    %cst_40 = arith.constant 0.000000e+00 : f32
    %77 = vector.broadcast %cst_40 : f32 to vector<2x512xf32>
    %78 = arith.cmpf oge, %76, %77 : vector<2x512xf32>
    %cst_41 = arith.constant 0.00999999977 : f32
    %79 = vector.broadcast %cst_41 : f32 to vector<2x512xf32>
    %80 = arith.mulf %79, %76 : vector<2x512xf32>
    %81 = arith.select %78, %76, %80 : vector<2x512xi1>, vector<2x512xf32>
    %82 = arith.addf %41, %81 : vector<2x512xf32>
    %c0_42 = arith.constant 0 : index
    %c0_43 = arith.constant 0 : index
    %83 = vector.load %arg14[%c0_42, %c0_43] : memref<2x512xf32, #tpu.memory_space<vmem>>, vector<2x512xf32>
    tpu.vector_store %arg14[%c0_42, %c0_43], %82 {strides = array<i32>} : memref<2x512xf32, #tpu.memory_space<vmem>>, vector<2x512xf32>,
    return
  }
  func.func @transform_0(%arg0: i32) -> (i32, i32) {
    %c0_i32 = arith.constant 0 : i32
    %c0_i32_0 = arith.constant 0 : i32
    return %arg0, %c0_i32 : i32, i32
  }
  func.func @transform_1(%arg0: i32) -> (i32, i32) {
    %c0_i32 = arith.constant 0 : i32
    %c0_i32_0 = arith.constant 0 : i32
    %c0_i32_1 = arith.constant 0 : i32
    return %c0_i32, %c0_i32_0 : i32, i32
  }
  func.func @transform_2(%arg0: i32) -> (i32, i32) {
    %c0_i32 = arith.constant 0 : i32
    %c0_i32_0 = arith.constant 0 : i32
    %c0_i32_1 = arith.constant 0 : i32
    return %c0_i32, %c0_i32_0 : i32, i32
  }
  func.func @transform_3(%arg0: i32) -> (i32, i32) {
    %c0_i32 = arith.constant 0 : i32
    %c0_i32_0 = arith.constant 0 : i32
    %c0_i32_1 = arith.constant 0 : i32
    return %c0_i32, %c0_i32_0 : i32, i32
  }
  func.func @transform_4(%arg0: i32) -> (i32, i32) {
    %c0_i32 = arith.constant 0 : i32
    %c0_i32_0 = arith.constant 0 : i32
    %c0_i32_1 = arith.constant 0 : i32
    return %c0_i32, %c0_i32_0 : i32, i32
  }
  func.func @transform_5(%arg0: i32) -> (i32, i32) {
    %c0_i32 = arith.constant 0 : i32
    %c0_i32_0 = arith.constant 0 : i32
    %c0_i32_1 = arith.constant 0 : i32
    return %c0_i32, %c0_i32_0 : i32, i32
  }
  func.func @transform_6(%arg0: i32) -> (i32, i32) {
    %c0_i32 = arith.constant 0 : i32
    %c0_i32_0 = arith.constant 0 : i32
    %c0_i32_1 = arith.constant 0 : i32
    return %c0_i32, %c0_i32_0 : i32, i32
  }
  func.func @transform_7(%arg0: i32) -> (i32, i32) {
    %c0_i32 = arith.constant 0 : i32
    %c0_i32_0 = arith.constant 0 : i32
    %c0_i32_1 = arith.constant 0 : i32
    return %c0_i32, %c0_i32_0 : i32, i32
  }
  func.func @transform_8(%arg0: i32) -> (i32, i32) {
    %c0_i32 = arith.constant 0 : i32
    %c0_i32_0 = arith.constant 0 : i32
    %c0_i32_1 = arith.constant 0 : i32
    return %c0_i32, %c0_i32_0 : i32, i32
  }
  func.func @transform_9(%arg0: i32) -> (i32, i32) {
    %c0_i32 = arith.constant 0 : i32
    %c0_i32_0 = arith.constant 0 : i32
    %c0_i32_1 = arith.constant 0 : i32
    return %c0_i32, %c0_i32_0 : i32, i32
  }
  func.func @transform_10(%arg0: i32) -> (i32, i32) {
    %c0_i32 = arith.constant 0 : i32
    %c0_i32_0 = arith.constant 0 : i32
    %c0_i32_1 = arith.constant 0 : i32
    return %c0_i32, %c0_i32_0 : i32, i32
  }
  func.func @transform_11(%arg0: i32) -> (i32, i32) {
    %c0_i32 = arith.constant 0 : i32
    %c0_i32_0 = arith.constant 0 : i32
    %c0_i32_1 = arith.constant 0 : i32
    return %c0_i32, %c0_i32_0 : i32, i32
  }
  func.func @transform_12(%arg0: i32) -> (i32, i32) {
    %c0_i32 = arith.constant 0 : i32
    %c0_i32_0 = arith.constant 0 : i32
    %c0_i32_1 = arith.constant 0 : i32
    return %c0_i32, %c0_i32_0 : i32, i32
  }
  func.func @transform_13(%arg0: i32) -> (i32, i32) {
    %c0_i32 = arith.constant 0 : i32
    %c0_i32_0 = arith.constant 0 : i32
    return %arg0, %c0_i32 : i32, i32
  }
}

</mosaic_0001>

<llo_original>
// kernel: tpu_custom_call.1
$region0: #{tpu_custom_call.1}
  #allocation0 [shape = 'u32[]', space=smem, size = 0x4, offset = 0x4, fixed_abs, tag = 'smem constant byte address 0x4 - core index']
  #allocation1 [shape = 'u32[72,128]{1,0:T(1,128)}', space=vmem, size = 0x9000, scoped, tag = 'internal scratch']
  %s0 = inlined_call_operand.hbm [shape: f32[2,512], index: 0, kind: input, shape index: {}]
  %s1 = inlined_call_operand.hbm [shape: bf16[512,512], index: 1, kind: input, shape index: {}]
  %s2 = inlined_call_operand.hbm [shape: f32[1,512], index: 2, kind: input, shape index: {}]
  %s3 = inlined_call_operand.hbm [shape: bf16[512,512], index: 3, kind: input, shape index: {}]
  %s4 = inlined_call_operand.hbm [shape: f32[1,512], index: 4, kind: input, shape index: {}]
  %s5 = inlined_call_operand.vmem [shape: f32[1,512], index: 5, kind: input, shape index: {}]
  %s6 = inlined_call_operand.hbm [shape: f32[1,512], index: 6, kind: input, shape index: {}]
  %s7 = inlined_call_operand.hbm [shape: bf16[512,512], index: 7, kind: input, shape index: {}]
  %s8 = inlined_call_operand.hbm [shape: f32[1,512], index: 8, kind: input, shape index: {}]
  %s9 = inlined_call_operand.hbm [shape: bf16[512,512], index: 9, kind: input, shape index: {}]
  %s10 = inlined_call_operand.vmem [shape: f32[1,512], index: 10, kind: input, shape index: {}]
  %s11 = inlined_call_operand.hbm [shape: f32[1,512], index: 11, kind: input, shape index: {}]
  %s12 = inlined_call_operand.hbm [shape: f32[1,512], index: 12, kind: input, shape index: {}]
  %s13 = inlined_call_operand.hbm [shape: f32[2,512], index: 13, kind: output, shape index: {}]
  %s14 = sld [smem:[#allocation0]]
  $region106: #{tpu_custom_call.1} parent=0
    _
  %s16 = ssub.s32 1, %s14
  %s17 = scalar_select 0, %s16, %s14
  $region1: #{tpu_custom_call.1} parent=0
    #allocation2 [shape = 'u8[4096]{0}', space=vmem, size = 0x1000, scoped, tag = 'input window, operand 0, single buffered']
    #allocation3 [shape = 's32[1]{0}', space=sflag, size = 0x4, scoped, tag = 'scoped memory for tpu_custom_call.1']
    #allocation4 [shape = 's32[1]{0}', space=sflag, size = 0x4, scoped, tag = 'scoped memory for tpu_custom_call.1']
    #allocation5 [shape = 'u8[524288]{0}', space=vmem, size = 0x80000, scoped, tag = 'input window, operand 1, single buffered']
    #allocation6 [shape = 's32[1]{0}', space=sflag, size = 0x4, scoped, tag = 'scoped memory for tpu_custom_call.1']
    #allocation7 [shape = 'u8[2048]{0}', space=vmem, size = 0x800, scoped, tag = 'input window, operand 2, single buffered']
    #allocation8 [shape = 'u8[524288]{0}', space=vmem, size = 0x80000, scoped, tag = 'input window, operand 3, single buffered']
    #allocation9 [shape = 's32[1]{0}', space=sflag, size = 0x4, scoped, tag = 'scoped memory for tpu_custom_call.1']
    #allocation10 [shape = 'u8[2048]{0}', space=vmem, size = 0x800, scoped, tag = 'input window, operand 4, single buffered']
    #allocation11 [shape = 'u8[2048]{0}', space=vmem, size = 0x800, scoped, tag = 'input window, operand 6, single buffered']
    #allocation12 [shape = 's32[1]{0}', space=sflag, size = 0x4, scoped, tag = 'scoped memory for tpu_custom_call.1']
    #allocation13 [shape = 'u8[524288]{0}', space=vmem, size = 0x80000, scoped, tag = 'input window, operand 7, single buffered']
    #allocation14 [shape = 'u8[2048]{0}', space=vmem, size = 0x800, scoped, tag = 'input window, operand 8, single buffered']
    #allocation15 [shape = 's32[1]{0}', space=sflag, size = 0x4, scoped, tag = 'scoped memory for tpu_custom_call.1']
    #allocation16 [shape = 'u8[524288]{0}', space=vmem, size = 0x80000, scoped, tag = 'input window, operand 9, single buffered']
    #allocation17 [shape = 'u8[2048]{0}', space=vmem, size = 0x800, scoped, tag = 'input window, operand 11, single buffered']
    #allocation18 [shape = 's32[1]{0}', space=sflag, size = 0x4, scoped, tag = 'scoped memory for tpu_custom_call.1']
    #allocation19 [shape = 'u8[2048]{0}', space=vmem, size = 0x800, scoped, tag = 'input window, operand 12, single buffered']
    #allocation20 [shape = 'u8[4096]{0}', space=vmem, size = 0x1000, scoped, tag = 'output window, operand 0, single buffered']
    %18 = vsyncpa [#allocation3], 0
    %19 = vsyncpa [#allocation6], 0
    %20 = vsyncpa [#allocation9], 0
    %21 = vsyncpa [#allocation12], 0
    %22 = vsyncpa [#allocation15], 0
    %23 = vsyncpa [#allocation18], 0
    %24 = vsyncpa [#allocation4], 0
    // Predicated region
    $region2: #{tpu_custom_call.1} parent=1 // pred_check
      _
    $region3: #{tpu_custom_call.1} parent=1 // pred_check_branch
      %26 = sbr.rel (0) target = $region5
    $region4: #{tpu_custom_call.1} parent=1 // pred_region
      %28 = vsyncadd [#allocation3], 0
      %s30 = sshll.u32 %s0, 4
      %s31 = int_to_ptr.hbm [resolvable:$true] %s30
      %s32 = sshll.u32 [#allocation2], 4
      %s33 = int_to_ptr.vmem [resolvable:$true] %s32
      %35 = dma.hbm_to_vmem [thread:$0]  %s31, 128, %s33, [#allocation3]
    $region5: #{tpu_custom_call.1} parent=1 // pred_fallthru
      _
    // Predicated region
    $region6: #{tpu_custom_call.1} parent=1 // pred_check
      _
    $region7: #{tpu_custom_call.1} parent=1 // pred_check_branch
      %37 = sbr.rel (0) target = $region9
    $region8: #{tpu_custom_call.1} parent=1 // pred_region
      %39 = vsyncadd [#allocation6], 0
      %s40 = sshll.u32 %s1, 4
      %s41 = int_to_ptr.hbm [resolvable:$true] %s40
      %s42 = sshll.u32 [#allocation5], 4
      %s43 = int_to_ptr.vmem [resolvable:$true] %s42
      %48 = dma.hbm_to_vmem [thread:$0]  %s41, 16384, %s43, [#allocation6], 256, 256, 16
    $region9: #{tpu_custom_call.1} parent=1 // pred_fallthru
      _
    // Predicated region
    $region10: #{tpu_custom_call.1} parent=1 // pred_check
      _
    $region11: #{tpu_custom_call.1} parent=1 // pred_check_branch
      %50 = sbr.rel (0) target = $region13
    $region12: #{tpu_custom_call.1} parent=1 // pred_region
      %52 = vsyncadd [#allocation6], 0
      %s54 = sshll.u32 %s2, 4
      %s55 = int_to_ptr.hbm [resolvable:$true] %s54
      %s56 = sshll.u32 [#allocation7], 4
      %s57 = int_to_ptr.vmem [resolvable:$true] %s56
      %59 = dma.hbm_to_vmem [thread:$0]  %s55, 64, %s57, [#allocation6]
    $region13: #{tpu_custom_call.1} parent=1 // pred_fallthru
      _
    // Predicated region
    $region14: #{tpu_custom_call.1} parent=1 // pred_check
      _
    $region15: #{tpu_custom_call.1} parent=1 // pred_check_branch
      %61 = sbr.rel (0) target = $region17
    $region16: #{tpu_custom_call.1} parent=1 // pred_region
      %63 = vsyncadd [#allocation9], 0
      %s64 = sshll.u32 %s3, 4
      %s65 = int_to_ptr.hbm [resolvable:$true] %s64
      %s66 = sshll.u32 [#allocation8], 4
      %s67 = int_to_ptr.vmem [resolvable:$true] %s66
      %72 = dma.hbm_to_vmem [thread:$0]  %s65, 16384, %s67, [#allocation9], 256, 256, 16
    $region17: #{tpu_custom_call.1} parent=1 // pred_fallthru
      _
    // Predicated region
    $region18: #{tpu_custom_call.1} parent=1 // pred_check
      _
    $region19: #{tpu_custom_call.1} parent=1 // pred_check_branch
      %74 = sbr.rel (0) target = $region21
    $region20: #{tpu_custom_call.1} parent=1 // pred_region
      %76 = vsyncadd [#allocation9], 0
      %s78 = sshll.u32 %s4, 4
      %s79 = int_to_ptr.hbm [resolvable:$true] %s78
      %s80 = sshll.u32 [#allocation10], 4
      %s81 = int_to_ptr.vmem [resolvable:$true] %s80
      %83 = dma.hbm_to_vmem [thread:$0]  %s79, 64, %s81, [#allocation9]
    $region21: #{tpu_custom_call.1} parent=1 // pred_fallthru
      _
    // Predicated region
    $region22: #{tpu_custom_call.1} parent=1 // pred_check
      _
    $region23: #{tpu_custom_call.1} parent=1 // pred_check_branch
      %85 = sbr.rel (0) target = $region25
    $region24: #{tpu_custom_call.1} parent=1 // pred_region
      _
    $region25: #{tpu_custom_call.1} parent=1 // pred_fallthru
      _
    // Predicated region
    $region26: #{tpu_custom_call.1} parent=1 // pred_check
      _
    $region27: #{tpu_custom_call.1} parent=1 // pred_check_branch
      %87 = sbr.rel (0) target = $region29
    $region28: #{tpu_custom_call.1} parent=1 // pred_region
      %89 = vsyncadd [#allocation12], 0
      %s91 = sshll.u32 %s6, 4
      %s92 = int_to_ptr.hbm [resolvable:$true] %s91
      %s93 = sshll.u32 [#allocation11], 4
      %s94 = int_to_ptr.vmem [resolvable:$true] %s93
      %96 = dma.hbm_to_vmem [thread:$0]  %s92, 64, %s94, [#allocation12]
    $region29: #{tpu_custom_call.1} parent=1 // pred_fallthru
      _
    // Predicated region
    $region30: #{tpu_custom_call.1} parent=1 // pred_check
      _
    $region31: #{tpu_custom_call.1} parent=1 // pred_check_branch
      %98 = sbr.rel (0) target = $region33
    $region32: #{tpu_custom_call.1} parent=1 // pred_region
      %100 = vsyncadd [#allocation12], 0
      %s101 = sshll.u32 %s7, 4
      %s102 = int_to_ptr.hbm [resolvable:$true] %s101
      %s103 = sshll.u32 [#allocation13], 4
      %s104 = int_to_ptr.vmem [resolvable:$true] %s103
      %109 = dma.hbm_to_vmem [thread:$0]  %s102, 16384, %s104, [#allocation12], 256, 256, 16
    $region33: #{tpu_custom_call.1} parent=1 // pred_fallthru
      _
    // Predicated region
    $region34: #{tpu_custom_call.1} parent=1 // pred_check
      _
    $region35: #{tpu_custom_call.1} parent=1 // pred_check_branch
      %111 = sbr.rel (0) target = $region37
    $region36: #{tpu_custom_call.1} parent=1 // pred_region
      %113 = vsyncadd [#allocation15], 0
      %s115 = sshll.u32 %s8, 4
      %s116 = int_to_ptr.hbm [resolvable:$true] %s115
      %s117 = sshll.u32 [#allocation14], 4
      %s118 = int_to_ptr.vmem [resolvable:$true] %s117
      %120 = dma.hbm_to_vmem [thread:$0]  %s116, 64, %s118, [#allocation15]
    $region37: #{tpu_custom_call.1} parent=1 // pred_fallthru
      _
    // Predicated region
    $region38: #{tpu_custom_call.1} parent=1 // pred_check
      _
    $region39: #{tpu_custom_call.1} parent=1 // pred_check_branch
      %122 = sbr.rel (0) target = $region41
    $region40: #{tpu_custom_call.1} parent=1 // pred_region
      %124 = vsyncadd [#allocation15], 0
      %s125 = sshll.u32 %s9, 4
      %s126 = int_to_ptr.hbm [resolvable:$true] %s125
      %s127 = sshll.u32 [#allocation16], 4
      %s128 = int_to_ptr.vmem [resolvable:$true] %s127
      %133 = dma.hbm_to_vmem [thread:$0]  %s126, 16384, %s128, [#allocation15], 256, 256, 16
    $region41: #{tpu_custom_call.1} parent=1 // pred_fallthru
      _
    // Predicated region
    $region42: #{tpu_custom_call.1} parent=1 // pred_check
      _
    $region43: #{tpu_custom_call.1} parent=1 // pred_check_branch
      %135 = sbr.rel (0) target = $region45
    $region44: #{tpu_custom_call.1} parent=1 // pred_region
      _
    $region45: #{tpu_custom_call.1} parent=1 // pred_fallthru
      _
    // Predicated region
    $region46: #{tpu_custom_call.1} parent=1 // pred_check
      _
    $region47: #{tpu_custom_call.1} parent=1 // pred_check_branch
      %137 = sbr.rel (0) target = $region49
    $region48: #{tpu_custom_call.1} parent=1 // pred_region
      %139 = vsyncadd [#allocation18], 0
      %s141 = sshll.u32 %s11, 4
      %s142 = int_to_ptr.hbm [resolvable:$true] %s141
      %s143 = sshll.u32 [#allocation17], 4
      %s144 = int_to_ptr.vmem [resolvable:$true] %s143
      %146 = dma.hbm_to_vmem [thread:$0]  %s142, 64, %s144, [#allocation18]
    $region49: #{tpu_custom_call.1} parent=1 // pred_fallthru
      _
    // Predicated region
    $region50: #{tpu_custom_call.1} parent=1 // pred_check
      _
    $region51: #{tpu_custom_call.1} parent=1 // pred_check_branch
      %148 = sbr.rel (0) target = $region53
    $region52: #{tpu_custom_call.1} parent=1 // pred_region
      %150 = vsyncadd [#allocation18], 0
      %s152 = sshll.u32 %s12, 4
      %s153 = int_to_ptr.hbm [resolvable:$true] %s152
      %s154 = sshll.u32 [#allocation19], 4
      %s155 = int_to_ptr.vmem [resolvable:$true] %s154
      %157 = dma.hbm_to_vmem [thread:$0]  %s153, 64, %s155, [#allocation18]
    $region53: #{tpu_custom_call.1} parent=1 // pred_fallthru
      _
    // Predicated region
    $region54: #{tpu_custom_call.1} parent=1 // pred_check
      _
    $region55: #{tpu_custom_call.1} parent=1 // pred_check_branch
      %159 = sbr.rel (0) target = $region57
    $region56: #{tpu_custom_call.1} parent=1 // pred_region
      %161 = dma.done [#allocation3], 128
    $region57: #{tpu_custom_call.1} parent=1 // pred_fallthru
      _
    // Predicated region
    $region58: #{tpu_custom_call.1} parent=1 // pred_check
      _
    $region59: #{tpu_custom_call.1} parent=1 // pred_check_branch
      %163 = sbr.rel (0) target = $region61
    $region60: #{tpu_custom_call.1} parent=1 // pred_region
      %165 = dma.done [#allocation6], 16384
    $region61: #{tpu_custom_call.1} parent=1 // pred_fallthru
      _
    // Predicated region
    $region62: #{tpu_custom_call.1} parent=1 // pred_check
      _
    $region63: #{tpu_custom_call.1} parent=1 // pred_check_branch
      %167 = sbr.rel (0) target = $region65
    $region64: #{tpu_custom_call.1} parent=1 // pred_region
      %169 = dma.done [#allocation6], 64
    $region65: #{tpu_custom_call.1} parent=1 // pred_fallthru
      _
    // Predicated region
    $region66: #{tpu_custom_call.1} parent=1 // pred_check
      _
    $region67: #{tpu_custom_call.1} parent=1 // pred_check_branch
      %171 = sbr.rel (0) target = $region69
    $region68: #{tpu_custom_call.1} parent=1 // pred_region
      %173 = dma.done [#allocation9], 16384
    $region69: #{tpu_custom_call.1} parent=1 // pred_fallthru
      _
    // Predicated region
    $region70: #{tpu_custom_call.1} parent=1 // pred_check
      _
    $region71: #{tpu_custom_call.1} parent=1 // pred_check_branch
      %175 = sbr.rel (0) target = $region73
    $region72: #{tpu_custom_call.1} parent=1 // pred_region
      %177 = dma.done [#allocation9], 64
    $region73: #{tpu_custom_call.1} parent=1 // pred_fallthru
      _
    // Predicated region
    $region74: #{tpu_custom_call.1} parent=1 // pred_check
      _
    $region75: #{tpu_custom_call.1} parent=1 // pred_check_branch
      %179 = sbr.rel (0) target = $region77
    $region76: #{tpu_custom_call.1} parent=1 // pred_region
      %181 = dma.done [#allocation12], 64
    $region77: #{tpu_custom_call.1} parent=1 // pred_fallthru
      _
    // Predicated region
    $region78: #{tpu_custom_call.1} parent=1 // pred_check
      _
    $region79: #{tpu_custom_call.1} parent=1 // pred_check_branch
      %183 = sbr.rel (0) target = $region81
    $region80: #{tpu_custom_call.1} parent=1 // pred_region
      %185 = dma.done [#allocation12], 16384
    $region81: #{tpu_custom_call.1} parent=1 // pred_fallthru
      _
    // Predicated region
    $region82: #{tpu_custom_call.1} parent=1 // pred_check
      _
    $region83: #{tpu_custom_call.1} parent=1 // pred_check_branch
      %187 = sbr.rel (0) target = $region85
    $region84: #{tpu_custom_call.1} parent=1 // pred_region
      %189 = dma.done [#allocation15], 64
    $region85: #{tpu_custom_call.1} parent=1 // pred_fallthru
      _
    // Predicated region
    $region86: #{tpu_custom_call.1} parent=1 // pred_check
      _
    $region87: #{tpu_custom_call.1} parent=1 // pred_check_branch
      %191 = sbr.rel (0) target = $region89
    $region88: #{tpu_custom_call.1} parent=1 // pred_region
      %193 = dma.done [#allocation15], 16384
    $region89: #{tpu_custom_call.1} parent=1 // pred_fallthru
      _
    // Predicated region
    $region90: #{tpu_custom_call.1} parent=1 // pred_check
      _
    $region91: #{tpu_custom_call.1} parent=1 // pred_check_branch
      %195 = sbr.rel (0) target = $region93
    $region92: #{tpu_custom_call.1} parent=1 // pred_region
      %197 = dma.done [#allocation18], 64
    $region93: #{tpu_custom_call.1} parent=1 // pred_fallthru
      _
    // Predicated region
    $region94: #{tpu_custom_call.1} parent=1 // pred_check
      _
    $region95: #{tpu_custom_call.1} parent=1 // pred_check_branch
      %199 = sbr.rel (0) target = $region97
    $region96: #{tpu_custom_call.1} parent=1 // pred_region
      %201 = dma.done [#allocation18], 64
    $region97: #{tpu_custom_call.1} parent=1 // pred_fallthru
      _
    %v202 = vld [vmem:[#allocation2] sm:$0xff]
    %204 = vst [vmem:[#allocation1] ss:$4 sm:$0xff] %v202
    %v205 = vld.sshfl [vmem:[#allocation1] sm:$0xff pattern:$0x73625140]
    %v206 = vld.sshfl [vmem:[#allocation1 + $0x8] sm:$0xff pattern:$0x73625140]
    %v207 = vld.sshfl [vmem:[#allocation1 + $0x10] sm:$0xff pattern:$0x73625140]
    %v208 = vld.sshfl [vmem:[#allocation1 + $0x18] sm:$0xff pattern:$0x73625140]
    %v213 = vpack.c.bf16 %v205, %v205
    %v214 = vpack.c.bf16 %v206, %v206
    %v215 = vpack.c.bf16 %v207, %v207
    %v216 = vpack.c.bf16 %v208, %v208
    %v217 = vld [vmem:[#allocation5] sm:$0xff]
    %v218 = vld [vmem:[#allocation5 + $0x8] sm:$0xff]
    %v219 = vld [vmem:[#allocation5 + $0x10] sm:$0xff]
    %v220 = vld [vmem:[#allocation5 + $0x18] sm:$0xff]
    %v221 = vld [vmem:[#allocation5 + $0x20] sm:$0xff]
    %v222 = vld [vmem:[#allocation5 + $0x28] sm:$0xff]
    %v223 = vld [vmem:[#allocation5 + $0x30] sm:$0xff]
    %v224 = vld [vmem:[#allocation5 + $0x38] sm:$0xff]
    %v225 = vld [vmem:[#allocation5 + $0x40] sm:$0xff]
    %v226 = vld [vmem:[#allocation5 + $0x48] sm:$0xff]
    %v227 = vld [vmem:[#allocation5 + $0x50] sm:$0xff]
    %v228 = vld [vmem:[#allocation5 + $0x58] sm:$0xff]
    %v229 = vld [vmem:[#allocation5 + $0x60] sm:$0xff]
    %v230 = vld [vmem:[#allocation5 + $0x68] sm:$0xff]
    %v231 = vld [vmem:[#allocation5 + $0x70] sm:$0xff]
    %v232 = vld [vmem:[#allocation5 + $0x78] sm:$0xff]
    %v233 = vld [vmem:[#allocation5 + $0x80] sm:$0xff]
    %v234 = vld [vmem:[#allocation5 + $0x88] sm:$0xff]
    %v235 = vld [vmem:[#allocation5 + $0x90] sm:$0xff]
    %v236 = vld [vmem:[#allocation5 + $0x98] sm:$0xff]
    %v237 = vld [vmem:[#allocation5 + $0xa0] sm:$0xff]
    %v238 = vld [vmem:[#allocation5 + $0xa8] sm:$0xff]
    %v239 = vld [vmem:[#allocation5 + $0xb0] sm:$0xff]
    %v240 = vld [vmem:[#allocation5 + $0xb8] sm:$0xff]
    %v241 = vld [vmem:[#allocation5 + $0xc0] sm:$0xff]
    %v242 = vld [vmem:[#allocation5 + $0xc8] sm:$0xff]
    %v243 = vld [vmem:[#allocation5 + $0xd0] sm:$0xff]
    %v244 = vld [vmem:[#allocation5 + $0xd8] sm:$0xff]
    %v245 = vld [vmem:[#allocation5 + $0xe0] sm:$0xff]
    %v246 = vld [vmem:[#allocation5 + $0xe8] sm:$0xff]
    %v247 = vld [vmem:[#allocation5 + $0xf0] sm:$0xff]
    %v248 = vld [vmem:[#allocation5 + $0xf8] sm:$0xff]
    %v249 = vld [vmem:[#allocation5 + $0x100] sm:$0xff]
    %v250 = vld [vmem:[#allocation5 + $0x108] sm:$0xff]
    %v251 = vld [vmem:[#allocation5 + $0x110] sm:$0xff]
    %v252 = vld [vmem:[#allocation5 + $0x118] sm:$0xff]
    %v253 = vld [vmem:[#allocation5 + $0x120] sm:$0xff]
    %v254 = vld [vmem:[#allocation5 + $0x128] sm:$0xff]
    %v255 = vld [vmem:[#allocation5 + $0x130] sm:$0xff]
    %v256 = vld [vmem:[#allocation5 + $0x138] sm:$0xff]
    %v257 = vld [vmem:[#allocation5 + $0x140] sm:$0xff]
    %v258 = vld [vmem:[#allocation5 + $0x148] sm:$0xff]
    %v259 = vld [vmem:[#allocation5 + $0x150] sm:$0xff]
    %v260 = vld [vmem:[#allocation5 + $0x158] sm:$0xff]
    %v261 = vld [vmem:[#allocation5 + $0x160] sm:$0xff]
    %v262 = vld [vmem:[#allocation5 + $0x168] sm:$0xff]
    %v263 = vld [vmem:[#allocation5 + $0x170] sm:$0xff]
    %v264 = vld [vmem:[#allocation5 + $0x178] sm:$0xff]
    %v265 = vld [vmem:[#allocation5 + $0x180] sm:$0xff]
    %v266 = vld [vmem:[#allocation5 + $0x188] sm:$0xff]
    %v267 = vld [vmem:[#allocation5 + $0x190] sm:$0xff]
    %v268 = vld [vmem:[#allocation5 + $0x198] sm:$0xff]
    %v269 = vld [vmem:[#allocation5 + $0x1a0] sm:$0xff]
    %v270 = vld [vmem:[#allocation5 + $0x1a8] sm:$0xff]
    %v271 = vld [vmem:[#allocation5 + $0x1b0] sm:$0xff]
    %v272 = vld [vmem:[#allocation5 + $0x1b8] sm:$0xff]
    %v273 = vld [vmem:[#allocation5 + $0x1c0] sm:$0xff]
    %v274 = vld [vmem:[#allocation5 + $0x1c8] sm:$0xff]
    %v275 = vld [vmem:[#allocation5 + $0x1d0] sm:$0xff]
    %v276 = vld [vmem:[#allocation5 + $0x1d8] sm:$0xff]
    %v277 = vld [vmem:[#allocation5 + $0x1e0] sm:$0xff]
    %v278 = vld [vmem:[#allocation5 + $0x1e8] sm:$0xff]
    %v279 = vld [vmem:[#allocation5 + $0x1f0] sm:$0xff]
    %v280 = vld [vmem:[#allocation5 + $0x1f8] sm:$0xff]
    %v281 = vld [vmem:[#allocation5 + $0x200] sm:$0xff]
    %v282 = vld [vmem:[#allocation5 + $0x208] sm:$0xff]
    %v283 = vld [vmem:[#allocation5 + $0x210] sm:$0xff]
    %v284 = vld [vmem:[#allocation5 + $0x218] sm:$0xff]
    %v285 = vld [vmem:[#allocation5 + $0x220] sm:$0xff]
    %v286 = vld [vmem:[#allocation5 + $0x228] sm:$0xff]
    %v287 = vld [vmem:[#allocation5 + $0x230] sm:$0xff]
    %v288 = vld [vmem:[#allocation5 + $0x238] sm:$0xff]
    %v289 = vld [vmem:[#allocation5 + $0x240] sm:$0xff]
    %v290 = vld [vmem:[#allocation5 + $0x248] sm:$0xff]
    %v291 = vld [vmem:[#allocation5 + $0x250] sm:$0xff]
    %v292 = vld [vmem:[#allocation5 + $0x258] sm:$0xff]
    %v293 = vld [vmem:[#allocation5 + $0x260] sm:$0xff]
    %v294 = vld [vmem:[#allocation5 + $0x268] sm:$0xff]
    %v295 = vld [vmem:[#allocation5 + $0x270] sm:$0xff]
    %v296 = vld [vmem:[#allocation5 + $0x278] sm:$0xff]
    %v297 = vld [vmem:[#allocation5 + $0x280] sm:$0xff]
    %v298 = vld [vmem:[#allocation5 + $0x288] sm:$0xff]
    %v299 = vld [vmem:[#allocation5 + $0x290] sm:$0xff]
    %v300 = vld [vmem:[#allocation5 + $0x298] sm:$0xff]
    %v301 = vld [vmem:[#allocation5 + $0x2a0] sm:$0xff]
    %v302 = vld [vmem:[#allocation5 + $0x2a8] sm:$0xff]
    %v303 = vld [vmem:[#allocation5 + $0x2b0] sm:$0xff]
    %v304 = vld [vmem:[#allocation5 + $0x2b8] sm:$0xff]
    %v305 = vld [vmem:[#allocation5 + $0x2c0] sm:$0xff]
    %v306 = vld [vmem:[#allocation5 + $0x2c8] sm:$0xff]
    %v307 = vld [vmem:[#allocation5 + $0x2d0] sm:$0xff]
    %v308 = vld [vmem:[#allocation5 + $0x2d8] sm:$0xff]
    %v309 = vld [vmem:[#allocation5 + $0x2e0] sm:$0xff]
    %v310 = vld [vmem:[#allocation5 + $0x2e8] sm:$0xff]
    %v311 = vld [vmem:[#allocation5 + $0x2f0] sm:$0xff]
    %v312 = vld [vmem:[#allocation5 + $0x2f8] sm:$0xff]
    %v313 = vld [vmem:[#allocation5 + $0x300] sm:$0xff]
    %v314 = vld [vmem:[#allocation5 + $0x308] sm:$0xff]
    %v315 = vld [vmem:[#allocation5 + $0x310] sm:$0xff]
    %v316 = vld [vmem:[#allocation5 + $0x318] sm:$0xff]
    %v317 = vld [vmem:[#allocation5 + $0x320] sm:$0xff]
    %v318 = vld [vmem:[#allocation5 + $0x328] sm:$0xff]
    %v319 = vld [vmem:[#allocation5 + $0x330] sm:$0xff]
    %v320 = vld [vmem:[#allocation5 + $0x338] sm:$0xff]
    %v321 = vld [vmem:[#allocation5 + $0x340] sm:$0xff]
    %v322 = vld [vmem:[#allocation5 + $0x348] sm:$0xff]
    %v323 = vld [vmem:[#allocation5 + $0x350] sm:$0xff]
    %v324 = vld [vmem:[#allocation5 + $0x358] sm:$0xff]
    %v325 = vld [vmem:[#allocation5 + $0x360] sm:$0xff]
    %v326 = vld [vmem:[#allocation5 + $0x368] sm:$0xff]
    %v327 = vld [vmem:[#allocation5 + $0x370] sm:$0xff]
    %v328 = vld [vmem:[#allocation5 + $0x378] sm:$0xff]
    %v329 = vld [vmem:[#allocation5 + $0x380] sm:$0xff]
    %v330 = vld [vmem:[#allocation5 + $0x388] sm:$0xff]
    %v331 = vld [vmem:[#allocation5 + $0x390] sm:$0xff]
    %v332 = vld [vmem:[#allocation5 + $0x398] sm:$0xff]
    %v333 = vld [vmem:[#allocation5 + $0x3a0] sm:$0xff]
    %v334 = vld [vmem:[#allocation5 + $0x3a8] sm:$0xff]
    %v335 = vld [vmem:[#allocation5 + $0x3b0] sm:$0xff]
    %v336 = vld [vmem:[#allocation5 + $0x3b8] sm:$0xff]
    %v337 = vld [vmem:[#allocation5 + $0x3c0] sm:$0xff]
    %v338 = vld [vmem:[#allocation5 + $0x3c8] sm:$0xff]
    %v339 = vld [vmem:[#allocation5 + $0x3d0] sm:$0xff]
    %v340 = vld [vmem:[#allocation5 + $0x3d8] sm:$0xff]
    %v341 = vld [vmem:[#allocation5 + $0x3e0] sm:$0xff]
    %v342 = vld [vmem:[#allocation5 + $0x3e8] sm:$0xff]
    %v343 = vld [vmem:[#allocation5 + $0x3f0] sm:$0xff]
    %v344 = vld [vmem:[#allocation5 + $0x3f8] sm:$0xff]
    %v345 = vld [vmem:[#allocation7] sm:$0xf]
    %v347 = vperm.slane %v345, 0
    %v348 = vperm.slane %v345, 1
    %v349 = vperm.slane %v345, 2
    %v350 = vperm.slane %v345, 3
    %v483 = vunpack.c.l.b16 %v217
    %v484 = vunpack.c.h.b16 %v217
    %v485 = vunpack.c.l.b16 %v218
    %v486 = vunpack.c.h.b16 %v218
    %v487 = vunpack.c.l.b16 %v219
    %v488 = vunpack.c.h.b16 %v219
    %v489 = vunpack.c.l.b16 %v220
    %v490 = vunpack.c.h.b16 %v220
    %v491 = vunpack.c.l.b16 %v221
    %v492 = vunpack.c.h.b16 %v221
    %v493 = vunpack.c.l.b16 %v222
    %v494 = vunpack.c.h.b16 %v222
    %v495 = vunpack.c.l.b16 %v223
    %v496 = vunpack.c.h.b16 %v223
    %v497 = vunpack.c.l.b16 %v224
    %v498 = vunpack.c.h.b16 %v224
    %v499 = vunpack.c.l.b16 %v225
    %v500 = vunpack.c.h.b16 %v225
    %v501 = vunpack.c.l.b16 %v226
    %v502 = vunpack.c.h.b16 %v226
    %v503 = vunpack.c.l.b16 %v227
    %v504 = vunpack.c.h.b16 %v227
    %v505 = vunpack.c.l.b16 %v228
    %v506 = vunpack.c.h.b16 %v228
    %v507 = vunpack.c.l.b16 %v229
    %v508 = vunpack.c.h.b16 %v229
    %v509 = vunpack.c.l.b16 %v230
    %v510 = vunpack.c.h.b16 %v230
    %v511 = vunpack.c.l.b16 %v231
    %v512 = vunpack.c.h.b16 %v231
    %v513 = vunpack.c.l.b16 %v232
    %v514 = vunpack.c.h.b16 %v232
    %v515 = vunpack.c.l.b16 %v233
    %v516 = vunpack.c.h.b16 %v233
    %v517 = vunpack.c.l.b16 %v234
    %v518 = vunpack.c.h.b16 %v234
    %v519 = vunpack.c.l.b16 %v235
    %v520 = vunpack.c.h.b16 %v235
    %v521 = vunpack.c.l.b16 %v236
    %v522 = vunpack.c.h.b16 %v236
    %v523 = vunpack.c.l.b16 %v237
    %v524 = vunpack.c.h.b16 %v237
    %v525 = vunpack.c.l.b16 %v238
    %v526 = vunpack.c.h.b16 %v238
    %v527 = vunpack.c.l.b16 %v239
    %v528 = vunpack.c.h.b16 %v239
    %v529 = vunpack.c.l.b16 %v240
    %v530 = vunpack.c.h.b16 %v240
    %v531 = vunpack.c.l.b16 %v241
    %v532 = vunpack.c.h.b16 %v241
    %v533 = vunpack.c.l.b16 %v242
    %v534 = vunpack.c.h.b16 %v242
    %v535 = vunpack.c.l.b16 %v243
    %v536 = vunpack.c.h.b16 %v243
    %v537 = vunpack.c.l.b16 %v244
    %v538 = vunpack.c.h.b16 %v244
    %v539 = vunpack.c.l.b16 %v245
    %v540 = vunpack.c.h.b16 %v245
    %v541 = vunpack.c.l.b16 %v246
    %v542 = vunpack.c.h.b16 %v246
    %v543 = vunpack.c.l.b16 %v247
    %v544 = vunpack.c.h.b16 %v247
    %v545 = vunpack.c.l.b16 %v248
    %v546 = vunpack.c.h.b16 %v248
    %v547 = vunpack.c.l.b16 %v249
    %v548 = vunpack.c.h.b16 %v249
    %v549 = vunpack.c.l.b16 %v250
    %v550 = vunpack.c.h.b16 %v250
    %v551 = vunpack.c.l.b16 %v251
    %v552 = vunpack.c.h.b16 %v251
    %v553 = vunpack.c.l.b16 %v252
    %v554 = vunpack.c.h.b16 %v252
    %v555 = vunpack.c.l.b16 %v253
    %v556 = vunpack.c.h.b16 %v253
    %v557 = vunpack.c.l.b16 %v254
    %v558 = vunpack.c.h.b16 %v254
    %v559 = vunpack.c.l.b16 %v255
    %v560 = vunpack.c.h.b16 %v255
    %v561 = vunpack.c.l.b16 %v256
    %v562 = vunpack.c.h.b16 %v256
    %v563 = vunpack.c.l.b16 %v257
    %v564 = vunpack.c.h.b16 %v257
    %v565 = vunpack.c.l.b16 %v258
    %v566 = vunpack.c.h.b16 %v258
    %v567 = vunpack.c.l.b16 %v259
    %v568 = vunpack.c.h.b16 %v259
    %v569 = vunpack.c.l.b16 %v260
    %v570 = vunpack.c.h.b16 %v260
    %v571 = vunpack.c.l.b16 %v261
    %v572 = vunpack.c.h.b16 %v261
    %v573 = vunpack.c.l.b16 %v262
    %v574 = vunpack.c.h.b16 %v262
    %v575 = vunpack.c.l.b16 %v263
    %v576 = vunpack.c.h.b16 %v263
    %v577 = vunpack.c.l.b16 %v264
    %v578 = vunpack.c.h.b16 %v264
    %v579 = vunpack.c.l.b16 %v265
    %v580 = vunpack.c.h.b16 %v265
    %v581 = vunpack.c.l.b16 %v266
    %v582 = vunpack.c.h.b16 %v266
    %v583 = vunpack.c.l.b16 %v267
    %v584 = vunpack.c.h.b16 %v267
    %v585 = vunpack.c.l.b16 %v268
    %v586 = vunpack.c.h.b16 %v268
    %v587 = vunpack.c.l.b16 %v269
    %v588 = vunpack.c.h.b16 %v269
    %v589 = vunpack.c.l.b16 %v270
    %v590 = vunpack.c.h.b16 %v270
    %v591 = vunpack.c.l.b16 %v271
    %v592 = vunpack.c.h.b16 %v271
    %v593 = vunpack.c.l.b16 %v272
    %v594 = vunpack.c.h.b16 %v272
    %v595 = vunpack.c.l.b16 %v273
    %v596 = vunpack.c.h.b16 %v273
    %v597 = vunpack.c.l.b16 %v274
    %v598 = vunpack.c.h.b16 %v274
    %v599 = vunpack.c.l.b16 %v275
    %v600 = vunpack.c.h.b16 %v275
    %v601 = vunpack.c.l.b16 %v276
    %v602 = vunpack.c.h.b16 %v276
    %v603 = vunpack.c.l.b16 %v277
    %v604 = vunpack.c.h.b16 %v277
    %v605 = vunpack.c.l.b16 %v278
    %v606 = vunpack.c.h.b16 %v278
    %v607 = vunpack.c.l.b16 %v279
    %v608 = vunpack.c.h.b16 %v279
    %v609 = vunpack.c.l.b16 %v280
    %v610 = vunpack.c.h.b16 %v280
    %v611 = vunpack.c.l.b16 %v281
    %v612 = vunpack.c.h.b16 %v281
    %v613 = vunpack.c.l.b16 %v282
    %v614 = vunpack.c.h.b16 %v282
    %v615 = vunpack.c.l.b16 %v283
    %v616 = vunpack.c.h.b16 %v283
    %v617 = vunpack.c.l.b16 %v284
    %v618 = vunpack.c.h.b16 %v284
    %v619 = vunpack.c.l.b16 %v285
    %v620 = vunpack.c.h.b16 %v285
    %v621 = vunpack.c.l.b16 %v286
    %v622 = vunpack.c.h.b16 %v286
    %v623 = vunpack.c.l.b16 %v287
    %v624 = vunpack.c.h.b16 %v287
    %v625 = vunpack.c.l.b16 %v288
    %v626 = vunpack.c.h.b16 %v288
    %v627 = vunpack.c.l.b16 %v289
    %v628 = vunpack.c.h.b16 %v289
    %v629 = vunpack.c.l.b16 %v290
    %v630 = vunpack.c.h.b16 %v290
    %v631 = vunpack.c.l.b16 %v291
    %v632 = vunpack.c.h.b16 %v291
    %v633 = vunpack.c.l.b16 %v292
    %v634 = vunpack.c.h.b16 %v292
    %v635 = vunpack.c.l.b16 %v293
    %v636 = vunpack.c.h.b16 %v293
    %v637 = vunpack.c.l.b16 %v294
    %v638 = vunpack.c.h.b16 %v294
    %v639 = vunpack.c.l.b16 %v295
    %v640 = vunpack.c.h.b16 %v295
    %v641 = vunpack.c.l.b16 %v296
    %v642 = vunpack.c.h.b16 %v296
    %v643 = vunpack.c.l.b16 %v297
    %v644 = vunpack.c.h.b16 %v297
    %v645 = vunpack.c.l.b16 %v298
    %v646 = vunpack.c.h.b16 %v298
    %v647 = vunpack.c.l.b16 %v299
    %v648 = vunpack.c.h.b16 %v299
    %v649 = vunpack.c.l.b16 %v300
    %v650 = vunpack.c.h.b16 %v300
    %v651 = vunpack.c.l.b16 %v301
    %v652 = vunpack.c.h.b16 %v301
    %v653 = vunpack.c.l.b16 %v302
    %v654 = vunpack.c.h.b16 %v302
    %v655 = vunpack.c.l.b16 %v303
    %v656 = vunpack.c.h.b16 %v303
    %v657 = vunpack.c.l.b16 %v304
    %v658 = vunpack.c.h.b16 %v304
    %v659 = vunpack.c.l.b16 %v305
    %v660 = vunpack.c.h.b16 %v305
    %v661 = vunpack.c.l.b16 %v306
    %v662 = vunpack.c.h.b16 %v306
    %v663 = vunpack.c.l.b16 %v307
    %v664 = vunpack.c.h.b16 %v307
    %v665 = vunpack.c.l.b16 %v308
    %v666 = vunpack.c.h.b16 %v308
    %v667 = vunpack.c.l.b16 %v309
    %v668 = vunpack.c.h.b16 %v309
    %v669 = vunpack.c.l.b16 %v310
    %v670 = vunpack.c.h.b16 %v310
    %v671 = vunpack.c.l.b16 %v311
    %v672 = vunpack.c.h.b16 %v311
    %v673 = vunpack.c.l.b16 %v312
    %v674 = vunpack.c.h.b16 %v312
    %v675 = vunpack.c.l.b16 %v313
    %v676 = vunpack.c.h.b16 %v313
    %v677 = vunpack.c.l.b16 %v314
    %v678 = vunpack.c.h.b16 %v314
    %v679 = vunpack.c.l.b16 %v315
    %v680 = vunpack.c.h.b16 %v315
    %v681 = vunpack.c.l.b16 %v316
    %v682 = vunpack.c.h.b16 %v316
    %v683 = vunpack.c.l.b16 %v317
    %v684 = vunpack.c.h.b16 %v317
    %v685 = vunpack.c.l.b16 %v318
    %v686 = vunpack.c.h.b16 %v318
    %v687 = vunpack.c.l.b16 %v319
    %v688 = vunpack.c.h.b16 %v319
    %v689 = vunpack.c.l.b16 %v320
    %v690 = vunpack.c.h.b16 %v320
    %v691 = vunpack.c.l.b16 %v321
    %v692 = vunpack.c.h.b16 %v321
    %v693 = vunpack.c.l.b16 %v322
    %v694 = vunpack.c.h.b16 %v322
    %v695 = vunpack.c.l.b16 %v323
    %v696 = vunpack.c.h.b16 %v323
    %v697 = vunpack.c.l.b16 %v324
    %v698 = vunpack.c.h.b16 %v324
    %v699 = vunpack.c.l.b16 %v325
    %v700 = vunpack.c.h.b16 %v325
    %v701 = vunpack.c.l.b16 %v326
    %v702 = vunpack.c.h.b16 %v326
    %v703 = vunpack.c.l.b16 %v327
    %v704 = vunpack.c.h.b16 %v327
    %v705 = vunpack.c.l.b16 %v328
    %v706 = vunpack.c.h.b16 %v328
    %v707 = vunpack.c.l.b16 %v329
    %v708 = vunpack.c.h.b16 %v329
    %v709 = vunpack.c.l.b16 %v330
    %v710 = vunpack.c.h.b16 %v330
    %v711 = vunpack.c.l.b16 %v331
    %v712 = vunpack.c.h.b16 %v331
    %v713 = vunpack.c.l.b16 %v332
    %v714 = vunpack.c.h.b16 %v332
    %v715 = vunpack.c.l.b16 %v333
    %v716 = vunpack.c.h.b16 %v333
    %v717 = vunpack.c.l.b16 %v334
    %v718 = vunpack.c.h.b16 %v334
    %v719 = vunpack.c.l.b16 %v335
    %v720 = vunpack.c.h.b16 %v335
    %v721 = vunpack.c.l.b16 %v336
    %v722 = vunpack.c.h.b16 %v336
    %v723 = vunpack.c.l.b16 %v337
    %v724 = vunpack.c.h.b16 %v337
    %v725 = vunpack.c.l.b16 %v338
    %v726 = vunpack.c.h.b16 %v338
    %v727 = vunpack.c.l.b16 %v339
    %v728 = vunpack.c.h.b16 %v339
    %v729 = vunpack.c.l.b16 %v340
    %v730 = vunpack.c.h.b16 %v340
    %v731 = vunpack.c.l.b16 %v341
    %v732 = vunpack.c.h.b16 %v341
    %v733 = vunpack.c.l.b16 %v342
    %v734 = vunpack.c.h.b16 %v342
    %v735 = vunpack.c.l.b16 %v343
    %v736 = vunpack.c.h.b16 %v343
    %v737 = vunpack.c.l.b16 %v344
    %v738 = vunpack.c.h.b16 %v344
    %v739 = vpack.c.b16 %v487, %v483
    %v740 = vpack.c.b16 %v488, %v484
    %v741 = vpack.c.b16 %v489, %v485
    %v742 = vpack.c.b16 %v490, %v486
    %v743 = vpack.c.b16 %v495, %v491
    %v744 = vpack.c.b16 %v496, %v492
    %v745 = vpack.c.b16 %v497, %v493
    %v746 = vpack.c.b16 %v498, %v494
    %v747 = vpack.c.b16 %v503, %v499
    %v748 = vpack.c.b16 %v504, %v500
    %v749 = vpack.c.b16 %v505, %v501
    %v750 = vpack.c.b16 %v506, %v502
    %v751 = vpack.c.b16 %v511, %v507
    %v752 = vpack.c.b16 %v512, %v508
    %v753 = vpack.c.b16 %v513, %v509
    %v754 = vpack.c.b16 %v514, %v510
    %v755 = vpack.c.b16 %v519, %v515
    %v756 = vpack.c.b16 %v520, %v516
    %v757 = vpack.c.b16 %v521, %v517
    %v758 = vpack.c.b16 %v522, %v518
    %v759 = vpack.c.b16 %v527, %v523
    %v760 = vpack.c.b16 %v528, %v524
    %v761 = vpack.c.b16 %v529, %v525
    %v762 = vpack.c.b16 %v530, %v526
    %v763 = vpack.c.b16 %v535, %v531
    %v764 = vpack.c.b16 %v536, %v532
    %v765 = vpack.c.b16 %v537, %v533
    %v766 = vpack.c.b16 %v538, %v534
    %v767 = vpack.c.b16 %v543, %v539
    %v768 = vpack.c.b16 %v544, %v540
    %v769 = vpack.c.b16 %v545, %v541
    %v770 = vpack.c.b16 %v546, %v542
    %v771 = vpack.c.b16 %v551, %v547
    %v772 = vpack.c.b16 %v552, %v548
    %v773 = vpack.c.b16 %v553, %v549
    %v774 = vpack.c.b16 %v554, %v550
    %v775 = vpack.c.b16 %v559, %v555
    %v776 = vpack.c.b16 %v560, %v556
    %v777 = vpack.c.b16 %v561, %v557
    %v778 = vpack.c.b16 %v562, %v558
    %v779 = vpack.c.b16 %v567, %v563
    %v780 = vpack.c.b16 %v568, %v564
    %v781 = vpack.c.b16 %v569, %v565
    %v782 = vpack.c.b16 %v570, %v566
    %v783 = vpack.c.b16 %v575, %v571
    %v784 = vpack.c.b16 %v576, %v572
    %v785 = vpack.c.b16 %v577, %v573
    %v786 = vpack.c.b16 %v578, %v574
    %v787 = vpack.c.b16 %v583, %v579
    %v788 = vpack.c.b16 %v584, %v580
    %v789 = vpack.c.b16 %v585, %v581
    %v790 = vpack.c.b16 %v586, %v582
    %v791 = vpack.c.b16 %v591, %v587
    %v792 = vpack.c.b16 %v592, %v588
    %v793 = vpack.c.b16 %v593, %v589
    %v794 = vpack.c.b16 %v594, %v590
    %v795 = vpack.c.b16 %v599, %v595
    %v796 = vpack.c.b16 %v600, %v596
    %v797 = vpack.c.b16 %v601, %v597
    %v798 = vpack.c.b16 %v602, %v598
    %v799 = vpack.c.b16 %v607, %v603
    %v800 = vpack.c.b16 %v608, %v604
    %v801 = vpack.c.b16 %v609, %v605
    %v802 = vpack.c.b16 %v610, %v606
    %v803 = vpack.c.b16 %v615, %v611
    %v804 = vpack.c.b16 %v616, %v612
    %v805 = vpack.c.b16 %v617, %v613
    %v806 = vpack.c.b16 %v618, %v614
    %v807 = vpack.c.b16 %v623, %v619
    %v808 = vpack.c.b16 %v624, %v620
    %v809 = vpack.c.b16 %v625, %v621
    %v810 = vpack.c.b16 %v626, %v622
    %v811 = vpack.c.b16 %v631, %v627
    %v812 = vpack.c.b16 %v632, %v628
    %v813 = vpack.c.b16 %v633, %v629
    %v814 = vpack.c.b16 %v634, %v630
    %v815 = vpack.c.b16 %v639, %v635
    %v816 = vpack.c.b16 %v640, %v636
    %v817 = vpack.c.b16 %v641, %v637
    %v818 = vpack.c.b16 %v642, %v638
    %v819 = vpack.c.b16 %v647, %v643
    %v820 = vpack.c.b16 %v648, %v644
    %v821 = vpack.c.b16 %v649, %v645
    %v822 = vpack.c.b16 %v650, %v646
    %v823 = vpack.c.b16 %v655, %v651
    %v824 = vpack.c.b16 %v656, %v652
    %v825 = vpack.c.b16 %v657, %v653
    %v826 = vpack.c.b16 %v658, %v654
    %v827 = vpack.c.b16 %v663, %v659
    %v828 = vpack.c.b16 %v664, %v660
    %v829 = vpack.c.b16 %v665, %v661
    %v830 = vpack.c.b16 %v666, %v662
    %v831 = vpack.c.b16 %v671, %v667
    %v832 = vpack.c.b16 %v672, %v668
    %v833 = vpack.c.b16 %v673, %v669
    %v834 = vpack.c.b16 %v674, %v670
    %v835 = vpack.c.b16 %v679, %v675
    %v836 = vpack.c.b16 %v680, %v676
    %v837 = vpack.c.b16 %v681, %v677
    %v838 = vpack.c.b16 %v682, %v678
    %v839 = vpack.c.b16 %v687, %v683
    %v840 = vpack.c.b16 %v688, %v684
    %v841 = vpack.c.b16 %v689, %v685
    %v842 = vpack.c.b16 %v690, %v686
    %v843 = vpack.c.b16 %v695, %v691
    %v844 = vpack.c.b16 %v696, %v692
    %v845 = vpack.c.b16 %v697, %v693
    %v846 = vpack.c.b16 %v698, %v694
    %v847 = vpack.c.b16 %v703, %v699
    %v848 = vpack.c.b16 %v704, %v700
    %v849 = vpack.c.b16 %v705, %v701
    %v850 = vpack.c.b16 %v706, %v702
    %v851 = vpack.c.b16 %v711, %v707
    %v852 = vpack.c.b16 %v712, %v708
    %v853 = vpack.c.b16 %v713, %v709
    %v854 = vpack.c.b16 %v714, %v710
    %v855 = vpack.c.b16 %v719, %v715
    %v856 = vpack.c.b16 %v720, %v716
    %v857 = vpack.c.b16 %v721, %v717
    %v858 = vpack.c.b16 %v722, %v718
    %v859 = vpack.c.b16 %v727, %v723
    %v860 = vpack.c.b16 %v728, %v724
    %v861 = vpack.c.b16 %v729, %v725
    %v862 = vpack.c.b16 %v730, %v726
    %v863 = vpack.c.b16 %v735, %v731
    %v864 = vpack.c.b16 %v736, %v732
    %v865 = vpack.c.b16 %v737, %v733
    %v866 = vpack.c.b16 %v738, %v734
    %995 = vmatpush.bf16.msra.mxu0 %v767
    %996 = vmatpush.bf16.msra.mxu0 %v763
    %997 = vmatpush.bf16.msra.mxu0 %v759
    %998 = vmatpush.bf16.msra.mxu0 %v755
    %999 = vmatpush.bf16.msra.mxu0 %v751
    %1000 = vmatpush.bf16.msra.mxu0 %v747
    %1001 = vmatpush.bf16.msra.mxu0 %v743
    %1002 = vmatpush.bf16.msra.mxu0 %v739
    %1003 = vmatmul.bf16.gmra.mxu0 %v213
    %v1004 = vpop.f32.mrf.mxu0
    %v1005 = vadd.f32 %v347, %v1004
    %v1006 = vpop.f32.mrf.mxu0
    %1007 = vdwg.mxu0
    %1008 = vmatpush.bf16.msra.mxu0 %v799
    %1009 = vmatpush.bf16.msra.mxu0 %v795
    %1010 = vmatpush.bf16.msra.mxu0 %v791
    %1011 = vmatpush.bf16.msra.mxu0 %v787
    %1012 = vmatpush.bf16.msra.mxu0 %v783
    %1013 = vmatpush.bf16.msra.mxu0 %v779
    %1014 = vmatpush.bf16.msra.mxu0 %v775
    %1015 = vmatpush.bf16.msra.mxu0 %v771
    %1016 = vmatmul.bf16.gmra.mxu0 %v214
    %v1017 = vpop.f32.mrf.mxu0
    %v1018 = vadd.f32 %v1005, %v1017
    %v1019 = vpop.f32.mrf.mxu0
    %1020 = vdwg.mxu0
    %1021 = vmatpush.bf16.msra.mxu0 %v831
    %1022 = vmatpush.bf16.msra.mxu0 %v827
    %1023 = vmatpush.bf16.msra.mxu0 %v823
    %1024 = vmatpush.bf16.msra.mxu0 %v819
    %1025 = vmatpush.bf16.msra.mxu0 %v815
    %1026 = vmatpush.bf16.msra.mxu0 %v811
    %1027 = vmatpush.bf16.msra.mxu0 %v807
    %1028 = vmatpush.bf16.msra.mxu0 %v803
    %1029 = vmatmul.bf16.gmra.mxu0 %v215
    %v1030 = vpop.f32.mrf.mxu0
    %v1031 = vadd.f32 %v1018, %v1030
    %v1032 = vpop.f32.mrf.mxu0
    %1033 = vdwg.mxu0
    %1034 = vmatpush.bf16.msra.mxu0 %v863
    %1035 = vmatpush.bf16.msra.mxu0 %v859
    %1036 = vmatpush.bf16.msra.mxu0 %v855
    %1037 = vmatpush.bf16.msra.mxu0 %v851
    %1038 = vmatpush.bf16.msra.mxu0 %v847
    %1039 = vmatpush.bf16.msra.mxu0 %v843
    %1040 = vmatpush.bf16.msra.mxu0 %v839
    %1041 = vmatpush.bf16.msra.mxu0 %v835
    %1042 = vmatmul.bf16.gmra.mxu0 %v216
    %v1043 = vpop.f32.mrf.mxu0
    %v1044 = vadd.f32 %v1031, %v1043
    %v1045 = vpop.f32.mrf.mxu0
    %1046 = vdwg.mxu0
    %1047 = vmatpush.bf16.msra.mxu0 %v768
    %1048 = vmatpush.bf16.msra.mxu0 %v764
    %1049 = vmatpush.bf16.msra.mxu0 %v760
    %1050 = vmatpush.bf16.msra.mxu0 %v756
    %1051 = vmatpush.bf16.msra.mxu0 %v752
    %1052 = vmatpush.bf16.msra.mxu0 %v748
    %1053 = vmatpush.bf16.msra.mxu0 %v744
    %1054 = vmatpush.bf16.msra.mxu0 %v740
    %1055 = vmatmul.bf16.gmra.mxu0 %v213
    %v1056 = vpop.f32.mrf.mxu0
    %v1057 = vadd.f32 %v348, %v1056
    %v1058 = vpop.f32.mrf.mxu0
    %1059 = vdwg.mxu0
    %1060 = vmatpush.bf16.msra.mxu0 %v800
    %1061 = vmatpush.bf16.msra.mxu0 %v796
    %1062 = vmatpush.bf16.msra.mxu0 %v792
    %1063 = vmatpush.bf16.msra.mxu0 %v788
    %1064 = vmatpush.bf16.msra.mxu0 %v784
    %1065 = vmatpush.bf16.msra.mxu0 %v780
    %1066 = vmatpush.bf16.msra.mxu0 %v776
    %1067 = vmatpush.bf16.msra.mxu0 %v772
    %1068 = vmatmul.bf16.gmra.mxu0 %v214
    %v1069 = vpop.f32.mrf.mxu0
    %v1070 = vadd.f32 %v1057, %v1069
    %v1071 = vpop.f32.mrf.mxu0
    %1072 = vdwg.mxu0
    %1073 = vmatpush.bf16.msra.mxu0 %v832
    %1074 = vmatpush.bf16.msra.mxu0 %v828
    %1075 = vmatpush.bf16.msra.mxu0 %v824
    %1076 = vmatpush.bf16.msra.mxu0 %v820
    %1077 = vmatpush.bf16.msra.mxu0 %v816
    %1078 = vmatpush.bf16.msra.mxu0 %v812
    %1079 = vmatpush.bf16.msra.mxu0 %v808
    %1080 = vmatpush.bf16.msra.mxu0 %v804
    %1081 = vmatmul.bf16.gmra.mxu0 %v215
    %v1082 = vpop.f32.mrf.mxu0
    %v1083 = vadd.f32 %v1070, %v1082
    %v1084 = vpop.f32.mrf.mxu0
    %1085 = vdwg.mxu0
    %1086 = vmatpush.bf16.msra.mxu0 %v864
    %1087 = vmatpush.bf16.msra.mxu0 %v860
    %1088 = vmatpush.bf16.msra.mxu0 %v856
    %1089 = vmatpush.bf16.msra.mxu0 %v852
    %1090 = vmatpush.bf16.msra.mxu0 %v848
    %1091 = vmatpush.bf16.msra.mxu0 %v844
    %1092 = vmatpush.bf16.msra.mxu0 %v840
    %1093 = vmatpush.bf16.msra.mxu0 %v836
    %1094 = vmatmul.bf16.gmra.mxu0 %v216
    %v1095 = vpop.f32.mrf.mxu0
    %v1096 = vadd.f32 %v1083, %v1095
    %v1097 = vpop.f32.mrf.mxu0
    %1098 = vdwg.mxu0
    %1099 = vmatpush.bf16.msra.mxu0 %v769
    %1100 = vmatpush.bf16.msra.mxu0 %v765
    %1101 = vmatpush.bf16.msra.mxu0 %v761
    %1102 = vmatpush.bf16.msra.mxu0 %v757
    %1103 = vmatpush.bf16.msra.mxu0 %v753
    %1104 = vmatpush.bf16.msra.mxu0 %v749
    %1105 = vmatpush.bf16.msra.mxu0 %v745
    %1106 = vmatpush.bf16.msra.mxu0 %v741
    %1107 = vmatmul.bf16.gmra.mxu0 %v213
    %v1108 = vpop.f32.mrf.mxu0
    %v1109 = vadd.f32 %v349, %v1108
    %v1110 = vpop.f32.mrf.mxu0
    %1111 = vdwg.mxu0
    %1112 = vmatpush.bf16.msra.mxu0 %v801
    %1113 = vmatpush.bf16.msra.mxu0 %v797
    %1114 = vmatpush.bf16.msra.mxu0 %v793
    %1115 = vmatpush.bf16.msra.mxu0 %v789
    %1116 = vmatpush.bf16.msra.mxu0 %v785
    %1117 = vmatpush.bf16.msra.mxu0 %v781
    %1118 = vmatpush.bf16.msra.mxu0 %v777
    %1119 = vmatpush.bf16.msra.mxu0 %v773
    %1120 = vmatmul.bf16.gmra.mxu0 %v214
    %v1121 = vpop.f32.mrf.mxu0
    %v1122 = vadd.f32 %v1109, %v1121
    %v1123 = vpop.f32.mrf.mxu0
    %1124 = vdwg.mxu0
    %1125 = vmatpush.bf16.msra.mxu0 %v833
    %1126 = vmatpush.bf16.msra.mxu0 %v829
    %1127 = vmatpush.bf16.msra.mxu0 %v825
    %1128 = vmatpush.bf16.msra.mxu0 %v821
    %1129 = vmatpush.bf16.msra.mxu0 %v817
    %1130 = vmatpush.bf16.msra.mxu0 %v813
    %1131 = vmatpush.bf16.msra.mxu0 %v809
    %1132 = vmatpush.bf16.msra.mxu0 %v805
    %1133 = vmatmul.bf16.gmra.mxu0 %v215
    %v1134 = vpop.f32.mrf.mxu0
    %v1135 = vadd.f32 %v1122, %v1134
    %v1136 = vpop.f32.mrf.mxu0
    %1137 = vdwg.mxu0
    %1138 = vmatpush.bf16.msra.mxu0 %v865
    %1139 = vmatpush.bf16.msra.mxu0 %v861
    %1140 = vmatpush.bf16.msra.mxu0 %v857
    %1141 = vmatpush.bf16.msra.mxu0 %v853
    %1142 = vmatpush.bf16.msra.mxu0 %v849
    %1143 = vmatpush.bf16.msra.mxu0 %v845
    %1144 = vmatpush.bf16.msra.mxu0 %v841
    %1145 = vmatpush.bf16.msra.mxu0 %v837
    %1146 = vmatmul.bf16.gmra.mxu0 %v216
    %v1147 = vpop.f32.mrf.mxu0
    %v1148 = vadd.f32 %v1135, %v1147
    %v1149 = vpop.f32.mrf.mxu0
    %1150 = vdwg.mxu0
    %1151 = vmatpush.bf16.msra.mxu0 %v770
    %1152 = vmatpush.bf16.msra.mxu0 %v766
    %1153 = vmatpush.bf16.msra.mxu0 %v762
    %1154 = vmatpush.bf16.msra.mxu0 %v758
    %1155 = vmatpush.bf16.msra.mxu0 %v754
    %1156 = vmatpush.bf16.msra.mxu0 %v750
    %1157 = vmatpush.bf16.msra.mxu0 %v746
    %1158 = vmatpush.bf16.msra.mxu0 %v742
    %1159 = vmatmul.bf16.gmra.mxu0 %v213
    %v1160 = vpop.f32.mrf.mxu0
    %v1161 = vadd.f32 %v350, %v1160
    %v1162 = vpop.f32.mrf.mxu0
    %1163 = vdwg.mxu0
    %1164 = vmatpush.bf16.msra.mxu0 %v802
    %1165 = vmatpush.bf16.msra.mxu0 %v798
    %1166 = vmatpush.bf16.msra.mxu0 %v794
    %1167 = vmatpush.bf16.msra.mxu0 %v790
    %1168 = vmatpush.bf16.msra.mxu0 %v786
    %1169 = vmatpush.bf16.msra.mxu0 %v782
    %1170 = vmatpush.bf16.msra.mxu0 %v778
    %1171 = vmatpush.bf16.msra.mxu0 %v774
    %1172 = vmatmul.bf16.gmra.mxu0 %v214
    %v1173 = vpop.f32.mrf.mxu0
    %v1174 = vadd.f32 %v1161, %v1173
    %v1175 = vpop.f32.mrf.mxu0
    %1176 = vdwg.mxu0
    %1177 = vmatpush.bf16.msra.mxu0 %v834
    %1178 = vmatpush.bf16.msra.mxu0 %v830
    %1179 = vmatpush.bf16.msra.mxu0 %v826
    %1180 = vmatpush.bf16.msra.mxu0 %v822
    %1181 = vmatpush.bf16.msra.mxu0 %v818
    %1182 = vmatpush.bf16.msra.mxu0 %v814
    %1183 = vmatpush.bf16.msra.mxu0 %v810
    %1184 = vmatpush.bf16.msra.mxu0 %v806
    %1185 = vmatmul.bf16.gmra.mxu0 %v215
    %v1186 = vpop.f32.mrf.mxu0
    %v1187 = vadd.f32 %v1174, %v1186
    %v1188 = vpop.f32.mrf.mxu0
    %1189 = vdwg.mxu0
    %1190 = vmatpush.bf16.msra.mxu0 %v866
    %1191 = vmatpush.bf16.msra.mxu0 %v862
    %1192 = vmatpush.bf16.msra.mxu0 %v858
    %1193 = vmatpush.bf16.msra.mxu0 %v854
    %1194 = vmatpush.bf16.msra.mxu0 %v850
    %1195 = vmatpush.bf16.msra.mxu0 %v846
    %1196 = vmatpush.bf16.msra.mxu0 %v842
    %1197 = vmatpush.bf16.msra.mxu0 %v838
    %1198 = vmatmul.bf16.gmra.mxu0 %v216
    %v1199 = vpop.f32.mrf.mxu0
    %v1200 = vadd.f32 %v1187, %v1199
    %v1201 = vpop.f32.mrf.mxu0
    %1202 = vdwg.mxu0
    %v1203 = vpack.c.bf16 %v1044, %v1044
    %v1204 = vpack.c.bf16 %v1096, %v1096
    %v1205 = vpack.c.bf16 %v1148, %v1148
    %v1206 = vpack.c.bf16 %v1200, %v1200
    %v1207 = vld [vmem:[#allocation8] sm:$0xff]
    %v1208 = vld [vmem:[#allocation8 + $0x8] sm:$0xff]
    %v1209 = vld [vmem:[#allocation8 + $0x10] sm:$0xff]
    %v1210 = vld [vmem:[#allocation8 + $0x18] sm:$0xff]
    %v1211 = vld [vmem:[#allocation8 + $0x20] sm:$0xff]
    %v1212 = vld [vmem:[#allocation8 + $0x28] sm:$0xff]
    %v1213 = vld [vmem:[#allocation8 + $0x30] sm:$0xff]
    %v1214 = vld [vmem:[#allocation8 + $0x38] sm:$0xff]
    %v1215 = vld [vmem:[#allocation8 + $0x40] sm:$0xff]
    %v1216 = vld [vmem:[#allocation8 + $0x48] sm:$0xff]
    %v1217 = vld [vmem:[#allocation8 + $0x50] sm:$0xff]
    %v1218 = vld [vmem:[#allocation8 + $0x58] sm:$0xff]
    %v1219 = vld [vmem:[#allocation8 + $0x60] sm:$0xff]
    %v1220 = vld [vmem:[#allocation8 + $0x68] sm:$0xff]
    %v1221 = vld [vmem:[#allocation8 + $0x70] sm:$0xff]
    %v1222 = vld [vmem:[#allocation8 + $0x78] sm:$0xff]
    %v1223 = vld [vmem:[#allocation8 + $0x80] sm:$0xff]
    %v1224 = vld [vmem:[#allocation8 + $0x88] sm:$0xff]
    %v1225 = vld [vmem:[#allocation8 + $0x90] sm:$0xff]
    %v1226 = vld [vmem:[#allocation8 + $0x98] sm:$0xff]
    %v1227 = vld [vmem:[#allocation8 + $0xa0] sm:$0xff]
    %v1228 = vld [vmem:[#allocation8 + $0xa8] sm:$0xff]
    %v1229 = vld [vmem:[#allocation8 + $0xb0] sm:$0xff]
    %v1230 = vld [vmem:[#allocation8 + $0xb8] sm:$0xff]
    %v1231 = vld [vmem:[#allocation8 + $0xc0] sm:$0xff]
    %v1232 = vld [vmem:[#allocation8 + $0xc8] sm:$0xff]
    %v1233 = vld [vmem:[#allocation8 + $0xd0] sm:$0xff]
    %v1234 = vld [vmem:[#allocation8 + $0xd8] sm:$0xff]
    %v1235 = vld [vmem:[#allocation8 + $0xe0] sm:$0xff]
    %v1236 = vld [vmem:[#allocation8 + $0xe8] sm:$0xff]
    %v1237 = vld [vmem:[#allocation8 + $0xf0] sm:$0xff]
    %v1238 = vld [vmem:[#allocation8 + $0xf8] sm:$0xff]
    %v1239 = vld [vmem:[#allocation8 + $0x100] sm:$0xff]
    %v1240 = vld [vmem:[#allocation8 + $0x108] sm:$0xff]
    %v1241 = vld [vmem:[#allocation8 + $0x110] sm:$0xff]
    %v1242 = vld [vmem:[#allocation8 + $0x118] sm:$0xff]
    %v1243 = vld [vmem:[#allocation8 + $0x120] sm:$0xff]
    %v1244 = vld [vmem:[#allocation8 + $0x128] sm:$0xff]
    %v1245 = vld [vmem:[#allocation8 + $0x130] sm:$0xff]
    %v1246 = vld [vmem:[#allocation8 + $0x138] sm:$0xff]
    %v1247 = vld [vmem:[#allocation8 + $0x140] sm:$0xff]
    %v1248 = vld [vmem:[#allocation8 + $0x148] sm:$0xff]
    %v1249 = vld [vmem:[#allocation8 + $0x150] sm:$0xff]
    %v1250 = vld [vmem:[#allocation8 + $0x158] sm:$0xff]
    %v1251 = vld [vmem:[#allocation8 + $0x160] sm:$0xff]
    %v1252 = vld [vmem:[#allocation8 + $0x168] sm:$0xff]
    %v1253 = vld [vmem:[#allocation8 + $0x170] sm:$0xff]
    %v1254 = vld [vmem:[#allocation8 + $0x178] sm:$0xff]
    %v1255 = vld [vmem:[#allocation8 + $0x180] sm:$0xff]
    %v1256 = vld [vmem:[#allocation8 + $0x188] sm:$0xff]
    %v1257 = vld [vmem:[#allocation8 + $0x190] sm:$0xff]
    %v1258 = vld [vmem:[#allocation8 + $0x198] sm:$0xff]
    %v1259 = vld [vmem:[#allocation8 + $0x1a0] sm:$0xff]
    %v1260 = vld [vmem:[#allocation8 + $0x1a8] sm:$0xff]
    %v1261 = vld [vmem:[#allocation8 + $0x1b0] sm:$0xff]
    %v1262 = vld [vmem:[#allocation8 + $0x1b8] sm:$0xff]
    %v1263 = vld [vmem:[#allocation8 + $0x1c0] sm:$0xff]
    %v1264 = vld [vmem:[#allocation8 + $0x1c8] sm:$0xff]
    %v1265 = vld [vmem:[#allocation8 + $0x1d0] sm:$0xff]
    %v1266 = vld [vmem:[#allocation8 + $0x1d8] sm:$0xff]
    %v1267 = vld [vmem:[#allocation8 + $0x1e0] sm:$0xff]
    %v1268 = vld [vmem:[#allocation8 + $0x1e8] sm:$0xff]
    %v1269 = vld [vmem:[#allocation8 + $0x1f0] sm:$0xff]
    %v1270 = vld [vmem:[#allocation8 + $0x1f8] sm:$0xff]
    %v1271 = vld [vmem:[#allocation8 + $0x200] sm:$0xff]
    %v1272 = vld [vmem:[#allocation8 + $0x208] sm:$0xff]
    %v1273 = vld [vmem:[#allocation8 + $0x210] sm:$0xff]
    %v1274 = vld [vmem:[#allocation8 + $0x218] sm:$0xff]
    %v1275 = vld [vmem:[#allocation8 + $0x220] sm:$0xff]
    %v1276 = vld [vmem:[#allocation8 + $0x228] sm:$0xff]
    %v1277 = vld [vmem:[#allocation8 + $0x230] sm:$0xff]
    %v1278 = vld [vmem:[#allocation8 + $0x238] sm:$0xff]
    %v1279 = vld [vmem:[#allocation8 + $0x240] sm:$0xff]
    %v1280 = vld [vmem:[#allocation8 + $0x248] sm:$0xff]
    %v1281 = vld [vmem:[#allocation8 + $0x250] sm:$0xff]
    %v1282 = vld [vmem:[#allocation8 + $0x258] sm:$0xff]
    %v1283 = vld [vmem:[#allocation8 + $0x260] sm:$0xff]
    %v1284 = vld [vmem:[#allocation8 + $0x268] sm:$0xff]
    %v1285 = vld [vmem:[#allocation8 + $0x270] sm:$0xff]
    %v1286 = vld [vmem:[#allocation8 + $0x278] sm:$0xff]
    %v1287 = vld [vmem:[#allocation8 + $0x280] sm:$0xff]
    %v1288 = vld [vmem:[#allocation8 + $0x288] sm:$0xff]
    %v1289 = vld [vmem:[#allocation8 + $0x290] sm:$0xff]
    %v1290 = vld [vmem:[#allocation8 + $0x298] sm:$0xff]
    %v1291 = vld [vmem:[#allocation8 + $0x2a0] sm:$0xff]
    %v1292 = vld [vmem:[#allocation8 + $0x2a8] sm:$0xff]
    %v1293 = vld [vmem:[#allocation8 + $0x2b0] sm:$0xff]
    %v1294 = vld [vmem:[#allocation8 + $0x2b8] sm:$0xff]
    %v1295 = vld [vmem:[#allocation8 + $0x2c0] sm:$0xff]
    %v1296 = vld [vmem:[#allocation8 + $0x2c8] sm:$0xff]
    %v1297 = vld [vmem:[#allocation8 + $0x2d0] sm:$0xff]
    %v1298 = vld [vmem:[#allocation8 + $0x2d8] sm:$0xff]
    %v1299 = vld [vmem:[#allocation8 + $0x2e0] sm:$0xff]
    %v1300 = vld [vmem:[#allocation8 + $0x2e8] sm:$0xff]
    %v1301 = vld [vmem:[#allocation8 + $0x2f0] sm:$0xff]
    %v1302 = vld [vmem:[#allocation8 + $0x2f8] sm:$0xff]
    %v1303 = vld [vmem:[#allocation8 + $0x300] sm:$0xff]
    %v1304 = vld [vmem:[#allocation8 + $0x308] sm:$0xff]
    %v1305 = vld [vmem:[#allocation8 + $0x310] sm:$0xff]
    %v1306 = vld [vmem:[#allocation8 + $0x318] sm:$0xff]
    %v1307 = vld [vmem:[#allocation8 + $0x320] sm:$0xff]
    %v1308 = vld [vmem:[#allocation8 + $0x328] sm:$0xff]
    %v1309 = vld [vmem:[#allocation8 + $0x330] sm:$0xff]
    %v1310 = vld [vmem:[#allocation8 + $0x338] sm:$0xff]
    %v1311 = vld [vmem:[#allocation8 + $0x340] sm:$0xff]
    %v1312 = vld [vmem:[#allocation8 + $0x348] sm:$0xff]
    %v1313 = vld [vmem:[#allocation8 + $0x350] sm:$0xff]
    %v1314 = vld [vmem:[#allocation8 + $0x358] sm:$0xff]
    %v1315 = vld [vmem:[#allocation8 + $0x360] sm:$0xff]
    %v1316 = vld [vmem:[#allocation8 + $0x368] sm:$0xff]
    %v1317 = vld [vmem:[#allocation8 + $0x370] sm:$0xff]
    %v1318 = vld [vmem:[#allocation8 + $0x378] sm:$0xff]
    %v1319 = vld [vmem:[#allocation8 + $0x380] sm:$0xff]
    %v1320 = vld [vmem:[#allocation8 + $0x388] sm:$0xff]
    %v1321 = vld [vmem:[#allocation8 + $0x390] sm:$0xff]
    %v1322 = vld [vmem:[#allocation8 + $0x398] sm:$0xff]
    %v1323 = vld [vmem:[#allocation8 + $0x3a0] sm:$0xff]
    %v1324 = vld [vmem:[#allocation8 + $0x3a8] sm:$0xff]
    %v1325 = vld [vmem:[#allocation8 + $0x3b0] sm:$0xff]
    %v1326 = vld [vmem:[#allocation8 + $0x3b8] sm:$0xff]
    %v1327 = vld [vmem:[#allocation8 + $0x3c0] sm:$0xff]
    %v1328 = vld [vmem:[#allocation8 + $0x3c8] sm:$0xff]
    %v1329 = vld [vmem:[#allocation8 + $0x3d0] sm:$0xff]
    %v1330 = vld [vmem:[#allocation8 + $0x3d8] sm:$0xff]
    %v1331 = vld [vmem:[#allocation8 + $0x3e0] sm:$0xff]
    %v1332 = vld [vmem:[#allocation8 + $0x3e8] sm:$0xff]
    %v1333 = vld [vmem:[#allocation8 + $0x3f0] sm:$0xff]
    %v1334 = vld [vmem:[#allocation8 + $0x3f8] sm:$0xff]
    %v1335 = vld [vmem:[#allocation10] sm:$0xf]
    %v1337 = vperm.slane %v1335, 0
    %v1338 = vperm.slane %v1335, 1
    %v1339 = vperm.slane %v1335, 2
    %v1340 = vperm.slane %v1335, 3
    %v1473 = vunpack.c.l.b16 %v1207
    %v1474 = vunpack.c.h.b16 %v1207
    %v1475 = vunpack.c.l.b16 %v1208
    %v1476 = vunpack.c.h.b16 %v1208
    %v1477 = vunpack.c.l.b16 %v1209
    %v1478 = vunpack.c.h.b16 %v1209
    %v1479 = vunpack.c.l.b16 %v1210
    %v1480 = vunpack.c.h.b16 %v1210
    %v1481 = vunpack.c.l.b16 %v1211
    %v1482 = vunpack.c.h.b16 %v1211
    %v1483 = vunpack.c.l.b16 %v1212
    %v1484 = vunpack.c.h.b16 %v1212
    %v1485 = vunpack.c.l.b16 %v1213
    %v1486 = vunpack.c.h.b16 %v1213
    %v1487 = vunpack.c.l.b16 %v1214
    %v1488 = vunpack.c.h.b16 %v1214
    %v1489 = vunpack.c.l.b16 %v1215
    %v1490 = vunpack.c.h.b16 %v1215
    %v1491 = vunpack.c.l.b16 %v1216
    %v1492 = vunpack.c.h.b16 %v1216
    %v1493 = vunpack.c.l.b16 %v1217
    %v1494 = vunpack.c.h.b16 %v1217
    %v1495 = vunpack.c.l.b16 %v1218
    %v1496 = vunpack.c.h.b16 %v1218
    %v1497 = vunpack.c.l.b16 %v1219
    %v1498 = vunpack.c.h.b16 %v1219
    %v1499 = vunpack.c.l.b16 %v1220
    %v1500 = vunpack.c.h.b16 %v1220
    %v1501 = vunpack.c.l.b16 %v1221
    %v1502 = vunpack.c.h.b16 %v1221
    %v1503 = vunpack.c.l.b16 %v1222
    %v1504 = vunpack.c.h.b16 %v1222
    %v1505 = vunpack.c.l.b16 %v1223
    %v1506 = vunpack.c.h.b16 %v1223
    %v1507 = vunpack.c.l.b16 %v1224
    %v1508 = vunpack.c.h.b16 %v1224
    %v1509 = vunpack.c.l.b16 %v1225
    %v1510 = vunpack.c.h.b16 %v1225
    %v1511 = vunpack.c.l.b16 %v1226
    %v1512 = vunpack.c.h.b16 %v1226
    %v1513 = vunpack.c.l.b16 %v1227
    %v1514 = vunpack.c.h.b16 %v1227
    %v1515 = vunpack.c.l.b16 %v1228
    %v1516 = vunpack.c.h.b16 %v1228
    %v1517 = vunpack.c.l.b16 %v1229
    %v1518 = vunpack.c.h.b16 %v1229
    %v1519 = vunpack.c.l.b16 %v1230
    %v1520 = vunpack.c.h.b16 %v1230
    %v1521 = vunpack.c.l.b16 %v1231
    %v1522 = vunpack.c.h.b16 %v1231
    %v1523 = vunpack.c.l.b16 %v1232
    %v1524 = vunpack.c.h.b16 %v1232
    %v1525 = vunpack.c.l.b16 %v1233
    %v1526 = vunpack.c.h.b16 %v1233
    %v1527 = vunpack.c.l.b16 %v1234
    %v1528 = vunpack.c.h.b16 %v1234
    %v1529 = vunpack.c.l.b16 %v1235
    %v1530 = vunpack.c.h.b16 %v1235
    %v1531 = vunpack.c.l.b16 %v1236
    %v1532 = vunpack.c.h.b16 %v1236
    %v1533 = vunpack.c.l.b16 %v1237
    %v1534 = vunpack.c.h.b16 %v1237
    %v1535 = vunpack.c.l.b16 %v1238
    %v1536 = vunpack.c.h.b16 %v1238
    %v1537 = vunpack.c.l.b16 %v1239
    %v1538 = vunpack.c.h.b16 %v1239
    %v1539 = vunpack.c.l.b16 %v1240
    %v1540 = vunpack.c.h.b16 %v1240
    %v1541 = vunpack.c.l.b16 %v1241
    %v1542 = vunpack.c.h.b16 %v1241
    %v1543 = vunpack.c.l.b16 %v1242
    %v1544 = vunpack.c.h.b16 %v1242
    %v1545 = vunpack.c.l.b16 %v1243
    %v1546 = vunpack.c.h.b16 %v1243
    %v1547 = vunpack.c.l.b16 %v1244
    %v1548 = vunpack.c.h.b16 %v1244
    %v1549 = vunpack.c.l.b16 %v1245
    %v1550 = vunpack.c.h.b16 %v1245
    %v1551 = vunpack.c.l.b16 %v1246
    %v1552 = vunpack.c.h.b16 %v1246
    %v1553 = vunpack.c.l.b16 %v1247
    %v1554 = vunpack.c.h.b16 %v1247
    %v1555 = vunpack.c.l.b16 %v1248
    %v1556 = vunpack.c.h.b16 %v1248
    %v1557 = vunpack.c.l.b16 %v1249
    %v1558 = vunpack.c.h.b16 %v1249
    %v1559 = vunpack.c.l.b16 %v1250
    %v1560 = vunpack.c.h.b16 %v1250
    %v1561 = vunpack.c.l.b16 %v1251
    %v1562 = vunpack.c.h.b16 %v1251
    %v1563 = vunpack.c.l.b16 %v1252
    %v1564 = vunpack.c.h.b16 %v1252
    %v1565 = vunpack.c.l.b16 %v1253
    %v1566 = vunpack.c.h.b16 %v1253
    %v1567 = vunpack.c.l.b16 %v1254
    %v1568 = vunpack.c.h.b16 %v1254
    %v1569 = vunpack.c.l.b16 %v1255
    %v1570 = vunpack.c.h.b16 %v1255
    %v1571 = vunpack.c.l.b16 %v1256
    %v1572 = vunpack.c.h.b16 %v1256
    %v1573 = vunpack.c.l.b16 %v1257
    %v1574 = vunpack.c.h.b16 %v1257
    %v1575 = vunpack.c.l.b16 %v1258
    %v1576 = vunpack.c.h.b16 %v1258
    %v1577 = vunpack.c.l.b16 %v1259
    %v1578 = vunpack.c.h.b16 %v1259
    %v1579 = vunpack.c.l.b16 %v1260
    %v1580 = vunpack.c.h.b16 %v1260
    %v1581 = vunpack.c.l.b16 %v1261
    %v1582 = vunpack.c.h.b16 %v1261
    %v1583 = vunpack.c.l.b16 %v1262
    %v1584 = vunpack.c.h.b16 %v1262
    %v1585 = vunpack.c.l.b16 %v1263
    %v1586 = vunpack.c.h.b16 %v1263
    %v1587 = vunpack.c.l.b16 %v1264
    %v1588 = vunpack.c.h.b16 %v1264
    %v1589 = vunpack.c.l.b16 %v1265
    %v1590 = vunpack.c.h.b16 %v1265
    %v1591 = vunpack.c.l.b16 %v1266
    %v1592 = vunpack.c.h.b16 %v1266
    %v1593 = vunpack.c.l.b16 %v1267
    %v1594 = vunpack.c.h.b16 %v1267
    %v1595 = vunpack.c.l.b16 %v1268
    %v1596 = vunpack.c.h.b16 %v1268
    %v1597 = vunpack.c.l.b16 %v1269
    %v1598 = vunpack.c.h.b16 %v1269
    %v1599 = vunpack.c.l.b16 %v1270
    %v1600 = vunpack.c.h.b16 %v1270
    %v1601 = vunpack.c.l.b16 %v1271
    %v1602 = vunpack.c.h.b16 %v1271
    %v1603 = vunpack.c.l.b16 %v1272
    %v1604 = vunpack.c.h.b16 %v1272
    %v1605 = vunpack.c.l.b16 %v1273
    %v1606 = vunpack.c.h.b16 %v1273
    %v1607 = vunpack.c.l.b16 %v1274
    %v1608 = vunpack.c.h.b16 %v1274
    %v1609 = vunpack.c.l.b16 %v1275
    %v1610 = vunpack.c.h.b16 %v1275
    %v1611 = vunpack.c.l.b16 %v1276
    %v1612 = vunpack.c.h.b16 %v1276
    %v1613 = vunpack.c.l.b16 %v1277
    %v1614 = vunpack.c.h.b16 %v1277
    %v1615 = vunpack.c.l.b16 %v1278
    %v1616 = vunpack.c.h.b16 %v1278
    %v1617 = vunpack.c.l.b16 %v1279
    %v1618 = vunpack.c.h.b16 %v1279
    %v1619 = vunpack.c.l.b16 %v1280
    %v1620 = vunpack.c.h.b16 %v1280
    %v1621 = vunpack.c.l.b16 %v1281
    %v1622 = vunpack.c.h.b16 %v1281
    %v1623 = vunpack.c.l.b16 %v1282
    %v1624 = vunpack.c.h.b16 %v1282
    %v1625 = vunpack.c.l.b16 %v1283
    %v1626 = vunpack.c.h.b16 %v1283
    %v1627 = vunpack.c.l.b16 %v1284
    %v1628 = vunpack.c.h.b16 %v1284
    %v1629 = vunpack.c.l.b16 %v1285
    %v1630 = vunpack.c.h.b16 %v1285
    %v1631 = vunpack.c.l.b16 %v1286
    %v1632 = vunpack.c.h.b16 %v1286
    %v1633 = vunpack.c.l.b16 %v1287
    %v1634 = vunpack.c.h.b16 %v1287
    %v1635 = vunpack.c.l.b16 %v1288
    %v1636 = vunpack.c.h.b16 %v1288
    %v1637 = vunpack.c.l.b16 %v1289
    %v1638 = vunpack.c.h.b16 %v1289
    %v1639 = vunpack.c.l.b16 %v1290
    %v1640 = vunpack.c.h.b16 %v1290
    %v1641 = vunpack.c.l.b16 %v1291
    %v1642 = vunpack.c.h.b16 %v1291
    %v1643 = vunpack.c.l.b16 %v1292
    %v1644 = vunpack.c.h.b16 %v1292
    %v1645 = vunpack.c.l.b16 %v1293
    %v1646 = vunpack.c.h.b16 %v1293
    %v1647 = vunpack.c.l.b16 %v1294
    %v1648 = vunpack.c.h.b16 %v1294
    %v1649 = vunpack.c.l.b16 %v1295
    %v1650 = vunpack.c.h.b16 %v1295
    %v1651 = vunpack.c.l.b16 %v1296
    %v1652 = vunpack.c.h.b16 %v1296
    %v1653 = vunpack.c.l.b16 %v1297
    %v1654 = vunpack.c.h.b16 %v1297
    %v1655 = vunpack.c.l.b16 %v1298
    %v1656 = vunpack.c.h.b16 %v1298
    %v1657 = vunpack.c.l.b16 %v1299
    %v1658 = vunpack.c.h.b16 %v1299
    %v1659 = vunpack.c.l.b16 %v1300
    %v1660 = vunpack.c.h.b16 %v1300
    %v1661 = vunpack.c.l.b16 %v1301
    %v1662 = vunpack.c.h.b16 %v1301
    %v1663 = vunpack.c.l.b16 %v1302
    %v1664 = vunpack.c.h.b16 %v1302
    %v1665 = vunpack.c.l.b16 %v1303
    %v1666 = vunpack.c.h.b16 %v1303
    %v1667 = vunpack.c.l.b16 %v1304
    %v1668 = vunpack.c.h.b16 %v1304
    %v1669 = vunpack.c.l.b16 %v1305
    %v1670 = vunpack.c.h.b16 %v1305
    %v1671 = vunpack.c.l.b16 %v1306
    %v1672 = vunpack.c.h.b16 %v1306
    %v1673 = vunpack.c.l.b16 %v1307
    %v1674 = vunpack.c.h.b16 %v1307
    %v1675 = vunpack.c.l.b16 %v1308
    %v1676 = vunpack.c.h.b16 %v1308
    %v1677 = vunpack.c.l.b16 %v1309
    %v1678 = vunpack.c.h.b16 %v1309
    %v1679 = vunpack.c.l.b16 %v1310
    %v1680 = vunpack.c.h.b16 %v1310
    %v1681 = vunpack.c.l.b16 %v1311
    %v1682 = vunpack.c.h.b16 %v1311
    %v1683 = vunpack.c.l.b16 %v1312
    %v1684 = vunpack.c.h.b16 %v1312
    %v1685 = vunpack.c.l.b16 %v1313
    %v1686 = vunpack.c.h.b16 %v1313
    %v1687 = vunpack.c.l.b16 %v1314
    %v1688 = vunpack.c.h.b16 %v1314
    %v1689 = vunpack.c.l.b16 %v1315
    %v1690 = vunpack.c.h.b16 %v1315
    %v1691 = vunpack.c.l.b16 %v1316
    %v1692 = vunpack.c.h.b16 %v1316
    %v1693 = vunpack.c.l.b16 %v1317
    %v1694 = vunpack.c.h.b16 %v1317
    %v1695 = vunpack.c.l.b16 %v1318
    %v1696 = vunpack.c.h.b16 %v1318
    %v1697 = vunpack.c.l.b16 %v1319
    %v1698 = vunpack.c.h.b16 %v1319
    %v1699 = vunpack.c.l.b16 %v1320
    %v1700 = vunpack.c.h.b16 %v1320
    %v1701 = vunpack.c.l.b16 %v1321
    %v1702 = vunpack.c.h.b16 %v1321
    %v1703 = vunpack.c.l.b16 %v1322
    %v1704 = vunpack.c.h.b16 %v1322
    %v1705 = vunpack.c.l.b16 %v1323
    %v1706 = vunpack.c.h.b16 %v1323
    %v1707 = vunpack.c.l.b16 %v1324
    %v1708 = vunpack.c.h.b16 %v1324
    %v1709 = vunpack.c.l.b16 %v1325
    %v1710 = vunpack.c.h.b16 %v1325
    %v1711 = vunpack.c.l.b16 %v1326
    %v1712 = vunpack.c.h.b16 %v1326
    %v1713 = vunpack.c.l.b16 %v1327
    %v1714 = vunpack.c.h.b16 %v1327
    %v1715 = vunpack.c.l.b16 %v1328
    %v1716 = vunpack.c.h.b16 %v1328
    %v1717 = vunpack.c.l.b16 %v1329
    %v1718 = vunpack.c.h.b16 %v1329
    %v1719 = vunpack.c.l.b16 %v1330
    %v1720 = vunpack.c.h.b16 %v1330
    %v1721 = vunpack.c.l.b16 %v1331
    %v1722 = vunpack.c.h.b16 %v1331
    %v1723 = vunpack.c.l.b16 %v1332
    %v1724 = vunpack.c.h.b16 %v1332
    %v1725 = vunpack.c.l.b16 %v1333
    %v1726 = vunpack.c.h.b16 %v1333
    %v1727 = vunpack.c.l.b16 %v1334
    %v1728 = vunpack.c.h.b16 %v1334
    %v1729 = vpack.c.b16 %v1477, %v1473
    %v1730 = vpack.c.b16 %v1478, %v1474
    %v1731 = vpack.c.b16 %v1479, %v1475
    %v1732 = vpack.c.b16 %v1480, %v1476
    %v1733 = vpack.c.b16 %v1485, %v1481
    %v1734 = vpack.c.b16 %v1486, %v1482
    %v1735 = vpack.c.b16 %v1487, %v1483
    %v1736 = vpack.c.b16 %v1488, %v1484
    %v1737 = vpack.c.b16 %v1493, %v1489
    %v1738 = vpack.c.b16 %v1494, %v1490
    %v1739 = vpack.c.b16 %v1495, %v1491
    %v1740 = vpack.c.b16 %v1496, %v1492
    %v1741 = vpack.c.b16 %v1501, %v1497
    %v1742 = vpack.c.b16 %v1502, %v1498
    %v1743 = vpack.c.b16 %v1503, %v1499
    %v1744 = vpack.c.b16 %v1504, %v1500
    %v1745 = vpack.c.b16 %v1509, %v1505
    %v1746 = vpack.c.b16 %v1510, %v1506
    %v1747 = vpack.c.b16 %v1511, %v1507
    %v1748 = vpack.c.b16 %v1512, %v1508
    %v1749 = vpack.c.b16 %v1517, %v1513
    %v1750 = vpack.c.b16 %v1518, %v1514
    %v1751 = vpack.c.b16 %v1519, %v1515
    %v1752 = vpack.c.b16 %v1520, %v1516
    %v1753 = vpack.c.b16 %v1525, %v1521
    %v1754 = vpack.c.b16 %v1526, %v1522
    %v1755 = vpack.c.b16 %v1527, %v1523
    %v1756 = vpack.c.b16 %v1528, %v1524
    %v1757 = vpack.c.b16 %v1533, %v1529
    %v1758 = vpack.c.b16 %v1534, %v1530
    %v1759 = vpack.c.b16 %v1535, %v1531
    %v1760 = vpack.c.b16 %v1536, %v1532
    %v1761 = vpack.c.b16 %v1541, %v1537
    %v1762 = vpack.c.b16 %v1542, %v1538
    %v1763 = vpack.c.b16 %v1543, %v1539
    %v1764 = vpack.c.b16 %v1544, %v1540
    %v1765 = vpack.c.b16 %v1549, %v1545
    %v1766 = vpack.c.b16 %v1550, %v1546
    %v1767 = vpack.c.b16 %v1551, %v1547
    %v1768 = vpack.c.b16 %v1552, %v1548
    %v1769 = vpack.c.b16 %v1557, %v1553
    %v1770 = vpack.c.b16 %v1558, %v1554
    %v1771 = vpack.c.b16 %v1559, %v1555
    %v1772 = vpack.c.b16 %v1560, %v1556
    %v1773 = vpack.c.b16 %v1565, %v1561
    %v1774 = vpack.c.b16 %v1566, %v1562
    %v1775 = vpack.c.b16 %v1567, %v1563
    %v1776 = vpack.c.b16 %v1568, %v1564
    %v1777 = vpack.c.b16 %v1573, %v1569
    %v1778 = vpack.c.b16 %v1574, %v1570
    %v1779 = vpack.c.b16 %v1575, %v1571
    %v1780 = vpack.c.b16 %v1576, %v1572
    %v1781 = vpack.c.b16 %v1581, %v1577
    %v1782 = vpack.c.b16 %v1582, %v1578
    %v1783 = vpack.c.b16 %v1583, %v1579
    %v1784 = vpack.c.b16 %v1584, %v1580
    %v1785 = vpack.c.b16 %v1589, %v1585
    %v1786 = vpack.c.b16 %v1590, %v1586
    %v1787 = vpack.c.b16 %v1591, %v1587
    %v1788 = vpack.c.b16 %v1592, %v1588
    %v1789 = vpack.c.b16 %v1597, %v1593
    %v1790 = vpack.c.b16 %v1598, %v1594
    %v1791 = vpack.c.b16 %v1599, %v1595
    %v1792 = vpack.c.b16 %v1600, %v1596
    %v1793 = vpack.c.b16 %v1605, %v1601
    %v1794 = vpack.c.b16 %v1606, %v1602
    %v1795 = vpack.c.b16 %v1607, %v1603
    %v1796 = vpack.c.b16 %v1608, %v1604
    %v1797 = vpack.c.b16 %v1613, %v1609
    %v1798 = vpack.c.b16 %v1614, %v1610
    %v1799 = vpack.c.b16 %v1615, %v1611
    %v1800 = vpack.c.b16 %v1616, %v1612
    %v1801 = vpack.c.b16 %v1621, %v1617
    %v1802 = vpack.c.b16 %v1622, %v1618
    %v1803 = vpack.c.b16 %v1623, %v1619
    %v1804 = vpack.c.b16 %v1624, %v1620
    %v1805 = vpack.c.b16 %v1629, %v1625
    %v1806 = vpack.c.b16 %v1630, %v1626
    %v1807 = vpack.c.b16 %v1631, %v1627
    %v1808 = vpack.c.b16 %v1632, %v1628
    %v1809 = vpack.c.b16 %v1637, %v1633
    %v1810 = vpack.c.b16 %v1638, %v1634
    %v1811 = vpack.c.b16 %v1639, %v1635
    %v1812 = vpack.c.b16 %v1640, %v1636
    %v1813 = vpack.c.b16 %v1645, %v1641
    %v1814 = vpack.c.b16 %v1646, %v1642
    %v1815 = vpack.c.b16 %v1647, %v1643
    %v1816 = vpack.c.b16 %v1648, %v1644
    %v1817 = vpack.c.b16 %v1653, %v1649
    %v1818 = vpack.c.b16 %v1654, %v1650
    %v1819 = vpack.c.b16 %v1655, %v1651
    %v1820 = vpack.c.b16 %v1656, %v1652
    %v1821 = vpack.c.b16 %v1661, %v1657
    %v1822 = vpack.c.b16 %v1662, %v1658
    %v1823 = vpack.c.b16 %v1663, %v1659
    %v1824 = vpack.c.b16 %v1664, %v1660
    %v1825 = vpack.c.b16 %v1669, %v1665
    %v1826 = vpack.c.b16 %v1670, %v1666
    %v1827 = vpack.c.b16 %v1671, %v1667
    %v1828 = vpack.c.b16 %v1672, %v1668
    %v1829 = vpack.c.b16 %v1677, %v1673
    %v1830 = vpack.c.b16 %v1678, %v1674
    %v1831 = vpack.c.b16 %v1679, %v1675
    %v1832 = vpack.c.b16 %v1680, %v1676
    %v1833 = vpack.c.b16 %v1685, %v1681
    %v1834 = vpack.c.b16 %v1686, %v1682
    %v1835 = vpack.c.b16 %v1687, %v1683
    %v1836 = vpack.c.b16 %v1688, %v1684
    %v1837 = vpack.c.b16 %v1693, %v1689
    %v1838 = vpack.c.b16 %v1694, %v1690
    %v1839 = vpack.c.b16 %v1695, %v1691
    %v1840 = vpack.c.b16 %v1696, %v1692
    %v1841 = vpack.c.b16 %v1701, %v1697
    %v1842 = vpack.c.b16 %v1702, %v1698
    %v1843 = vpack.c.b16 %v1703, %v1699
    %v1844 = vpack.c.b16 %v1704, %v1700
    %v1845 = vpack.c.b16 %v1709, %v1705
    %v1846 = vpack.c.b16 %v1710, %v1706
    %v1847 = vpack.c.b16 %v1711, %v1707
    %v1848 = vpack.c.b16 %v1712, %v1708
    %v1849 = vpack.c.b16 %v1717, %v1713
    %v1850 = vpack.c.b16 %v1718, %v1714
    %v1851 = vpack.c.b16 %v1719, %v1715
    %v1852 = vpack.c.b16 %v1720, %v1716
    %v1853 = vpack.c.b16 %v1725, %v1721
    %v1854 = vpack.c.b16 %v1726, %v1722
    %v1855 = vpack.c.b16 %v1727, %v1723
    %v1856 = vpack.c.b16 %v1728, %v1724
    %1985 = vmatpush.bf16.msra.mxu0 %v1757
    %1986 = vmatpush.bf16.msra.mxu0 %v1753
    %1987 = vmatpush.bf16.msra.mxu0 %v1749
    %1988 = vmatpush.bf16.msra.mxu0 %v1745
    %1989 = vmatpush.bf16.msra.mxu0 %v1741
    %1990 = vmatpush.bf16.msra.mxu0 %v1737
    %1991 = vmatpush.bf16.msra.mxu0 %v1733
    %1992 = vmatpush.bf16.msra.mxu0 %v1729
    %1993 = vmatmul.bf16.gmra.mxu0 %v1203
    %v1994 = vpop.f32.mrf.mxu0
    %v1995 = vadd.f32 %v1337, %v1994
    %v1996 = vpop.f32.mrf.mxu0
    %1997 = vdwg.mxu0
    %1998 = vmatpush.bf16.msra.mxu0 %v1789
    %1999 = vmatpush.bf16.msra.mxu0 %v1785
    %2000 = vmatpush.bf16.msra.mxu0 %v1781
    %2001 = vmatpush.bf16.msra.mxu0 %v1777
    %2002 = vmatpush.bf16.msra.mxu0 %v1773
    %2003 = vmatpush.bf16.msra.mxu0 %v1769
    %2004 = vmatpush.bf16.msra.mxu0 %v1765
    %2005 = vmatpush.bf16.msra.mxu0 %v1761
    %2006 = vmatmul.bf16.gmra.mxu0 %v1204
    %v2007 = vpop.f32.mrf.mxu0
    %v2008 = vadd.f32 %v1995, %v2007
    %v2009 = vpop.f32.mrf.mxu0
    %2010 = vdwg.mxu0
    %2011 = vmatpush.bf16.msra.mxu0 %v1821
    %2012 = vmatpush.bf16.msra.mxu0 %v1817
    %2013 = vmatpush.bf16.msra.mxu0 %v1813
    %2014 = vmatpush.bf16.msra.mxu0 %v1809
    %2015 = vmatpush.bf16.msra.mxu0 %v1805
    %2016 = vmatpush.bf16.msra.mxu0 %v1801
    %2017 = vmatpush.bf16.msra.mxu0 %v1797
    %2018 = vmatpush.bf16.msra.mxu0 %v1793
    %2019 = vmatmul.bf16.gmra.mxu0 %v1205
    %v2020 = vpop.f32.mrf.mxu0
    %v2021 = vadd.f32 %v2008, %v2020
    %v2022 = vpop.f32.mrf.mxu0
    %2023 = vdwg.mxu0
    %2024 = vmatpush.bf16.msra.mxu0 %v1853
    %2025 = vmatpush.bf16.msra.mxu0 %v1849
    %2026 = vmatpush.bf16.msra.mxu0 %v1845
    %2027 = vmatpush.bf16.msra.mxu0 %v1841
    %2028 = vmatpush.bf16.msra.mxu0 %v1837
    %2029 = vmatpush.bf16.msra.mxu0 %v1833
    %2030 = vmatpush.bf16.msra.mxu0 %v1829
    %2031 = vmatpush.bf16.msra.mxu0 %v1825
    %2032 = vmatmul.bf16.gmra.mxu0 %v1206
    %v2033 = vpop.f32.mrf.mxu0
    %v2034 = vadd.f32 %v2021, %v2033
    %v2035 = vpop.f32.mrf.mxu0
    %2036 = vdwg.mxu0
    %2037 = vmatpush.bf16.msra.mxu0 %v1758
    %2038 = vmatpush.bf16.msra.mxu0 %v1754
    %2039 = vmatpush.bf16.msra.mxu0 %v1750
    %2040 = vmatpush.bf16.msra.mxu0 %v1746
    %2041 = vmatpush.bf16.msra.mxu0 %v1742
    %2042 = vmatpush.bf16.msra.mxu0 %v1738
    %2043 = vmatpush.bf16.msra.mxu0 %v1734
    %2044 = vmatpush.bf16.msra.mxu0 %v1730
    %2045 = vmatmul.bf16.gmra.mxu0 %v1203
    %v2046 = vpop.f32.mrf.mxu0
    %v2047 = vadd.f32 %v1338, %v2046
    %v2048 = vpop.f32.mrf.mxu0
    %2049 = vdwg.mxu0
    %2050 = vmatpush.bf16.msra.mxu0 %v1790
    %2051 = vmatpush.bf16.msra.mxu0 %v1786
    %2052 = vmatpush.bf16.msra.mxu0 %v1782
    %2053 = vmatpush.bf16.msra.mxu0 %v1778
    %2054 = vmatpush.bf16.msra.mxu0 %v1774
    %2055 = vmatpush.bf16.msra.mxu0 %v1770
    %2056 = vmatpush.bf16.msra.mxu0 %v1766
    %2057 = vmatpush.bf16.msra.mxu0 %v1762
    %2058 = vmatmul.bf16.gmra.mxu0 %v1204
    %v2059 = vpop.f32.mrf.mxu0
    %v2060 = vadd.f32 %v2047, %v2059
    %v2061 = vpop.f32.mrf.mxu0
    %2062 = vdwg.mxu0
    %2063 = vmatpush.bf16.msra.mxu0 %v1822
    %2064 = vmatpush.bf16.msra.mxu0 %v1818
    %2065 = vmatpush.bf16.msra.mxu0 %v1814
    %2066 = vmatpush.bf16.msra.mxu0 %v1810
    %2067 = vmatpush.bf16.msra.mxu0 %v1806
    %2068 = vmatpush.bf16.msra.mxu0 %v1802
    %2069 = vmatpush.bf16.msra.mxu0 %v1798
    %2070 = vmatpush.bf16.msra.mxu0 %v1794
    %2071 = vmatmul.bf16.gmra.mxu0 %v1205
    %v2072 = vpop.f32.mrf.mxu0
    %v2073 = vadd.f32 %v2060, %v2072
    %v2074 = vpop.f32.mrf.mxu0
    %2075 = vdwg.mxu0
    %2076 = vmatpush.bf16.msra.mxu0 %v1854
    %2077 = vmatpush.bf16.msra.mxu0 %v1850
    %2078 = vmatpush.bf16.msra.mxu0 %v1846
    %2079 = vmatpush.bf16.msra.mxu0 %v1842
    %2080 = vmatpush.bf16.msra.mxu0 %v1838
    %2081 = vmatpush.bf16.msra.mxu0 %v1834
    %2082 = vmatpush.bf16.msra.mxu0 %v1830
    %2083 = vmatpush.bf16.msra.mxu0 %v1826
    %2084 = vmatmul.bf16.gmra.mxu0 %v1206
    %v2085 = vpop.f32.mrf.mxu0
    %v2086 = vadd.f32 %v2073, %v2085
    %v2087 = vpop.f32.mrf.mxu0
    %2088 = vdwg.mxu0
    %2089 = vmatpush.bf16.msra.mxu0 %v1759
    %2090 = vmatpush.bf16.msra.mxu0 %v1755
    %2091 = vmatpush.bf16.msra.mxu0 %v1751
    %2092 = vmatpush.bf16.msra.mxu0 %v1747
    %2093 = vmatpush.bf16.msra.mxu0 %v1743
    %2094 = vmatpush.bf16.msra.mxu0 %v1739
    %2095 = vmatpush.bf16.msra.mxu0 %v1735
    %2096 = vmatpush.bf16.msra.mxu0 %v1731
    %2097 = vmatmul.bf16.gmra.mxu0 %v1203
    %v2098 = vpop.f32.mrf.mxu0
    %v2099 = vadd.f32 %v1339, %v2098
    %v2100 = vpop.f32.mrf.mxu0
    %2101 = vdwg.mxu0
    %2102 = vmatpush.bf16.msra.mxu0 %v1791
    %2103 = vmatpush.bf16.msra.mxu0 %v1787
    %2104 = vmatpush.bf16.msra.mxu0 %v1783
    %2105 = vmatpush.bf16.msra.mxu0 %v1779
    %2106 = vmatpush.bf16.msra.mxu0 %v1775
    %2107 = vmatpush.bf16.msra.mxu0 %v1771
    %2108 = vmatpush.bf16.msra.mxu0 %v1767
    %2109 = vmatpush.bf16.msra.mxu0 %v1763
    %2110 = vmatmul.bf16.gmra.mxu0 %v1204
    %v2111 = vpop.f32.mrf.mxu0
    %v2112 = vadd.f32 %v2099, %v2111
    %v2113 = vpop.f32.mrf.mxu0
    %2114 = vdwg.mxu0
    %2115 = vmatpush.bf16.msra.mxu0 %v1823
    %2116 = vmatpush.bf16.msra.mxu0 %v1819
    %2117 = vmatpush.bf16.msra.mxu0 %v1815
    %2118 = vmatpush.bf16.msra.mxu0 %v1811
    %2119 = vmatpush.bf16.msra.mxu0 %v1807
    %2120 = vmatpush.bf16.msra.mxu0 %v1803
    %2121 = vmatpush.bf16.msra.mxu0 %v1799
    %2122 = vmatpush.bf16.msra.mxu0 %v1795
    %2123 = vmatmul.bf16.gmra.mxu0 %v1205
    %v2124 = vpop.f32.mrf.mxu0
    %v2125 = vadd.f32 %v2112, %v2124
    %v2126 = vpop.f32.mrf.mxu0
    %2127 = vdwg.mxu0
    %2128 = vmatpush.bf16.msra.mxu0 %v1855
    %2129 = vmatpush.bf16.msra.mxu0 %v1851
    %2130 = vmatpush.bf16.msra.mxu0 %v1847
    %2131 = vmatpush.bf16.msra.mxu0 %v1843
    %2132 = vmatpush.bf16.msra.mxu0 %v1839
    %2133 = vmatpush.bf16.msra.mxu0 %v1835
    %2134 = vmatpush.bf16.msra.mxu0 %v1831
    %2135 = vmatpush.bf16.msra.mxu0 %v1827
    %2136 = vmatmul.bf16.gmra.mxu0 %v1206
    %v2137 = vpop.f32.mrf.mxu0
    %v2138 = vadd.f32 %v2125, %v2137
    %v2139 = vpop.f32.mrf.mxu0
    %2140 = vdwg.mxu0
    %2141 = vmatpush.bf16.msra.mxu0 %v1760
    %2142 = vmatpush.bf16.msra.mxu0 %v1756
    %2143 = vmatpush.bf16.msra.mxu0 %v1752
    %2144 = vmatpush.bf16.msra.mxu0 %v1748
    %2145 = vmatpush.bf16.msra.mxu0 %v1744
    %2146 = vmatpush.bf16.msra.mxu0 %v1740
    %2147 = vmatpush.bf16.msra.mxu0 %v1736
    %2148 = vmatpush.bf16.msra.mxu0 %v1732
    %2149 = vmatmul.bf16.gmra.mxu0 %v1203
    %v2150 = vpop.f32.mrf.mxu0
    %v2151 = vadd.f32 %v1340, %v2150
    %v2152 = vpop.f32.mrf.mxu0
    %2153 = vdwg.mxu0
    %2154 = vmatpush.bf16.msra.mxu0 %v1792
    %2155 = vmatpush.bf16.msra.mxu0 %v1788
    %2156 = vmatpush.bf16.msra.mxu0 %v1784
    %2157 = vmatpush.bf16.msra.mxu0 %v1780
    %2158 = vmatpush.bf16.msra.mxu0 %v1776
    %2159 = vmatpush.bf16.msra.mxu0 %v1772
    %2160 = vmatpush.bf16.msra.mxu0 %v1768
    %2161 = vmatpush.bf16.msra.mxu0 %v1764
    %2162 = vmatmul.bf16.gmra.mxu0 %v1204
    %v2163 = vpop.f32.mrf.mxu0
    %v2164 = vadd.f32 %v2151, %v2163
    %v2165 = vpop.f32.mrf.mxu0
    %2166 = vdwg.mxu0
    %2167 = vmatpush.bf16.msra.mxu0 %v1824
    %2168 = vmatpush.bf16.msra.mxu0 %v1820
    %2169 = vmatpush.bf16.msra.mxu0 %v1816
    %2170 = vmatpush.bf16.msra.mxu0 %v1812
    %2171 = vmatpush.bf16.msra.mxu0 %v1808
    %2172 = vmatpush.bf16.msra.mxu0 %v1804
    %2173 = vmatpush.bf16.msra.mxu0 %v1800
    %2174 = vmatpush.bf16.msra.mxu0 %v1796
    %2175 = vmatmul.bf16.gmra.mxu0 %v1205
    %v2176 = vpop.f32.mrf.mxu0
    %v2177 = vadd.f32 %v2164, %v2176
    %v2178 = vpop.f32.mrf.mxu0
    %2179 = vdwg.mxu0
    %2180 = vmatpush.bf16.msra.mxu0 %v1856
    %2181 = vmatpush.bf16.msra.mxu0 %v1852
    %2182 = vmatpush.bf16.msra.mxu0 %v1848
    %2183 = vmatpush.bf16.msra.mxu0 %v1844
    %2184 = vmatpush.bf16.msra.mxu0 %v1840
    %2185 = vmatpush.bf16.msra.mxu0 %v1836
    %2186 = vmatpush.bf16.msra.mxu0 %v1832
    %2187 = vmatpush.bf16.msra.mxu0 %v1828
    %2188 = vmatmul.bf16.gmra.mxu0 %v1206
    %v2189 = vpop.f32.mrf.mxu0
    %v2190 = vadd.f32 %v2177, %v2189
    %v2191 = vpop.f32.mrf.mxu0
    %2192 = vdwg.mxu0
    %vm2193 = vcmask 1041408
    %v2194 = vsel %vm2193, %v2034, 0.0
    %v2195 = vsel %vm2193, %v2086, 0.0
    %v2196 = vadd.f32 %v2194, %v2195
    %v2197 = vsel %vm2193, %v2138, 0.0
    %v2198 = vadd.f32 %v2196, %v2197
    %v2199 = vsel %vm2193, %v2190, 0.0
    %v2200 = vadd.f32 %v2198, %v2199
    %2201 = vadd.xlane.f32.xlu0 %v2200
    %v2202 = vpop.xlane.xlu0 %2201
    %v2203 = vrcp.pop 512.0
    %v2204 = vmul.f32 512.0, %v2203
    %v2205 = vsub.f32 1.0, %v2204
    %v2206 = vmul.f32 %v2203, %v2205
    %v2207 = vadd.f32 %v2203, %v2206
    %vm2208 = vweird.f32 %v2203
    %v2209 = vsel %vm2208, %v2203, %v2207
    %v2210 = vmul.f32 %v2202, %v2209
    %v2211 = vsub.f32 %v2034, %v2210
    %v2212 = vsub.f32 %v2086, %v2210
    %v2213 = vsub.f32 %v2138, %v2210
    %v2214 = vsub.f32 %v2190, %v2210
    %v2215 = vmul.f32 %v2211, %v2211
    %v2216 = vmul.f32 %v2212, %v2212
    %v2217 = vmul.f32 %v2213, %v2213
    %v2218 = vmul.f32 %v2214, %v2214
    %v2219 = vsel %vm2193, %v2215, 0.0
    %v2220 = vsel %vm2193, %v2216, 0.0
    %v2221 = vadd.f32 %v2219, %v2220
    %v2222 = vsel %vm2193, %v2217, 0.0
    %v2223 = vadd.f32 %v2221, %v2222
    %v2224 = vsel %vm2193, %v2218, 0.0
    %v2225 = vadd.f32 %v2223, %v2224
    %2226 = vadd.xlane.f32.xlu0 %v2225
    %v2227 = vpop.xlane.xlu0 %2226
    %v2228 = vmul.f32 %v2227, %v2209
    %v2229 = vadd.f32 %v2228, 1e-05
    %v2230 = vrsqrt.pop %v2229
    %v2231 = vmul.f32 %v2230, %v2229
    %v2232 = vmul.f32 %v2231, %v2230
    %v2233 = vmul.f32 0.5, %v2232
    %v2234 = vsub.f32 1.5, %v2233
    %v2235 = vmul.f32 %v2230, %v2234
    %vm2236 = vweird.f32 %v2229
    %vm2237 = vweird.f32 %v2230
    %vm2238 = vmor %vm2236, %vm2237
    %v2239 = vsel %vm2238, %v2230, %v2235
    %v2240 = vmul.f32 %v2211, %v2239
    %v2241 = vmul.f32 %v2212, %v2239
    %v2242 = vmul.f32 %v2213, %v2239
    %v2243 = vmul.f32 %v2214, %v2239
    %v2244 = vld [vmem:[%s5] sm:$0xf]
    %v2246 = vperm.slane %v2244, 0
    %v2247 = vperm.slane %v2244, 1
    %v2248 = vperm.slane %v2244, 2
    %v2249 = vperm.slane %v2244, 3
    %v2254 = vmul.f32 %v2240, %v2246
    %v2255 = vmul.f32 %v2241, %v2247
    %v2256 = vmul.f32 %v2242, %v2248
    %v2257 = vmul.f32 %v2243, %v2249
    %v2258 = vld [vmem:[#allocation11] sm:$0xf]
    %v2260 = vperm.slane %v2258, 0
    %v2261 = vperm.slane %v2258, 1
    %v2262 = vperm.slane %v2258, 2
    %v2263 = vperm.slane %v2258, 3
    %v2268 = vadd.f32 %v2254, %v2260
    %v2269 = vadd.f32 %v2255, %v2261
    %v2270 = vadd.f32 %v2256, %v2262
    %v2271 = vadd.f32 %v2257, %v2263
    %vm2272 = vcmp.ge.f32.partialorder %v2268, 0.0
    %vm2273 = vcmp.ge.f32.partialorder %v2269, 0.0
    %vm2274 = vcmp.ge.f32.partialorder %v2270, 0.0
    %vm2275 = vcmp.ge.f32.partialorder %v2271, 0.0
    %v2276 = vmul.f32 %v2268, 0.01
    %v2277 = vmul.f32 %v2269, 0.01
    %v2278 = vmul.f32 %v2270, 0.01
    %v2279 = vmul.f32 %v2271, 0.01
    %v2280 = vsel %vm2272, %v2268, %v2276
    %v2281 = vsel %vm2273, %v2269, %v2277
    %v2282 = vsel %vm2274, %v2270, %v2278
    %v2283 = vsel %vm2275, %v2271, %v2279
    %v2284 = vld [vmem:[#allocation13] sm:$0xff]
    %v2285 = vld [vmem:[#allocation13 + $0x8] sm:$0xff]
    %v2286 = vld [vmem:[#allocation13 + $0x10] sm:$0xff]
    %v2287 = vld [vmem:[#allocation13 + $0x18] sm:$0xff]
    %v2288 = vld [vmem:[#allocation13 + $0x20] sm:$0xff]
    %v2289 = vld [vmem:[#allocation13 + $0x28] sm:$0xff]
    %v2290 = vld [vmem:[#allocation13 + $0x30] sm:$0xff]
    %v2291 = vld [vmem:[#allocation13 + $0x38] sm:$0xff]
    %v2292 = vld [vmem:[#allocation13 + $0x40] sm:$0xff]
    %v2293 = vld [vmem:[#allocation13 + $0x48] sm:$0xff]
    %v2294 = vld [vmem:[#allocation13 + $0x50] sm:$0xff]
    %v2295 = vld [vmem:[#allocation13 + $0x58] sm:$0xff]
    %v2296 = vld [vmem:[#allocation13 + $0x60] sm:$0xff]
    %v2297 = vld [vmem:[#allocation13 + $0x68] sm:$0xff]
    %v2298 = vld [vmem:[#allocation13 + $0x70] sm:$0xff]
    %v2299 = vld [vmem:[#allocation13 + $0x78] sm:$0xff]
    %v2300 = vld [vmem:[#allocation13 + $0x80] sm:$0xff]
    %v2301 = vld [vmem:[#allocation13 + $0x88] sm:$0xff]
    %v2302 = vld [vmem:[#allocation13 + $0x90] sm:$0xff]
    %v2303 = vld [vmem:[#allocation13 + $0x98] sm:$0xff]
    %v2304 = vld [vmem:[#allocation13 + $0xa0] sm:$0xff]
    %v2305 = vld [vmem:[#allocation13 + $0xa8] sm:$0xff]
    %v2306 = vld [vmem:[#allocation13 + $0xb0] sm:$0xff]
    %v2307 = vld [vmem:[#allocation13 + $0xb8] sm:$0xff]
    %v2308 = vld [vmem:[#allocation13 + $0xc0] sm:$0xff]
    %v2309 = vld [vmem:[#allocation13 + $0xc8] sm:$0xff]
    %v2310 = vld [vmem:[#allocation13 + $0xd0] sm:$0xff]
    %v2311 = vld [vmem:[#allocation13 + $0xd8] sm:$0xff]
    %v2312 = vld [vmem:[#allocation13 + $0xe0] sm:$0xff]
    %v2313 = vld [vmem:[#allocation13 + $0xe8] sm:$0xff]
    %v2314 = vld [vmem:[#allocation13 + $0xf0] sm:$0xff]
    %v2315 = vld [vmem:[#allocation13 + $0xf8] sm:$0xff]
    %v2316 = vld [vmem:[#allocation13 + $0x100] sm:$0xff]
    %v2317 = vld [vmem:[#allocation13 + $0x108] sm:$0xff]
    %v2318 = vld [vmem:[#allocation13 + $0x110] sm:$0xff]
    %v2319 = vld [vmem:[#allocation13 + $0x118] sm:$0xff]
    %v2320 = vld [vmem:[#allocation13 + $0x120] sm:$0xff]
    %v2321 = vld [vmem:[#allocation13 + $0x128] sm:$0xff]
    %v2322 = vld [vmem:[#allocation13 + $0x130] sm:$0xff]
    %v2323 = vld [vmem:[#allocation13 + $0x138] sm:$0xff]
    %v2324 = vld [vmem:[#allocation13 + $0x140] sm:$0xff]
    %v2325 = vld [vmem:[#allocation13 + $0x148] sm:$0xff]
    %v2326 = vld [vmem:[#allocation13 + $0x150] sm:$0xff]
    %v2327 = vld [vmem:[#allocation13 + $0x158] sm:$0xff]
    %v2328 = vld [vmem:[#allocation13 + $0x160] sm:$0xff]
    %v2329 = vld [vmem:[#allocation13 + $0x168] sm:$0xff]
    %v2330 = vld [vmem:[#allocation13 + $0x170] sm:$0xff]
    %v2331 = vld [vmem:[#allocation13 + $0x178] sm:$0xff]
    %v2332 = vld [vmem:[#allocation13 + $0x180] sm:$0xff]
    %v2333 = vld [vmem:[#allocation13 + $0x188] sm:$0xff]
    %v2334 = vld [vmem:[#allocation13 + $0x190] sm:$0xff]
    %v2335 = vld [vmem:[#allocation13 + $0x198] sm:$0xff]
    %v2336 = vld [vmem:[#allocation13 + $0x1a0] sm:$0xff]
    %v2337 = vld [vmem:[#allocation13 + $0x1a8] sm:$0xff]
    %v2338 = vld [vmem:[#allocation13 + $0x1b0] sm:$0xff]
    %v2339 = vld [vmem:[#allocation13 + $0x1b8] sm:$0xff]
    %v2340 = vld [vmem:[#allocation13 + $0x1c0] sm:$0xff]
    %v2341 = vld [vmem:[#allocation13 + $0x1c8] sm:$0xff]
    %v2342 = vld [vmem:[#allocation13 + $0x1d0] sm:$0xff]
    %v2343 = vld [vmem:[#allocation13 + $0x1d8] sm:$0xff]
    %v2344 = vld [vmem:[#allocation13 + $0x1e0] sm:$0xff]
    %v2345 = vld [vmem:[#allocation13 + $0x1e8] sm:$0xff]
    %v2346 = vld [vmem:[#allocation13 + $0x1f0] sm:$0xff]
    %v2347 = vld [vmem:[#allocation13 + $0x1f8] sm:$0xff]
    %v2348 = vld [vmem:[#allocation13 + $0x200] sm:$0xff]
    %v2349 = vld [vmem:[#allocation13 + $0x208] sm:$0xff]
    %v2350 = vld [vmem:[#allocation13 + $0x210] sm:$0xff]
    %v2351 = vld [vmem:[#allocation13 + $0x218] sm:$0xff]
    %v2352 = vld [vmem:[#allocation13 + $0x220] sm:$0xff]
    %v2353 = vld [vmem:[#allocation13 + $0x228] sm:$0xff]
    %v2354 = vld [vmem:[#allocation13 + $0x230] sm:$0xff]
    %v2355 = vld [vmem:[#allocation13 + $0x238] sm:$0xff]
    %v2356 = vld [vmem:[#allocation13 + $0x240] sm:$0xff]
    %v2357 = vld [vmem:[#allocation13 + $0x248] sm:$0xff]
    %v2358 = vld [vmem:[#allocation13 + $0x250] sm:$0xff]
    %v2359 = vld [vmem:[#allocation13 + $0x258] sm:$0xff]
    %v2360 = vld [vmem:[#allocation13 + $0x260] sm:$0xff]
    %v2361 = vld [vmem:[#allocation13 + $0x268] sm:$0xff]
    %v2362 = vld [vmem:[#allocation13 + $0x270] sm:$0xff]
    %v2363 = vld [vmem:[#allocation13 + $0x278] sm:$0xff]
    %v2364 = vld [vmem:[#allocation13 + $0x280] sm:$0xff]
    %v2365 = vld [vmem:[#allocation13 + $0x288] sm:$0xff]
    %v2366 = vld [vmem:[#allocation13 + $0x290] sm:$0xff]
    %v2367 = vld [vmem:[#allocation13 + $0x298] sm:$0xff]
    %v2368 = vld [vmem:[#allocation13 + $0x2a0] sm:$0xff]
    %v2369 = vld [vmem:[#allocation13 + $0x2a8] sm:$0xff]
    %v2370 = vld [vmem:[#allocation13 + $0x2b0] sm:$0xff]
    %v2371 = vld [vmem:[#allocation13 + $0x2b8] sm:$0xff]
    %v2372 = vld [vmem:[#allocation13 + $0x2c0] sm:$0xff]
    %v2373 = vld [vmem:[#allocation13 + $0x2c8] sm:$0xff]
    %v2374 = vld [vmem:[#allocation13 + $0x2d0] sm:$0xff]
    %v2375 = vld [vmem:[#allocation13 + $0x2d8] sm:$0xff]
    %v2376 = vld [vmem:[#allocation13 + $0x2e0] sm:$0xff]
    %v2377 = vld [vmem:[#allocation13 + $0x2e8] sm:$0xff]
    %v2378 = vld [vmem:[#allocation13 + $0x2f0] sm:$0xff]
    %v2379 = vld [vmem:[#allocation13 + $0x2f8] sm:$0xff]
    %v2380 = vld [vmem:[#allocation13 + $0x300] sm:$0xff]
    %v2381 = vld [vmem:[#allocation13 + $0x308] sm:$0xff]
    %v2382 = vld [vmem:[#allocation13 + $0x310] sm:$0xff]
    %v2383 = vld [vmem:[#allocation13 + $0x318] sm:$0xff]
    %v2384 = vld [vmem:[#allocation13 + $0x320] sm:$0xff]
    %v2385 = vld [vmem:[#allocation13 + $0x328] sm:$0xff]
    %v2386 = vld [vmem:[#allocation13 + $0x330] sm:$0xff]
    %v2387 = vld [vmem:[#allocation13 + $0x338] sm:$0xff]
    %v2388 = vld [vmem:[#allocation13 + $0x340] sm:$0xff]
    %v2389 = vld [vmem:[#allocation13 + $0x348] sm:$0xff]
    %v2390 = vld [vmem:[#allocation13 + $0x350] sm:$0xff]
    %v2391 = vld [vmem:[#allocation13 + $0x358] sm:$0xff]
    %v2392 = vld [vmem:[#allocation13 + $0x360] sm:$0xff]
    %v2393 = vld [vmem:[#allocation13 + $0x368] sm:$0xff]
    %v2394 = vld [vmem:[#allocation13 + $0x370] sm:$0xff]
    %v2395 = vld [vmem:[#allocation13 + $0x378] sm:$0xff]
    %v2396 = vld [vmem:[#allocation13 + $0x380] sm:$0xff]
    %v2397 = vld [vmem:[#allocation13 + $0x388] sm:$0xff]
    %v2398 = vld [vmem:[#allocation13 + $0x390] sm:$0xff]
    %v2399 = vld [vmem:[#allocation13 + $0x398] sm:$0xff]
    %v2400 = vld [vmem:[#allocation13 + $0x3a0] sm:$0xff]
    %v2401 = vld [vmem:[#allocation13 + $0x3a8] sm:$0xff]
    %v2402 = vld [vmem:[#allocation13 + $0x3b0] sm:$0xff]
    %v2403 = vld [vmem:[#allocation13 + $0x3b8] sm:$0xff]
    %v2404 = vld [vmem:[#allocation13 + $0x3c0] sm:$0xff]
    %v2405 = vld [vmem:[#allocation13 + $0x3c8] sm:$0xff]
    %v2406 = vld [vmem:[#allocation13 + $0x3d0] sm:$0xff]
    %v2407 = vld [vmem:[#allocation13 + $0x3d8] sm:$0xff]
    %v2408 = vld [vmem:[#allocation13 + $0x3e0] sm:$0xff]
    %v2409 = vld [vmem:[#allocation13 + $0x3e8] sm:$0xff]
    %v2410 = vld [vmem:[#allocation13 + $0x3f0] sm:$0xff]
    %v2411 = vld [vmem:[#allocation13 + $0x3f8] sm:$0xff]
    %v2412 = vld [vmem:[#allocation14] sm:$0xf]
    %v2414 = vperm.slane %v2412, 0
    %v2415 = vperm.slane %v2412, 1
    %v2416 = vperm.slane %v2412, 2
    %v2417 = vperm.slane %v2412, 3
    %v2550 = vunpack.c.l.b16 %v2284
    %v2551 = vunpack.c.h.b16 %v2284
    %v2552 = vunpack.c.l.b16 %v2285
    %v2553 = vunpack.c.h.b16 %v2285
    %v2554 = vunpack.c.l.b16 %v2286
    %v2555 = vunpack.c.h.b16 %v2286
    %v2556 = vunpack.c.l.b16 %v2287
    %v2557 = vunpack.c.h.b16 %v2287
    %v2558 = vunpack.c.l.b16 %v2288
    %v2559 = vunpack.c.h.b16 %v2288
    %v2560 = vunpack.c.l.b16 %v2289
    %v2561 = vunpack.c.h.b16 %v2289
    %v2562 = vunpack.c.l.b16 %v2290
    %v2563 = vunpack.c.h.b16 %v2290
    %v2564 = vunpack.c.l.b16 %v2291
    %v2565 = vunpack.c.h.b16 %v2291
    %v2566 = vunpack.c.l.b16 %v2292
    %v2567 = vunpack.c.h.b16 %v2292
    %v2568 = vunpack.c.l.b16 %v2293
    %v2569 = vunpack.c.h.b16 %v2293
    %v2570 = vunpack.c.l.b16 %v2294
    %v2571 = vunpack.c.h.b16 %v2294
    %v2572 = vunpack.c.l.b16 %v2295
    %v2573 = vunpack.c.h.b16 %v2295
    %v2574 = vunpack.c.l.b16 %v2296
    %v2575 = vunpack.c.h.b16 %v2296
    %v2576 = vunpack.c.l.b16 %v2297
    %v2577 = vunpack.c.h.b16 %v2297
    %v2578 = vunpack.c.l.b16 %v2298
    %v2579 = vunpack.c.h.b16 %v2298
    %v2580 = vunpack.c.l.b16 %v2299
    %v2581 = vunpack.c.h.b16 %v2299
    %v2582 = vunpack.c.l.b16 %v2300
    %v2583 = vunpack.c.h.b16 %v2300
    %v2584 = vunpack.c.l.b16 %v2301
    %v2585 = vunpack.c.h.b16 %v2301
    %v2586 = vunpack.c.l.b16 %v2302
    %v2587 = vunpack.c.h.b16 %v2302
    %v2588 = vunpack.c.l.b16 %v2303
    %v2589 = vunpack.c.h.b16 %v2303
    %v2590 = vunpack.c.l.b16 %v2304
    %v2591 = vunpack.c.h.b16 %v2304
    %v2592 = vunpack.c.l.b16 %v2305
    %v2593 = vunpack.c.h.b16 %v2305
    %v2594 = vunpack.c.l.b16 %v2306
    %v2595 = vunpack.c.h.b16 %v2306
    %v2596 = vunpack.c.l.b16 %v2307
    %v2597 = vunpack.c.h.b16 %v2307
    %v2598 = vunpack.c.l.b16 %v2308
    %v2599 = vunpack.c.h.b16 %v2308
    %v2600 = vunpack.c.l.b16 %v2309
    %v2601 = vunpack.c.h.b16 %v2309
    %v2602 = vunpack.c.l.b16 %v2310
    %v2603 = vunpack.c.h.b16 %v2310
    %v2604 = vunpack.c.l.b16 %v2311
    %v2605 = vunpack.c.h.b16 %v2311
    %v2606 = vunpack.c.l.b16 %v2312
    %v2607 = vunpack.c.h.b16 %v2312
    %v2608 = vunpack.c.l.b16 %v2313
    %v2609 = vunpack.c.h.b16 %v2313
    %v2610 = vunpack.c.l.b16 %v2314
    %v2611 = vunpack.c.h.b16 %v2314
    %v2612 = vunpack.c.l.b16 %v2315
    %v2613 = vunpack.c.h.b16 %v2315
    %v2614 = vunpack.c.l.b16 %v2316
    %v2615 = vunpack.c.h.b16 %v2316
    %v2616 = vunpack.c.l.b16 %v2317
    %v2617 = vunpack.c.h.b16 %v2317
    %v2618 = vunpack.c.l.b16 %v2318
    %v2619 = vunpack.c.h.b16 %v2318
    %v2620 = vunpack.c.l.b16 %v2319
    %v2621 = vunpack.c.h.b16 %v2319
    %v2622 = vunpack.c.l.b16 %v2320
    %v2623 = vunpack.c.h.b16 %v2320
    %v2624 = vunpack.c.l.b16 %v2321
    %v2625 = vunpack.c.h.b16 %v2321
    %v2626 = vunpack.c.l.b16 %v2322
    %v2627 = vunpack.c.h.b16 %v2322
    %v2628 = vunpack.c.l.b16 %v2323
    %v2629 = vunpack.c.h.b16 %v2323
    %v2630 = vunpack.c.l.b16 %v2324
    %v2631 = vunpack.c.h.b16 %v2324
    %v2632 = vunpack.c.l.b16 %v2325
    %v2633 = vunpack.c.h.b16 %v2325
    %v2634 = vunpack.c.l.b16 %v2326
    %v2635 = vunpack.c.h.b16 %v2326
    %v2636 = vunpack.c.l.b16 %v2327
    %v2637 = vunpack.c.h.b16 %v2327
    %v2638 = vunpack.c.l.b16 %v2328
    %v2639 = vunpack.c.h.b16 %v2328
    %v2640 = vunpack.c.l.b16 %v2329
    %v2641 = vunpack.c.h.b16 %v2329
    %v2642 = vunpack.c.l.b16 %v2330
    %v2643 = vunpack.c.h.b16 %v2330
    %v2644 = vunpack.c.l.b16 %v2331
    %v2645 = vunpack.c.h.b16 %v2331
    %v2646 = vunpack.c.l.b16 %v2332
    %v2647 = vunpack.c.h.b16 %v2332
    %v2648 = vunpack.c.l.b16 %v2333
    %v2649 = vunpack.c.h.b16 %v2333
    %v2650 = vunpack.c.l.b16 %v2334
    %v2651 = vunpack.c.h.b16 %v2334
    %v2652 = vunpack.c.l.b16 %v2335
    %v2653 = vunpack.c.h.b16 %v2335
    %v2654 = vunpack.c.l.b16 %v2336
    %v2655 = vunpack.c.h.b16 %v2336
    %v2656 = vunpack.c.l.b16 %v2337
    %v2657 = vunpack.c.h.b16 %v2337
    %v2658 = vunpack.c.l.b16 %v2338
    %v2659 = vunpack.c.h.b16 %v2338
    %v2660 = vunpack.c.l.b16 %v2339
    %v2661 = vunpack.c.h.b16 %v2339
    %v2662 = vunpack.c.l.b16 %v2340
    %v2663 = vunpack.c.h.b16 %v2340
    %v2664 = vunpack.c.l.b16 %v2341
    %v2665 = vunpack.c.h.b16 %v2341
    %v2666 = vunpack.c.l.b16 %v2342
    %v2667 = vunpack.c.h.b16 %v2342
    %v2668 = vunpack.c.l.b16 %v2343
    %v2669 = vunpack.c.h.b16 %v2343
    %v2670 = vunpack.c.l.b16 %v2344
    %v2671 = vunpack.c.h.b16 %v2344
    %v2672 = vunpack.c.l.b16 %v2345
    %v2673 = vunpack.c.h.b16 %v2345
    %v2674 = vunpack.c.l.b16 %v2346
    %v2675 = vunpack.c.h.b16 %v2346
    %v2676 = vunpack.c.l.b16 %v2347
    %v2677 = vunpack.c.h.b16 %v2347
    %v2678 = vunpack.c.l.b16 %v2348
    %v2679 = vunpack.c.h.b16 %v2348
    %v2680 = vunpack.c.l.b16 %v2349
    %v2681 = vunpack.c.h.b16 %v2349
    %v2682 = vunpack.c.l.b16 %v2350
    %v2683 = vunpack.c.h.b16 %v2350
    %v2684 = vunpack.c.l.b16 %v2351
    %v2685 = vunpack.c.h.b16 %v2351
    %v2686 = vunpack.c.l.b16 %v2352
    %v2687 = vunpack.c.h.b16 %v2352
    %v2688 = vunpack.c.l.b16 %v2353
    %v2689 = vunpack.c.h.b16 %v2353
    %v2690 = vunpack.c.l.b16 %v2354
    %v2691 = vunpack.c.h.b16 %v2354
    %v2692 = vunpack.c.l.b16 %v2355
    %v2693 = vunpack.c.h.b16 %v2355
    %v2694 = vunpack.c.l.b16 %v2356
    %v2695 = vunpack.c.h.b16 %v2356
    %v2696 = vunpack.c.l.b16 %v2357
    %v2697 = vunpack.c.h.b16 %v2357
    %v2698 = vunpack.c.l.b16 %v2358
    %v2699 = vunpack.c.h.b16 %v2358
    %v2700 = vunpack.c.l.b16 %v2359
    %v2701 = vunpack.c.h.b16 %v2359
    %v2702 = vunpack.c.l.b16 %v2360
    %v2703 = vunpack.c.h.b16 %v2360
    %v2704 = vunpack.c.l.b16 %v2361
    %v2705 = vunpack.c.h.b16 %v2361
    %v2706 = vunpack.c.l.b16 %v2362
    %v2707 = vunpack.c.h.b16 %v2362
    %v2708 = vunpack.c.l.b16 %v2363
    %v2709 = vunpack.c.h.b16 %v2363
    %v2710 = vunpack.c.l.b16 %v2364
    %v2711 = vunpack.c.h.b16 %v2364
    %v2712 = vunpack.c.l.b16 %v2365
    %v2713 = vunpack.c.h.b16 %v2365
    %v2714 = vunpack.c.l.b16 %v2366
    %v2715 = vunpack.c.h.b16 %v2366
    %v2716 = vunpack.c.l.b16 %v2367
    %v2717 = vunpack.c.h.b16 %v2367
    %v2718 = vunpack.c.l.b16 %v2368
    %v2719 = vunpack.c.h.b16 %v2368
    %v2720 = vunpack.c.l.b16 %v2369
    %v2721 = vunpack.c.h.b16 %v2369
    %v2722 = vunpack.c.l.b16 %v2370
    %v2723 = vunpack.c.h.b16 %v2370
    %v2724 = vunpack.c.l.b16 %v2371
    %v2725 = vunpack.c.h.b16 %v2371
    %v2726 = vunpack.c.l.b16 %v2372
    %v2727 = vunpack.c.h.b16 %v2372
    %v2728 = vunpack.c.l.b16 %v2373
    %v2729 = vunpack.c.h.b16 %v2373
    %v2730 = vunpack.c.l.b16 %v2374
    %v2731 = vunpack.c.h.b16 %v2374
    %v2732 = vunpack.c.l.b16 %v2375
    %v2733 = vunpack.c.h.b16 %v2375
    %v2734 = vunpack.c.l.b16 %v2376
    %v2735 = vunpack.c.h.b16 %v2376
    %v2736 = vunpack.c.l.b16 %v2377
    %v2737 = vunpack.c.h.b16 %v2377
    %v2738 = vunpack.c.l.b16 %v2378
    %v2739 = vunpack.c.h.b16 %v2378
    %v2740 = vunpack.c.l.b16 %v2379
    %v2741 = vunpack.c.h.b16 %v2379
    %v2742 = vunpack.c.l.b16 %v2380
    %v2743 = vunpack.c.h.b16 %v2380
    %v2744 = vunpack.c.l.b16 %v2381
    %v2745 = vunpack.c.h.b16 %v2381
    %v2746 = vunpack.c.l.b16 %v2382
    %v2747 = vunpack.c.h.b16 %v2382
    %v2748 = vunpack.c.l.b16 %v2383
    %v2749 = vunpack.c.h.b16 %v2383
    %v2750 = vunpack.c.l.b16 %v2384
    %v2751 = vunpack.c.h.b16 %v2384
    %v2752 = vunpack.c.l.b16 %v2385
    %v2753 = vunpack.c.h.b16 %v2385
    %v2754 = vunpack.c.l.b16 %v2386
    %v2755 = vunpack.c.h.b16 %v2386
    %v2756 = vunpack.c.l.b16 %v2387
    %v2757 = vunpack.c.h.b16 %v2387
    %v2758 = vunpack.c.l.b16 %v2388
    %v2759 = vunpack.c.h.b16 %v2388
    %v2760 = vunpack.c.l.b16 %v2389
    %v2761 = vunpack.c.h.b16 %v2389
    %v2762 = vunpack.c.l.b16 %v2390
    %v2763 = vunpack.c.h.b16 %v2390
    %v2764 = vunpack.c.l.b16 %v2391
    %v2765 = vunpack.c.h.b16 %v2391
    %v2766 = vunpack.c.l.b16 %v2392
    %v2767 = vunpack.c.h.b16 %v2392
    %v2768 = vunpack.c.l.b16 %v2393
    %v2769 = vunpack.c.h.b16 %v2393
    %v2770 = vunpack.c.l.b16 %v2394
    %v2771 = vunpack.c.h.b16 %v2394
    %v2772 = vunpack.c.l.b16 %v2395
    %v2773 = vunpack.c.h.b16 %v2395
    %v2774 = vunpack.c.l.b16 %v2396
    %v2775 = vunpack.c.h.b16 %v2396
    %v2776 = vunpack.c.l.b16 %v2397
    %v2777 = vunpack.c.h.b16 %v2397
    %v2778 = vunpack.c.l.b16 %v2398
    %v2779 = vunpack.c.h.b16 %v2398
    %v2780 = vunpack.c.l.b16 %v2399
    %v2781 = vunpack.c.h.b16 %v2399
    %v2782 = vunpack.c.l.b16 %v2400
    %v2783 = vunpack.c.h.b16 %v2400
    %v2784 = vunpack.c.l.b16 %v2401
    %v2785 = vunpack.c.h.b16 %v2401
    %v2786 = vunpack.c.l.b16 %v2402
    %v2787 = vunpack.c.h.b16 %v2402
    %v2788 = vunpack.c.l.b16 %v2403
    %v2789 = vunpack.c.h.b16 %v2403
    %v2790 = vunpack.c.l.b16 %v2404
    %v2791 = vunpack.c.h.b16 %v2404
    %v2792 = vunpack.c.l.b16 %v2405
    %v2793 = vunpack.c.h.b16 %v2405
    %v2794 = vunpack.c.l.b16 %v2406
    %v2795 = vunpack.c.h.b16 %v2406
    %v2796 = vunpack.c.l.b16 %v2407
    %v2797 = vunpack.c.h.b16 %v2407
    %v2798 = vunpack.c.l.b16 %v2408
    %v2799 = vunpack.c.h.b16 %v2408
    %v2800 = vunpack.c.l.b16 %v2409
    %v2801 = vunpack.c.h.b16 %v2409
    %v2802 = vunpack.c.l.b16 %v2410
    %v2803 = vunpack.c.h.b16 %v2410
    %v2804 = vunpack.c.l.b16 %v2411
    %v2805 = vunpack.c.h.b16 %v2411
    %v2806 = vpack.c.b16 %v2554, %v2550
    %v2807 = vpack.c.b16 %v2555, %v2551
    %v2808 = vpack.c.b16 %v2556, %v2552
    %v2809 = vpack.c.b16 %v2557, %v2553
    %v2810 = vpack.c.b16 %v2562, %v2558
    %v2811 = vpack.c.b16 %v2563, %v2559
    %v2812 = vpack.c.b16 %v2564, %v2560
    %v2813 = vpack.c.b16 %v2565, %v2561
    %v2814 = vpack.c.b16 %v2570, %v2566
    %v2815 = vpack.c.b16 %v2571, %v2567
    %v2816 = vpack.c.b16 %v2572, %v2568
    %v2817 = vpack.c.b16 %v2573, %v2569
    %v2818 = vpack.c.b16 %v2578, %v2574
    %v2819 = vpack.c.b16 %v2579, %v2575
    %v2820 = vpack.c.b16 %v2580, %v2576
    %v2821 = vpack.c.b16 %v2581, %v2577
    %v2822 = vpack.c.b16 %v2586, %v2582
    %v2823 = vpack.c.b16 %v2587, %v2583
    %v2824 = vpack.c.b16 %v2588, %v2584
    %v2825 = vpack.c.b16 %v2589, %v2585
    %v2826 = vpack.c.b16 %v2594, %v2590
    %v2827 = vpack.c.b16 %v2595, %v2591
    %v2828 = vpack.c.b16 %v2596, %v2592
    %v2829 = vpack.c.b16 %v2597, %v2593
    %v2830 = vpack.c.b16 %v2602, %v2598
    %v2831 = vpack.c.b16 %v2603, %v2599
    %v2832 = vpack.c.b16 %v2604, %v2600
    %v2833 = vpack.c.b16 %v2605, %v2601
    %v2834 = vpack.c.b16 %v2610, %v2606
    %v2835 = vpack.c.b16 %v2611, %v2607
    %v2836 = vpack.c.b16 %v2612, %v2608
    %v2837 = vpack.c.b16 %v2613, %v2609
    %v2838 = vpack.c.b16 %v2618, %v2614
    %v2839 = vpack.c.b16 %v2619, %v2615
    %v2840 = vpack.c.b16 %v2620, %v2616
    %v2841 = vpack.c.b16 %v2621, %v2617
    %v2842 = vpack.c.b16 %v2626, %v2622
    %v2843 = vpack.c.b16 %v2627, %v2623
    %v2844 = vpack.c.b16 %v2628, %v2624
    %v2845 = vpack.c.b16 %v2629, %v2625
    %v2846 = vpack.c.b16 %v2634, %v2630
    %v2847 = vpack.c.b16 %v2635, %v2631
    %v2848 = vpack.c.b16 %v2636, %v2632
    %v2849 = vpack.c.b16 %v2637, %v2633
    %v2850 = vpack.c.b16 %v2642, %v2638
    %v2851 = vpack.c.b16 %v2643, %v2639
    %v2852 = vpack.c.b16 %v2644, %v2640
    %v2853 = vpack.c.b16 %v2645, %v2641
    %v2854 = vpack.c.b16 %v2650, %v2646
    %v2855 = vpack.c.b16 %v2651, %v2647
    %v2856 = vpack.c.b16 %v2652, %v2648
    %v2857 = vpack.c.b16 %v2653, %v2649
    %v2858 = vpack.c.b16 %v2658, %v2654
    %v2859 = vpack.c.b16 %v2659, %v2655
    %v2860 = vpack.c.b16 %v2660, %v2656
    %v2861 = vpack.c.b16 %v2661, %v2657
    %v2862 = vpack.c.b16 %v2666, %v2662
    %v2863 = vpack.c.b16 %v2667, %v2663
    %v2864 = vpack.c.b16 %v2668, %v2664
    %v2865 = vpack.c.b16 %v2669, %v2665
    %v2866 = vpack.c.b16 %v2674, %v2670
    %v2867 = vpack.c.b16 %v2675, %v2671
    %v2868 = vpack.c.b16 %v2676, %v2672
    %v2869 = vpack.c.b16 %v2677, %v2673
    %v2870 = vpack.c.b16 %v2682, %v2678
    %v2871 = vpack.c.b16 %v2683, %v2679
    %v2872 = vpack.c.b16 %v2684, %v2680
    %v2873 = vpack.c.b16 %v2685, %v2681
    %v2874 = vpack.c.b16 %v2690, %v2686
    %v2875 = vpack.c.b16 %v2691, %v2687
    %v2876 = vpack.c.b16 %v2692, %v2688
    %v2877 = vpack.c.b16 %v2693, %v2689
    %v2878 = vpack.c.b16 %v2698, %v2694
    %v2879 = vpack.c.b16 %v2699, %v2695
    %v2880 = vpack.c.b16 %v2700, %v2696
    %v2881 = vpack.c.b16 %v2701, %v2697
    %v2882 = vpack.c.b16 %v2706, %v2702
    %v2883 = vpack.c.b16 %v2707, %v2703
    %v2884 = vpack.c.b16 %v2708, %v2704
    %v2885 = vpack.c.b16 %v2709, %v2705
    %v2886 = vpack.c.b16 %v2714, %v2710
    %v2887 = vpack.c.b16 %v2715, %v2711
    %v2888 = vpack.c.b16 %v2716, %v2712
    %v2889 = vpack.c.b16 %v2717, %v2713
    %v2890 = vpack.c.b16 %v2722, %v2718
    %v2891 = vpack.c.b16 %v2723, %v2719
    %v2892 = vpack.c.b16 %v2724, %v2720
    %v2893 = vpack.c.b16 %v2725, %v2721
    %v2894 = vpack.c.b16 %v2730, %v2726
    %v2895 = vpack.c.b16 %v2731, %v2727
    %v2896 = vpack.c.b16 %v2732, %v2728
    %v2897 = vpack.c.b16 %v2733, %v2729
    %v2898 = vpack.c.b16 %v2738, %v2734
    %v2899 = vpack.c.b16 %v2739, %v2735
    %v2900 = vpack.c.b16 %v2740, %v2736
    %v2901 = vpack.c.b16 %v2741, %v2737
    %v2902 = vpack.c.b16 %v2746, %v2742
    %v2903 = vpack.c.b16 %v2747, %v2743
    %v2904 = vpack.c.b16 %v2748, %v2744
    %v2905 = vpack.c.b16 %v2749, %v2745
    %v2906 = vpack.c.b16 %v2754, %v2750
    %v2907 = vpack.c.b16 %v2755, %v2751
    %v2908 = vpack.c.b16 %v2756, %v2752
    %v2909 = vpack.c.b16 %v2757, %v2753
    %v2910 = vpack.c.b16 %v2762, %v2758
    %v2911 = vpack.c.b16 %v2763, %v2759
    %v2912 = vpack.c.b16 %v2764, %v2760
    %v2913 = vpack.c.b16 %v2765, %v2761
    %v2914 = vpack.c.b16 %v2770, %v2766
    %v2915 = vpack.c.b16 %v2771, %v2767
    %v2916 = vpack.c.b16 %v2772, %v2768
    %v2917 = vpack.c.b16 %v2773, %v2769
    %v2918 = vpack.c.b16 %v2778, %v2774
    %v2919 = vpack.c.b16 %v2779, %v2775
    %v2920 = vpack.c.b16 %v2780, %v2776
    %v2921 = vpack.c.b16 %v2781, %v2777
    %v2922 = vpack.c.b16 %v2786, %v2782
    %v2923 = vpack.c.b16 %v2787, %v2783
    %v2924 = vpack.c.b16 %v2788, %v2784
    %v2925 = vpack.c.b16 %v2789, %v2785
    %v2926 = vpack.c.b16 %v2794, %v2790
    %v2927 = vpack.c.b16 %v2795, %v2791
    %v2928 = vpack.c.b16 %v2796, %v2792
    %v2929 = vpack.c.b16 %v2797, %v2793
    %v2930 = vpack.c.b16 %v2802, %v2798
    %v2931 = vpack.c.b16 %v2803, %v2799
    %v2932 = vpack.c.b16 %v2804, %v2800
    %v2933 = vpack.c.b16 %v2805, %v2801
    %3062 = vmatpush.bf16.msra.mxu0 %v2834
    %3063 = vmatpush.bf16.msra.mxu0 %v2830
    %3064 = vmatpush.bf16.msra.mxu0 %v2826
    %3065 = vmatpush.bf16.msra.mxu0 %v2822
    %3066 = vmatpush.bf16.msra.mxu0 %v2818
    %3067 = vmatpush.bf16.msra.mxu0 %v2814
    %3068 = vmatpush.bf16.msra.mxu0 %v2810
    %3069 = vmatpush.bf16.msra.mxu0 %v2806
    %3070 = vmatmul.bf16.gmra.mxu0 %v213
    %v3071 = vpop.f32.mrf.mxu0
    %v3072 = vadd.f32 %v2414, %v3071
    %v3073 = vpop.f32.mrf.mxu0
    %3074 = vdwg.mxu0
    %3075 = vmatpush.bf16.msra.mxu0 %v2866
    %3076 = vmatpush.bf16.msra.mxu0 %v2862
    %3077 = vmatpush.bf16.msra.mxu0 %v2858
    %3078 = vmatpush.bf16.msra.mxu0 %v2854
    %3079 = vmatpush.bf16.msra.mxu0 %v2850
    %3080 = vmatpush.bf16.msra.mxu0 %v2846
    %3081 = vmatpush.bf16.msra.mxu0 %v2842
    %3082 = vmatpush.bf16.msra.mxu0 %v2838
    %3083 = vmatmul.bf16.gmra.mxu0 %v214
    %v3084 = vpop.f32.mrf.mxu0
    %v3085 = vadd.f32 %v3072, %v3084
    %v3086 = vpop.f32.mrf.mxu0
    %3087 = vdwg.mxu0
    %3088 = vmatpush.bf16.msra.mxu0 %v2898
    %3089 = vmatpush.bf16.msra.mxu0 %v2894
    %3090 = vmatpush.bf16.msra.mxu0 %v2890
    %3091 = vmatpush.bf16.msra.mxu0 %v2886
    %3092 = vmatpush.bf16.msra.mxu0 %v2882
    %3093 = vmatpush.bf16.msra.mxu0 %v2878
    %3094 = vmatpush.bf16.msra.mxu0 %v2874
    %3095 = vmatpush.bf16.msra.mxu0 %v2870
    %3096 = vmatmul.bf16.gmra.mxu0 %v215
    %v3097 = vpop.f32.mrf.mxu0
    %v3098 = vadd.f32 %v3085, %v3097
    %v3099 = vpop.f32.mrf.mxu0
    %3100 = vdwg.mxu0
    %3101 = vmatpush.bf16.msra.mxu0 %v2930
    %3102 = vmatpush.bf16.msra.mxu0 %v2926
    %3103 = vmatpush.bf16.msra.mxu0 %v2922
    %3104 = vmatpush.bf16.msra.mxu0 %v2918
    %3105 = vmatpush.bf16.msra.mxu0 %v2914
    %3106 = vmatpush.bf16.msra.mxu0 %v2910
    %3107 = vmatpush.bf16.msra.mxu0 %v2906
    %3108 = vmatpush.bf16.msra.mxu0 %v2902
    %3109 = vmatmul.bf16.gmra.mxu0 %v216
    %v3110 = vpop.f32.mrf.mxu0
    %v3111 = vadd.f32 %v3098, %v3110
    %v3112 = vpop.f32.mrf.mxu0
    %3113 = vdwg.mxu0
    %3114 = vmatpush.bf16.msra.mxu0 %v2835
    %3115 = vmatpush.bf16.msra.mxu0 %v2831
    %3116 = vmatpush.bf16.msra.mxu0 %v2827
    %3117 = vmatpush.bf16.msra.mxu0 %v2823
    %3118 = vmatpush.bf16.msra.mxu0 %v2819
    %3119 = vmatpush.bf16.msra.mxu0 %v2815
    %3120 = vmatpush.bf16.msra.mxu0 %v2811
    %3121 = vmatpush.bf16.msra.mxu0 %v2807
    %3122 = vmatmul.bf16.gmra.mxu0 %v213
    %v3123 = vpop.f32.mrf.mxu0
    %v3124 = vadd.f32 %v2415, %v3123
    %v3125 = vpop.f32.mrf.mxu0
    %3126 = vdwg.mxu0
    %3127 = vmatpush.bf16.msra.mxu0 %v2867
    %3128 = vmatpush.bf16.msra.mxu0 %v2863
    %3129 = vmatpush.bf16.msra.mxu0 %v2859
    %3130 = vmatpush.bf16.msra.mxu0 %v2855
    %3131 = vmatpush.bf16.msra.mxu0 %v2851
    %3132 = vmatpush.bf16.msra.mxu0 %v2847
    %3133 = vmatpush.bf16.msra.mxu0 %v2843
    %3134 = vmatpush.bf16.msra.mxu0 %v2839
    %3135 = vmatmul.bf16.gmra.mxu0 %v214
    %v3136 = vpop.f32.mrf.mxu0
    %v3137 = vadd.f32 %v3124, %v3136
    %v3138 = vpop.f32.mrf.mxu0
    %3139 = vdwg.mxu0
    %3140 = vmatpush.bf16.msra.mxu0 %v2899
    %3141 = vmatpush.bf16.msra.mxu0 %v2895
    %3142 = vmatpush.bf16.msra.mxu0 %v2891
    %3143 = vmatpush.bf16.msra.mxu0 %v2887
    %3144 = vmatpush.bf16.msra.mxu0 %v2883
    %3145 = vmatpush.bf16.msra.mxu0 %v2879
    %3146 = vmatpush.bf16.msra.mxu0 %v2875
    %3147 = vmatpush.bf16.msra.mxu0 %v2871
    %3148 = vmatmul.bf16.gmra.mxu0 %v215
    %v3149 = vpop.f32.mrf.mxu0
    %v3150 = vadd.f32 %v3137, %v3149
    %v3151 = vpop.f32.mrf.mxu0
    %3152 = vdwg.mxu0
    %3153 = vmatpush.bf16.msra.mxu0 %v2931
    %3154 = vmatpush.bf16.msra.mxu0 %v2927
    %3155 = vmatpush.bf16.msra.mxu0 %v2923
    %3156 = vmatpush.bf16.msra.mxu0 %v2919
    %3157 = vmatpush.bf16.msra.mxu0 %v2915
    %3158 = vmatpush.bf16.msra.mxu0 %v2911
    %3159 = vmatpush.bf16.msra.mxu0 %v2907
    %3160 = vmatpush.bf16.msra.mxu0 %v2903
    %3161 = vmatmul.bf16.gmra.mxu0 %v216
    %v3162 = vpop.f32.mrf.mxu0
    %v3163 = vadd.f32 %v3150, %v3162
    %v3164 = vpop.f32.mrf.mxu0
    %3165 = vdwg.mxu0
    %3166 = vmatpush.bf16.msra.mxu0 %v2836
    %3167 = vmatpush.bf16.msra.mxu0 %v2832
    %3168 = vmatpush.bf16.msra.mxu0 %v2828
    %3169 = vmatpush.bf16.msra.mxu0 %v2824
    %3170 = vmatpush.bf16.msra.mxu0 %v2820
    %3171 = vmatpush.bf16.msra.mxu0 %v2816
    %3172 = vmatpush.bf16.msra.mxu0 %v2812
    %3173 = vmatpush.bf16.msra.mxu0 %v2808
    %3174 = vmatmul.bf16.gmra.mxu0 %v213
    %v3175 = vpop.f32.mrf.mxu0
    %v3176 = vadd.f32 %v2416, %v3175
    %v3177 = vpop.f32.mrf.mxu0
    %3178 = vdwg.mxu0
    %3179 = vmatpush.bf16.msra.mxu0 %v2868
    %3180 = vmatpush.bf16.msra.mxu0 %v2864
    %3181 = vmatpush.bf16.msra.mxu0 %v2860
    %3182 = vmatpush.bf16.msra.mxu0 %v2856
    %3183 = vmatpush.bf16.msra.mxu0 %v2852
    %3184 = vmatpush.bf16.msra.mxu0 %v2848
    %3185 = vmatpush.bf16.msra.mxu0 %v2844
    %3186 = vmatpush.bf16.msra.mxu0 %v2840
    %3187 = vmatmul.bf16.gmra.mxu0 %v214
    %v3188 = vpop.f32.mrf.mxu0
    %v3189 = vadd.f32 %v3176, %v3188
    %v3190 = vpop.f32.mrf.mxu0
    %3191 = vdwg.mxu0
    %3192 = vmatpush.bf16.msra.mxu0 %v2900
    %3193 = vmatpush.bf16.msra.mxu0 %v2896
    %3194 = vmatpush.bf16.msra.mxu0 %v2892
    %3195 = vmatpush.bf16.msra.mxu0 %v2888
    %3196 = vmatpush.bf16.msra.mxu0 %v2884
    %3197 = vmatpush.bf16.msra.mxu0 %v2880
    %3198 = vmatpush.bf16.msra.mxu0 %v2876
    %3199 = vmatpush.bf16.msra.mxu0 %v2872
    %3200 = vmatmul.bf16.gmra.mxu0 %v215
    %v3201 = vpop.f32.mrf.mxu0
    %v3202 = vadd.f32 %v3189, %v3201
    %v3203 = vpop.f32.mrf.mxu0
    %3204 = vdwg.mxu0
    %3205 = vmatpush.bf16.msra.mxu0 %v2932
    %3206 = vmatpush.bf16.msra.mxu0 %v2928
    %3207 = vmatpush.bf16.msra.mxu0 %v2924
    %3208 = vmatpush.bf16.msra.mxu0 %v2920
    %3209 = vmatpush.bf16.msra.mxu0 %v2916
    %3210 = vmatpush.bf16.msra.mxu0 %v2912
    %3211 = vmatpush.bf16.msra.mxu0 %v2908
    %3212 = vmatpush.bf16.msra.mxu0 %v2904
    %3213 = vmatmul.bf16.gmra.mxu0 %v216
    %v3214 = vpop.f32.mrf.mxu0
    %v3215 = vadd.f32 %v3202, %v3214
    %v3216 = vpop.f32.mrf.mxu0
    %3217 = vdwg.mxu0
    %3218 = vmatpush.bf16.msra.mxu0 %v2837
    %3219 = vmatpush.bf16.msra.mxu0 %v2833
    %3220 = vmatpush.bf16.msra.mxu0 %v2829
    %3221 = vmatpush.bf16.msra.mxu0 %v2825
    %3222 = vmatpush.bf16.msra.mxu0 %v2821
    %3223 = vmatpush.bf16.msra.mxu0 %v2817
    %3224 = vmatpush.bf16.msra.mxu0 %v2813
    %3225 = vmatpush.bf16.msra.mxu0 %v2809
    %3226 = vmatmul.bf16.gmra.mxu0 %v213
    %v3227 = vpop.f32.mrf.mxu0
    %v3228 = vadd.f32 %v2417, %v3227
    %v3229 = vpop.f32.mrf.mxu0
    %3230 = vdwg.mxu0
    %3231 = vmatpush.bf16.msra.mxu0 %v2869
    %3232 = vmatpush.bf16.msra.mxu0 %v2865
    %3233 = vmatpush.bf16.msra.mxu0 %v2861
    %3234 = vmatpush.bf16.msra.mxu0 %v2857
    %3235 = vmatpush.bf16.msra.mxu0 %v2853
    %3236 = vmatpush.bf16.msra.mxu0 %v2849
    %3237 = vmatpush.bf16.msra.mxu0 %v2845
    %3238 = vmatpush.bf16.msra.mxu0 %v2841
    %3239 = vmatmul.bf16.gmra.mxu0 %v214
    %v3240 = vpop.f32.mrf.mxu0
    %v3241 = vadd.f32 %v3228, %v3240
    %v3242 = vpop.f32.mrf.mxu0
    %3243 = vdwg.mxu0
    %3244 = vmatpush.bf16.msra.mxu0 %v2901
    %3245 = vmatpush.bf16.msra.mxu0 %v2897
    %3246 = vmatpush.bf16.msra.mxu0 %v2893
    %3247 = vmatpush.bf16.msra.mxu0 %v2889
    %3248 = vmatpush.bf16.msra.mxu0 %v2885
    %3249 = vmatpush.bf16.msra.mxu0 %v2881
    %3250 = vmatpush.bf16.msra.mxu0 %v2877
    %3251 = vmatpush.bf16.msra.mxu0 %v2873
    %3252 = vmatmul.bf16.gmra.mxu0 %v215
    %v3253 = vpop.f32.mrf.mxu0
    %v3254 = vadd.f32 %v3241, %v3253
    %v3255 = vpop.f32.mrf.mxu0
    %3256 = vdwg.mxu0
    %3257 = vmatpush.bf16.msra.mxu0 %v2933
    %3258 = vmatpush.bf16.msra.mxu0 %v2929
    %3259 = vmatpush.bf16.msra.mxu0 %v2925
    %3260 = vmatpush.bf16.msra.mxu0 %v2921
    %3261 = vmatpush.bf16.msra.mxu0 %v2917
    %3262 = vmatpush.bf16.msra.mxu0 %v2913
    %3263 = vmatpush.bf16.msra.mxu0 %v2909
    %3264 = vmatpush.bf16.msra.mxu0 %v2905
    %3265 = vmatmul.bf16.gmra.mxu0 %v216
    %v3266 = vpop.f32.mrf.mxu0
    %v3267 = vadd.f32 %v3254, %v3266
    %v3268 = vpop.f32.mrf.mxu0
    %3269 = vdwg.mxu0
    %v3270 = vpack.c.bf16 %v3111, %v3111
    %v3271 = vpack.c.bf16 %v3163, %v3163
    %v3272 = vpack.c.bf16 %v3215, %v3215
    %v3273 = vpack.c.bf16 %v3267, %v3267
    %v3274 = vld [vmem:[#allocation16] sm:$0xff]
    %v3275 = vld [vmem:[#allocation16 + $0x8] sm:$0xff]
    %v3276 = vld [vmem:[#allocation16 + $0x10] sm:$0xff]
    %v3277 = vld [vmem:[#allocation16 + $0x18] sm:$0xff]
    %v3278 = vld [vmem:[#allocation16 + $0x20] sm:$0xff]
    %v3279 = vld [vmem:[#allocation16 + $0x28] sm:$0xff]
    %v3280 = vld [vmem:[#allocation16 + $0x30] sm:$0xff]
    %v3281 = vld [vmem:[#allocation16 + $0x38] sm:$0xff]
    %v3282 = vld [vmem:[#allocation16 + $0x40] sm:$0xff]
    %v3283 = vld [vmem:[#allocation16 + $0x48] sm:$0xff]
    %v3284 = vld [vmem:[#allocation16 + $0x50] sm:$0xff]
    %v3285 = vld [vmem:[#allocation16 + $0x58] sm:$0xff]
    %v3286 = vld [vmem:[#allocation16 + $0x60] sm:$0xff]
    %v3287 = vld [vmem:[#allocation16 + $0x68] sm:$0xff]
    %v3288 = vld [vmem:[#allocation16 + $0x70] sm:$0xff]
    %v3289 = vld [vmem:[#allocation16 + $0x78] sm:$0xff]
    %v3290 = vld [vmem:[#allocation16 + $0x80] sm:$0xff]
    %v3291 = vld [vmem:[#allocation16 + $0x88] sm:$0xff]
    %v3292 = vld [vmem:[#allocation16 + $0x90] sm:$0xff]
    %v3293 = vld [vmem:[#allocation16 + $0x98] sm:$0xff]
    %v3294 = vld [vmem:[#allocation16 + $0xa0] sm:$0xff]
    %v3295 = vld [vmem:[#allocation16 + $0xa8] sm:$0xff]
    %v3296 = vld [vmem:[#allocation16 + $0xb0] sm:$0xff]
    %v3297 = vld [vmem:[#allocation16 + $0xb8] sm:$0xff]
    %v3298 = vld [vmem:[#allocation16 + $0xc0] sm:$0xff]
    %v3299 = vld [vmem:[#allocation16 + $0xc8] sm:$0xff]
    %v3300 = vld [vmem:[#allocation16 + $0xd0] sm:$0xff]
    %v3301 = vld [vmem:[#allocation16 + $0xd8] sm:$0xff]
    %v3302 = vld [vmem:[#allocation16 + $0xe0] sm:$0xff]
    %v3303 = vld [vmem:[#allocation16 + $0xe8] sm:$0xff]
    %v3304 = vld [vmem:[#allocation16 + $0xf0] sm:$0xff]
    %v3305 = vld [vmem:[#allocation16 + $0xf8] sm:$0xff]
    %v3306 = vld [vmem:[#allocation16 + $0x100] sm:$0xff]
    %v3307 = vld [vmem:[#allocation16 + $0x108] sm:$0xff]
    %v3308 = vld [vmem:[#allocation16 + $0x110] sm:$0xff]
    %v3309 = vld [vmem:[#allocation16 + $0x118] sm:$0xff]
    %v3310 = vld [vmem:[#allocation16 + $0x120] sm:$0xff]
    %v3311 = vld [vmem:[#allocation16 + $0x128] sm:$0xff]
    %v3312 = vld [vmem:[#allocation16 + $0x130] sm:$0xff]
    %v3313 = vld [vmem:[#allocation16 + $0x138] sm:$0xff]
    %v3314 = vld [vmem:[#allocation16 + $0x140] sm:$0xff]
    %v3315 = vld [vmem:[#allocation16 + $0x148] sm:$0xff]
    %v3316 = vld [vmem:[#allocation16 + $0x150] sm:$0xff]
    %v3317 = vld [vmem:[#allocation16 + $0x158] sm:$0xff]
    %v3318 = vld [vmem:[#allocation16 + $0x160] sm:$0xff]
    %v3319 = vld [vmem:[#allocation16 + $0x168] sm:$0xff]
    %v3320 = vld [vmem:[#allocation16 + $0x170] sm:$0xff]
    %v3321 = vld [vmem:[#allocation16 + $0x178] sm:$0xff]
    %v3322 = vld [vmem:[#allocation16 + $0x180] sm:$0xff]
    %v3323 = vld [vmem:[#allocation16 + $0x188] sm:$0xff]
    %v3324 = vld [vmem:[#allocation16 + $0x190] sm:$0xff]
    %v3325 = vld [vmem:[#allocation16 + $0x198] sm:$0xff]
    %v3326 = vld [vmem:[#allocation16 + $0x1a0] sm:$0xff]
    %v3327 = vld [vmem:[#allocation16 + $0x1a8] sm:$0xff]
    %v3328 = vld [vmem:[#allocation16 + $0x1b0] sm:$0xff]
    %v3329 = vld [vmem:[#allocation16 + $0x1b8] sm:$0xff]
    %v3330 = vld [vmem:[#allocation16 + $0x1c0] sm:$0xff]
    %v3331 = vld [vmem:[#allocation16 + $0x1c8] sm:$0xff]
    %v3332 = vld [vmem:[#allocation16 + $0x1d0] sm:$0xff]
    %v3333 = vld [vmem:[#allocation16 + $0x1d8] sm:$0xff]
    %v3334 = vld [vmem:[#allocation16 + $0x1e0] sm:$0xff]
    %v3335 = vld [vmem:[#allocation16 + $0x1e8] sm:$0xff]
    %v3336 = vld [vmem:[#allocation16 + $0x1f0] sm:$0xff]
    %v3337 = vld [vmem:[#allocation16 + $0x1f8] sm:$0xff]
    %v3338 = vld [vmem:[#allocation16 + $0x200] sm:$0xff]
    %v3339 = vld [vmem:[#allocation16 + $0x208] sm:$0xff]
    %v3340 = vld [vmem:[#allocation16 + $0x210] sm:$0xff]
    %v3341 = vld [vmem:[#allocation16 + $0x218] sm:$0xff]
    %v3342 = vld [vmem:[#allocation16 + $0x220] sm:$0xff]
    %v3343 = vld [vmem:[#allocation16 + $0x228] sm:$0xff]
    %v3344 = vld [vmem:[#allocation16 + $0x230] sm:$0xff]
    %v3345 = vld [vmem:[#allocation16 + $0x238] sm:$0xff]
    %v3346 = vld [vmem:[#allocation16 + $0x240] sm:$0xff]
    %v3347 = vld [vmem:[#allocation16 + $0x248] sm:$0xff]
    %v3348 = vld [vmem:[#allocation16 + $0x250] sm:$0xff]
    %v3349 = vld [vmem:[#allocation16 + $0x258] sm:$0xff]
    %v3350 = vld [vmem:[#allocation16 + $0x260] sm:$0xff]
    %v3351 = vld [vmem:[#allocation16 + $0x268] sm:$0xff]
    %v3352 = vld [vmem:[#allocation16 + $0x270] sm:$0xff]
    %v3353 = vld [vmem:[#allocation16 + $0x278] sm:$0xff]
    %v3354 = vld [vmem:[#allocation16 + $0x280] sm:$0xff]
    %v3355 = vld [vmem:[#allocation16 + $0x288] sm:$0xff]
    %v3356 = vld [vmem:[#allocation16 + $0x290] sm:$0xff]
    %v3357 = vld [vmem:[#allocation16 + $0x298] sm:$0xff]
    %v3358 = vld [vmem:[#allocation16 + $0x2a0] sm:$0xff]
    %v3359 = vld [vmem:[#allocation16 + $0x2a8] sm:$0xff]
    %v3360 = vld [vmem:[#allocation16 + $0x2b0] sm:$0xff]
    %v3361 = vld [vmem:[#allocation16 + $0x2b8] sm:$0xff]
    %v3362 = vld [vmem:[#allocation16 + $0x2c0] sm:$0xff]
    %v3363 = vld [vmem:[#allocation16 + $0x2c8] sm:$0xff]
    %v3364 = vld [vmem:[#allocation16 + $0x2d0] sm:$0xff]
    %v3365 = vld [vmem:[#allocation16 + $0x2d8] sm:$0xff]
    %v3366 = vld [vmem:[#allocation16 + $0x2e0] sm:$0xff]
    %v3367 = vld [vmem:[#allocation16 + $0x2e8] sm:$0xff]
    %v3368 = vld [vmem:[#allocation16 + $0x2f0] sm:$0xff]
    %v3369 = vld [vmem:[#allocation16 + $0x2f8] sm:$0xff]
    %v3370 = vld [vmem:[#allocation16 + $0x300] sm:$0xff]
    %v3371 = vld [vmem:[#allocation16 + $0x308] sm:$0xff]
    %v3372 = vld [vmem:[#allocation16 + $0x310] sm:$0xff]
    %v3373 = vld [vmem:[#allocation16 + $0x318] sm:$0xff]
    %v3374 = vld [vmem:[#allocation16 + $0x320] sm:$0xff]
    %v3375 = vld [vmem:[#allocation16 + $0x328] sm:$0xff]
    %v3376 = vld [vmem:[#allocation16 + $0x330] sm:$0xff]
    %v3377 = vld [vmem:[#allocation16 + $0x338] sm:$0xff]
    %v3378 = vld [vmem:[#allocation16 + $0x340] sm:$0xff]
    %v3379 = vld [vmem:[#allocation16 + $0x348] sm:$0xff]
    %v3380 = vld [vmem:[#allocation16 + $0x350] sm:$0xff]
    %v3381 = vld [vmem:[#allocation16 + $0x358] sm:$0xff]
    %v3382 = vld [vmem:[#allocation16 + $0x360] sm:$0xff]
    %v3383 = vld [vmem:[#allocation16 + $0x368] sm:$0xff]
    %v3384 = vld [vmem:[#allocation16 + $0x370] sm:$0xff]
    %v3385 = vld [vmem:[#allocation16 + $0x378] sm:$0xff]
    %v3386 = vld [vmem:[#allocation16 + $0x380] sm:$0xff]
    %v3387 = vld [vmem:[#allocation16 + $0x388] sm:$0xff]
    %v3388 = vld [vmem:[#allocation16 + $0x390] sm:$0xff]
    %v3389 = vld [vmem:[#allocation16 + $0x398] sm:$0xff]
    %v3390 = vld [vmem:[#allocation16 + $0x3a0] sm:$0xff]
    %v3391 = vld [vmem:[#allocation16 + $0x3a8] sm:$0xff]
    %v3392 = vld [vmem:[#allocation16 + $0x3b0] sm:$0xff]
    %v3393 = vld [vmem:[#allocation16 + $0x3b8] sm:$0xff]
    %v3394 = vld [vmem:[#allocation16 + $0x3c0] sm:$0xff]
    %v3395 = vld [vmem:[#allocation16 + $0x3c8] sm:$0xff]
    %v3396 = vld [vmem:[#allocation16 + $0x3d0] sm:$0xff]
    %v3397 = vld [vmem:[#allocation16 + $0x3d8] sm:$0xff]
    %v3398 = vld [vmem:[#allocation16 + $0x3e0] sm:$0xff]
    %v3399 = vld [vmem:[#allocation16 + $0x3e8] sm:$0xff]
    %v3400 = vld [vmem:[#allocation16 + $0x3f0] sm:$0xff]
    %v3401 = vld [vmem:[#allocation16 + $0x3f8] sm:$0xff]
    %v3402 = vld [vmem:[%s10] sm:$0xf]
    %v3404 = vperm.slane %v3402, 0
    %v3405 = vperm.slane %v3402, 1
    %v3406 = vperm.slane %v3402, 2
    %v3407 = vperm.slane %v3402, 3
    %v3540 = vunpack.c.l.b16 %v3274
    %v3541 = vunpack.c.h.b16 %v3274
    %v3542 = vunpack.c.l.b16 %v3275
    %v3543 = vunpack.c.h.b16 %v3275
    %v3544 = vunpack.c.l.b16 %v3276
    %v3545 = vunpack.c.h.b16 %v3276
    %v3546 = vunpack.c.l.b16 %v3277
    %v3547 = vunpack.c.h.b16 %v3277
    %v3548 = vunpack.c.l.b16 %v3278
    %v3549 = vunpack.c.h.b16 %v3278
    %v3550 = vunpack.c.l.b16 %v3279
    %v3551 = vunpack.c.h.b16 %v3279
    %v3552 = vunpack.c.l.b16 %v3280
    %v3553 = vunpack.c.h.b16 %v3280
    %v3554 = vunpack.c.l.b16 %v3281
    %v3555 = vunpack.c.h.b16 %v3281
    %v3556 = vunpack.c.l.b16 %v3282
    %v3557 = vunpack.c.h.b16 %v3282
    %v3558 = vunpack.c.l.b16 %v3283
    %v3559 = vunpack.c.h.b16 %v3283
    %v3560 = vunpack.c.l.b16 %v3284
    %v3561 = vunpack.c.h.b16 %v3284
    %v3562 = vunpack.c.l.b16 %v3285
    %v3563 = vunpack.c.h.b16 %v3285
    %v3564 = vunpack.c.l.b16 %v3286
    %v3565 = vunpack.c.h.b16 %v3286
    %v3566 = vunpack.c.l.b16 %v3287
    %v3567 = vunpack.c.h.b16 %v3287
    %v3568 = vunpack.c.l.b16 %v3288
    %v3569 = vunpack.c.h.b16 %v3288
    %v3570 = vunpack.c.l.b16 %v3289
    %v3571 = vunpack.c.h.b16 %v3289
    %v3572 = vunpack.c.l.b16 %v3290
    %v3573 = vunpack.c.h.b16 %v3290
    %v3574 = vunpack.c.l.b16 %v3291
    %v3575 = vunpack.c.h.b16 %v3291
    %v3576 = vunpack.c.l.b16 %v3292
    %v3577 = vunpack.c.h.b16 %v3292
    %v3578 = vunpack.c.l.b16 %v3293
    %v3579 = vunpack.c.h.b16 %v3293
    %v3580 = vunpack.c.l.b16 %v3294
    %v3581 = vunpack.c.h.b16 %v3294
    %v3582 = vunpack.c.l.b16 %v3295
    %v3583 = vunpack.c.h.b16 %v3295
    %v3584 = vunpack.c.l.b16 %v3296
    %v3585 = vunpack.c.h.b16 %v3296
    %v3586 = vunpack.c.l.b16 %v3297
    %v3587 = vunpack.c.h.b16 %v3297
    %v3588 = vunpack.c.l.b16 %v3298
    %v3589 = vunpack.c.h.b16 %v3298
    %v3590 = vunpack.c.l.b16 %v3299
    %v3591 = vunpack.c.h.b16 %v3299
    %v3592 = vunpack.c.l.b16 %v3300
    %v3593 = vunpack.c.h.b16 %v3300
    %v3594 = vunpack.c.l.b16 %v3301
    %v3595 = vunpack.c.h.b16 %v3301
    %v3596 = vunpack.c.l.b16 %v3302
    %v3597 = vunpack.c.h.b16 %v3302
    %v3598 = vunpack.c.l.b16 %v3303
    %v3599 = vunpack.c.h.b16 %v3303
    %v3600 = vunpack.c.l.b16 %v3304
    %v3601 = vunpack.c.h.b16 %v3304
    %v3602 = vunpack.c.l.b16 %v3305
    %v3603 = vunpack.c.h.b16 %v3305
    %v3604 = vunpack.c.l.b16 %v3306
    %v3605 = vunpack.c.h.b16 %v3306
    %v3606 = vunpack.c.l.b16 %v3307
    %v3607 = vunpack.c.h.b16 %v3307
    %v3608 = vunpack.c.l.b16 %v3308
    %v3609 = vunpack.c.h.b16 %v3308
    %v3610 = vunpack.c.l.b16 %v3309
    %v3611 = vunpack.c.h.b16 %v3309
    %v3612 = vunpack.c.l.b16 %v3310
    %v3613 = vunpack.c.h.b16 %v3310
    %v3614 = vunpack.c.l.b16 %v3311
    %v3615 = vunpack.c.h.b16 %v3311
    %v3616 = vunpack.c.l.b16 %v3312
    %v3617 = vunpack.c.h.b16 %v3312
    %v3618 = vunpack.c.l.b16 %v3313
    %v3619 = vunpack.c.h.b16 %v3313
    %v3620 = vunpack.c.l.b16 %v3314
    %v3621 = vunpack.c.h.b16 %v3314
    %v3622 = vunpack.c.l.b16 %v3315
    %v3623 = vunpack.c.h.b16 %v3315
    %v3624 = vunpack.c.l.b16 %v3316
    %v3625 = vunpack.c.h.b16 %v3316
    %v3626 = vunpack.c.l.b16 %v3317
    %v3627 = vunpack.c.h.b16 %v3317
    %v3628 = vunpack.c.l.b16 %v3318
    %v3629 = vunpack.c.h.b16 %v3318
    %v3630 = vunpack.c.l.b16 %v3319
    %v3631 = vunpack.c.h.b16 %v3319
    %v3632 = vunpack.c.l.b16 %v3320
    %v3633 = vunpack.c.h.b16 %v3320
    %v3634 = vunpack.c.l.b16 %v3321
    %v3635 = vunpack.c.h.b16 %v3321
    %v3636 = vunpack.c.l.b16 %v3322
    %v3637 = vunpack.c.h.b16 %v3322
    %v3638 = vunpack.c.l.b16 %v3323
    %v3639 = vunpack.c.h.b16 %v3323
    %v3640 = vunpack.c.l.b16 %v3324
    %v3641 = vunpack.c.h.b16 %v3324
    %v3642 = vunpack.c.l.b16 %v3325
    %v3643 = vunpack.c.h.b16 %v3325
    %v3644 = vunpack.c.l.b16 %v3326
    %v3645 = vunpack.c.h.b16 %v3326
    %v3646 = vunpack.c.l.b16 %v3327
    %v3647 = vunpack.c.h.b16 %v3327
    %v3648 = vunpack.c.l.b16 %v3328
    %v3649 = vunpack.c.h.b16 %v3328
    %v3650 = vunpack.c.l.b16 %v3329
    %v3651 = vunpack.c.h.b16 %v3329
    %v3652 = vunpack.c.l.b16 %v3330
    %v3653 = vunpack.c.h.b16 %v3330
    %v3654 = vunpack.c.l.b16 %v3331
    %v3655 = vunpack.c.h.b16 %v3331
    %v3656 = vunpack.c.l.b16 %v3332
    %v3657 = vunpack.c.h.b16 %v3332
    %v3658 = vunpack.c.l.b16 %v3333
    %v3659 = vunpack.c.h.b16 %v3333
    %v3660 = vunpack.c.l.b16 %v3334
    %v3661 = vunpack.c.h.b16 %v3334
    %v3662 = vunpack.c.l.b16 %v3335
    %v3663 = vunpack.c.h.b16 %v3335
    %v3664 = vunpack.c.l.b16 %v3336
    %v3665 = vunpack.c.h.b16 %v3336
    %v3666 = vunpack.c.l.b16 %v3337
    %v3667 = vunpack.c.h.b16 %v3337
    %v3668 = vunpack.c.l.b16 %v3338
    %v3669 = vunpack.c.h.b16 %v3338
    %v3670 = vunpack.c.l.b16 %v3339
    %v3671 = vunpack.c.h.b16 %v3339
    %v3672 = vunpack.c.l.b16 %v3340
    %v3673 = vunpack.c.h.b16 %v3340
    %v3674 = vunpack.c.l.b16 %v3341
    %v3675 = vunpack.c.h.b16 %v3341
    %v3676 = vunpack.c.l.b16 %v3342
    %v3677 = vunpack.c.h.b16 %v3342
    %v3678 = vunpack.c.l.b16 %v3343
    %v3679 = vunpack.c.h.b16 %v3343
    %v3680 = vunpack.c.l.b16 %v3344
    %v3681 = vunpack.c.h.b16 %v3344
    %v3682 = vunpack.c.l.b16 %v3345
    %v3683 = vunpack.c.h.b16 %v3345
    %v3684 = vunpack.c.l.b16 %v3346
    %v3685 = vunpack.c.h.b16 %v3346
    %v3686 = vunpack.c.l.b16 %v3347
    %v3687 = vunpack.c.h.b16 %v3347
    %v3688 = vunpack.c.l.b16 %v3348
    %v3689 = vunpack.c.h.b16 %v3348
    %v3690 = vunpack.c.l.b16 %v3349
    %v3691 = vunpack.c.h.b16 %v3349
    %v3692 = vunpack.c.l.b16 %v3350
    %v3693 = vunpack.c.h.b16 %v3350
    %v3694 = vunpack.c.l.b16 %v3351
    %v3695 = vunpack.c.h.b16 %v3351
    %v3696 = vunpack.c.l.b16 %v3352
    %v3697 = vunpack.c.h.b16 %v3352
    %v3698 = vunpack.c.l.b16 %v3353
    %v3699 = vunpack.c.h.b16 %v3353
    %v3700 = vunpack.c.l.b16 %v3354
    %v3701 = vunpack.c.h.b16 %v3354
    %v3702 = vunpack.c.l.b16 %v3355
    %v3703 = vunpack.c.h.b16 %v3355
    %v3704 = vunpack.c.l.b16 %v3356
    %v3705 = vunpack.c.h.b16 %v3356
    %v3706 = vunpack.c.l.b16 %v3357
    %v3707 = vunpack.c.h.b16 %v3357
    %v3708 = vunpack.c.l.b16 %v3358
    %v3709 = vunpack.c.h.b16 %v3358
    %v3710 = vunpack.c.l.b16 %v3359
    %v3711 = vunpack.c.h.b16 %v3359
    %v3712 = vunpack.c.l.b16 %v3360
    %v3713 = vunpack.c.h.b16 %v3360
    %v3714 = vunpack.c.l.b16 %v3361
    %v3715 = vunpack.c.h.b16 %v3361
    %v3716 = vunpack.c.l.b16 %v3362
    %v3717 = vunpack.c.h.b16 %v3362
    %v3718 = vunpack.c.l.b16 %v3363
    %v3719 = vunpack.c.h.b16 %v3363
    %v3720 = vunpack.c.l.b16 %v3364
    %v3721 = vunpack.c.h.b16 %v3364
    %v3722 = vunpack.c.l.b16 %v3365
    %v3723 = vunpack.c.h.b16 %v3365
    %v3724 = vunpack.c.l.b16 %v3366
    %v3725 = vunpack.c.h.b16 %v3366
    %v3726 = vunpack.c.l.b16 %v3367
    %v3727 = vunpack.c.h.b16 %v3367
    %v3728 = vunpack.c.l.b16 %v3368
    %v3729 = vunpack.c.h.b16 %v3368
    %v3730 = vunpack.c.l.b16 %v3369
    %v3731 = vunpack.c.h.b16 %v3369
    %v3732 = vunpack.c.l.b16 %v3370
    %v3733 = vunpack.c.h.b16 %v3370
    %v3734 = vunpack.c.l.b16 %v3371
    %v3735 = vunpack.c.h.b16 %v3371
    %v3736 = vunpack.c.l.b16 %v3372
    %v3737 = vunpack.c.h.b16 %v3372
    %v3738 = vunpack.c.l.b16 %v3373
    %v3739 = vunpack.c.h.b16 %v3373
    %v3740 = vunpack.c.l.b16 %v3374
    %v3741 = vunpack.c.h.b16 %v3374
    %v3742 = vunpack.c.l.b16 %v3375
    %v3743 = vunpack.c.h.b16 %v3375
    %v3744 = vunpack.c.l.b16 %v3376
    %v3745 = vunpack.c.h.b16 %v3376
    %v3746 = vunpack.c.l.b16 %v3377
    %v3747 = vunpack.c.h.b16 %v3377
    %v3748 = vunpack.c.l.b16 %v3378
    %v3749 = vunpack.c.h.b16 %v3378
    %v3750 = vunpack.c.l.b16 %v3379
    %v3751 = vunpack.c.h.b16 %v3379
    %v3752 = vunpack.c.l.b16 %v3380
    %v3753 = vunpack.c.h.b16 %v3380
    %v3754 = vunpack.c.l.b16 %v3381
    %v3755 = vunpack.c.h.b16 %v3381
    %v3756 = vunpack.c.l.b16 %v3382
    %v3757 = vunpack.c.h.b16 %v3382
    %v3758 = vunpack.c.l.b16 %v3383
    %v3759 = vunpack.c.h.b16 %v3383
    %v3760 = vunpack.c.l.b16 %v3384
    %v3761 = vunpack.c.h.b16 %v3384
    %v3762 = vunpack.c.l.b16 %v3385
    %v3763 = vunpack.c.h.b16 %v3385
    %v3764 = vunpack.c.l.b16 %v3386
    %v3765 = vunpack.c.h.b16 %v3386
    %v3766 = vunpack.c.l.b16 %v3387
    %v3767 = vunpack.c.h.b16 %v3387
    %v3768 = vunpack.c.l.b16 %v3388
    %v3769 = vunpack.c.h.b16 %v3388
    %v3770 = vunpack.c.l.b16 %v3389
    %v3771 = vunpack.c.h.b16 %v3389
    %v3772 = vunpack.c.l.b16 %v3390
    %v3773 = vunpack.c.h.b16 %v3390
    %v3774 = vunpack.c.l.b16 %v3391
    %v3775 = vunpack.c.h.b16 %v3391
    %v3776 = vunpack.c.l.b16 %v3392
    %v3777 = vunpack.c.h.b16 %v3392
    %v3778 = vunpack.c.l.b16 %v3393
    %v3779 = vunpack.c.h.b16 %v3393
    %v3780 = vunpack.c.l.b16 %v3394
    %v3781 = vunpack.c.h.b16 %v3394
    %v3782 = vunpack.c.l.b16 %v3395
    %v3783 = vunpack.c.h.b16 %v3395
    %v3784 = vunpack.c.l.b16 %v3396
    %v3785 = vunpack.c.h.b16 %v3396
    %v3786 = vunpack.c.l.b16 %v3397
    %v3787 = vunpack.c.h.b16 %v3397
    %v3788 = vunpack.c.l.b16 %v3398
    %v3789 = vunpack.c.h.b16 %v3398
    %v3790 = vunpack.c.l.b16 %v3399
    %v3791 = vunpack.c.h.b16 %v3399
    %v3792 = vunpack.c.l.b16 %v3400
    %v3793 = vunpack.c.h.b16 %v3400
    %v3794 = vunpack.c.l.b16 %v3401
    %v3795 = vunpack.c.h.b16 %v3401
    %v3796 = vpack.c.b16 %v3544, %v3540
    %v3797 = vpack.c.b16 %v3545, %v3541
    %v3798 = vpack.c.b16 %v3546, %v3542
    %v3799 = vpack.c.b16 %v3547, %v3543
    %v3800 = vpack.c.b16 %v3552, %v3548
    %v3801 = vpack.c.b16 %v3553, %v3549
    %v3802 = vpack.c.b16 %v3554, %v3550
    %v3803 = vpack.c.b16 %v3555, %v3551
    %v3804 = vpack.c.b16 %v3560, %v3556
    %v3805 = vpack.c.b16 %v3561, %v3557
    %v3806 = vpack.c.b16 %v3562, %v3558
    %v3807 = vpack.c.b16 %v3563, %v3559
    %v3808 = vpack.c.b16 %v3568, %v3564
    %v3809 = vpack.c.b16 %v3569, %v3565
    %v3810 = vpack.c.b16 %v3570, %v3566
    %v3811 = vpack.c.b16 %v3571, %v3567
    %v3812 = vpack.c.b16 %v3576, %v3572
    %v3813 = vpack.c.b16 %v3577, %v3573
    %v3814 = vpack.c.b16 %v3578, %v3574
    %v3815 = vpack.c.b16 %v3579, %v3575
    %v3816 = vpack.c.b16 %v3584, %v3580
    %v3817 = vpack.c.b16 %v3585, %v3581
    %v3818 = vpack.c.b16 %v3586, %v3582
    %v3819 = vpack.c.b16 %v3587, %v3583
    %v3820 = vpack.c.b16 %v3592, %v3588
    %v3821 = vpack.c.b16 %v3593, %v3589
    %v3822 = vpack.c.b16 %v3594, %v3590
    %v3823 = vpack.c.b16 %v3595, %v3591
    %v3824 = vpack.c.b16 %v3600, %v3596
    %v3825 = vpack.c.b16 %v3601, %v3597
    %v3826 = vpack.c.b16 %v3602, %v3598
    %v3827 = vpack.c.b16 %v3603, %v3599
    %v3828 = vpack.c.b16 %v3608, %v3604
    %v3829 = vpack.c.b16 %v3609, %v3605
    %v3830 = vpack.c.b16 %v3610, %v3606
    %v3831 = vpack.c.b16 %v3611, %v3607
    %v3832 = vpack.c.b16 %v3616, %v3612
    %v3833 = vpack.c.b16 %v3617, %v3613
    %v3834 = vpack.c.b16 %v3618, %v3614
    %v3835 = vpack.c.b16 %v3619, %v3615
    %v3836 = vpack.c.b16 %v3624, %v3620
    %v3837 = vpack.c.b16 %v3625, %v3621
    %v3838 = vpack.c.b16 %v3626, %v3622
    %v3839 = vpack.c.b16 %v3627, %v3623
    %v3840 = vpack.c.b16 %v3632, %v3628
    %v3841 = vpack.c.b16 %v3633, %v3629
    %v3842 = vpack.c.b16 %v3634, %v3630
    %v3843 = vpack.c.b16 %v3635, %v3631
    %v3844 = vpack.c.b16 %v3640, %v3636
    %v3845 = vpack.c.b16 %v3641, %v3637
    %v3846 = vpack.c.b16 %v3642, %v3638
    %v3847 = vpack.c.b16 %v3643, %v3639
    %v3848 = vpack.c.b16 %v3648, %v3644
    %v3849 = vpack.c.b16 %v3649, %v3645
    %v3850 = vpack.c.b16 %v3650, %v3646
    %v3851 = vpack.c.b16 %v3651, %v3647
    %v3852 = vpack.c.b16 %v3656, %v3652
    %v3853 = vpack.c.b16 %v3657, %v3653
    %v3854 = vpack.c.b16 %v3658, %v3654
    %v3855 = vpack.c.b16 %v3659, %v3655
    %v3856 = vpack.c.b16 %v3664, %v3660
    %v3857 = vpack.c.b16 %v3665, %v3661
    %v3858 = vpack.c.b16 %v3666, %v3662
    %v3859 = vpack.c.b16 %v3667, %v3663
    %v3860 = vpack.c.b16 %v3672, %v3668
    %v3861 = vpack.c.b16 %v3673, %v3669
    %v3862 = vpack.c.b16 %v3674, %v3670
    %v3863 = vpack.c.b16 %v3675, %v3671
    %v3864 = vpack.c.b16 %v3680, %v3676
    %v3865 = vpack.c.b16 %v3681, %v3677
    %v3866 = vpack.c.b16 %v3682, %v3678
    %v3867 = vpack.c.b16 %v3683, %v3679
    %v3868 = vpack.c.b16 %v3688, %v3684
    %v3869 = vpack.c.b16 %v3689, %v3685
    %v3870 = vpack.c.b16 %v3690, %v3686
    %v3871 = vpack.c.b16 %v3691, %v3687
    %v3872 = vpack.c.b16 %v3696, %v3692
    %v3873 = vpack.c.b16 %v3697, %v3693
    %v3874 = vpack.c.b16 %v3698, %v3694
    %v3875 = vpack.c.b16 %v3699, %v3695
    %v3876 = vpack.c.b16 %v3704, %v3700
    %v3877 = vpack.c.b16 %v3705, %v3701
    %v3878 = vpack.c.b16 %v3706, %v3702
    %v3879 = vpack.c.b16 %v3707, %v3703
    %v3880 = vpack.c.b16 %v3712, %v3708
    %v3881 = vpack.c.b16 %v3713, %v3709
    %v3882 = vpack.c.b16 %v3714, %v3710
    %v3883 = vpack.c.b16 %v3715, %v3711
    %v3884 = vpack.c.b16 %v3720, %v3716
    %v3885 = vpack.c.b16 %v3721, %v3717
    %v3886 = vpack.c.b16 %v3722, %v3718
    %v3887 = vpack.c.b16 %v3723, %v3719
    %v3888 = vpack.c.b16 %v3728, %v3724
    %v3889 = vpack.c.b16 %v3729, %v3725
    %v3890 = vpack.c.b16 %v3730, %v3726
    %v3891 = vpack.c.b16 %v3731, %v3727
    %v3892 = vpack.c.b16 %v3736, %v3732
    %v3893 = vpack.c.b16 %v3737, %v3733
    %v3894 = vpack.c.b16 %v3738, %v3734
    %v3895 = vpack.c.b16 %v3739, %v3735
    %v3896 = vpack.c.b16 %v3744, %v3740
    %v3897 = vpack.c.b16 %v3745, %v3741
    %v3898 = vpack.c.b16 %v3746, %v3742
    %v3899 = vpack.c.b16 %v3747, %v3743
    %v3900 = vpack.c.b16 %v3752, %v3748
    %v3901 = vpack.c.b16 %v3753, %v3749
    %v3902 = vpack.c.b16 %v3754, %v3750
    %v3903 = vpack.c.b16 %v3755, %v3751
    %v3904 = vpack.c.b16 %v3760, %v3756
    %v3905 = vpack.c.b16 %v3761, %v3757
    %v3906 = vpack.c.b16 %v3762, %v3758
    %v3907 = vpack.c.b16 %v3763, %v3759
    %v3908 = vpack.c.b16 %v3768, %v3764
    %v3909 = vpack.c.b16 %v3769, %v3765
    %v3910 = vpack.c.b16 %v3770, %v3766
    %v3911 = vpack.c.b16 %v3771, %v3767
    %v3912 = vpack.c.b16 %v3776, %v3772
    %v3913 = vpack.c.b16 %v3777, %v3773
    %v3914 = vpack.c.b16 %v3778, %v3774
    %v3915 = vpack.c.b16 %v3779, %v3775
    %v3916 = vpack.c.b16 %v3784, %v3780
    %v3917 = vpack.c.b16 %v3785, %v3781
    %v3918 = vpack.c.b16 %v3786, %v3782
    %v3919 = vpack.c.b16 %v3787, %v3783
    %v3920 = vpack.c.b16 %v3792, %v3788
    %v3921 = vpack.c.b16 %v3793, %v3789
    %v3922 = vpack.c.b16 %v3794, %v3790
    %v3923 = vpack.c.b16 %v3795, %v3791
    %4052 = vmatpush.bf16.msra.mxu0 %v3824
    %4053 = vmatpush.bf16.msra.mxu0 %v3820
    %4054 = vmatpush.bf16.msra.mxu0 %v3816
    %4055 = vmatpush.bf16.msra.mxu0 %v3812
    %4056 = vmatpush.bf16.msra.mxu0 %v3808
    %4057 = vmatpush.bf16.msra.mxu0 %v3804
    %4058 = vmatpush.bf16.msra.mxu0 %v3800
    %4059 = vmatpush.bf16.msra.mxu0 %v3796
    %4060 = vmatmul.bf16.gmra.mxu0 %v3270
    %v4061 = vpop.f32.mrf.mxu0
    %v4062 = vadd.f32 %v3404, %v4061
    %v4063 = vpop.f32.mrf.mxu0
    %4064 = vdwg.mxu0
    %4065 = vmatpush.bf16.msra.mxu0 %v3856
    %4066 = vmatpush.bf16.msra.mxu0 %v3852
    %4067 = vmatpush.bf16.msra.mxu0 %v3848
    %4068 = vmatpush.bf16.msra.mxu0 %v3844
    %4069 = vmatpush.bf16.msra.mxu0 %v3840
    %4070 = vmatpush.bf16.msra.mxu0 %v3836
    %4071 = vmatpush.bf16.msra.mxu0 %v3832
    %4072 = vmatpush.bf16.msra.mxu0 %v3828
    %4073 = vmatmul.bf16.gmra.mxu0 %v3271
    %v4074 = vpop.f32.mrf.mxu0
    %v4075 = vadd.f32 %v4062, %v4074
    %v4076 = vpop.f32.mrf.mxu0
    %4077 = vdwg.mxu0
    %4078 = vmatpush.bf16.msra.mxu0 %v3888
    %4079 = vmatpush.bf16.msra.mxu0 %v3884
    %4080 = vmatpush.bf16.msra.mxu0 %v3880
    %4081 = vmatpush.bf16.msra.mxu0 %v3876
    %4082 = vmatpush.bf16.msra.mxu0 %v3872
    %4083 = vmatpush.bf16.msra.mxu0 %v3868
    %4084 = vmatpush.bf16.msra.mxu0 %v3864
    %4085 = vmatpush.bf16.msra.mxu0 %v3860
    %4086 = vmatmul.bf16.gmra.mxu0 %v3272
    %v4087 = vpop.f32.mrf.mxu0
    %v4088 = vadd.f32 %v4075, %v4087
    %v4089 = vpop.f32.mrf.mxu0
    %4090 = vdwg.mxu0
    %4091 = vmatpush.bf16.msra.mxu0 %v3920
    %4092 = vmatpush.bf16.msra.mxu0 %v3916
    %4093 = vmatpush.bf16.msra.mxu0 %v3912
    %4094 = vmatpush.bf16.msra.mxu0 %v3908
    %4095 = vmatpush.bf16.msra.mxu0 %v3904
    %4096 = vmatpush.bf16.msra.mxu0 %v3900
    %4097 = vmatpush.bf16.msra.mxu0 %v3896
    %4098 = vmatpush.bf16.msra.mxu0 %v3892
    %4099 = vmatmul.bf16.gmra.mxu0 %v3273
    %v4100 = vpop.f32.mrf.mxu0
    %v4101 = vadd.f32 %v4088, %v4100
    %v4102 = vpop.f32.mrf.mxu0
    %4103 = vdwg.mxu0
    %4104 = vmatpush.bf16.msra.mxu0 %v3825
    %4105 = vmatpush.bf16.msra.mxu0 %v3821
    %4106 = vmatpush.bf16.msra.mxu0 %v3817
    %4107 = vmatpush.bf16.msra.mxu0 %v3813
    %4108 = vmatpush.bf16.msra.mxu0 %v3809
    %4109 = vmatpush.bf16.msra.mxu0 %v3805
    %4110 = vmatpush.bf16.msra.mxu0 %v3801
    %4111 = vmatpush.bf16.msra.mxu0 %v3797
    %4112 = vmatmul.bf16.gmra.mxu0 %v3270
    %v4113 = vpop.f32.mrf.mxu0
    %v4114 = vadd.f32 %v3405, %v4113
    %v4115 = vpop.f32.mrf.mxu0
    %4116 = vdwg.mxu0
    %4117 = vmatpush.bf16.msra.mxu0 %v3857
    %4118 = vmatpush.bf16.msra.mxu0 %v3853
    %4119 = vmatpush.bf16.msra.mxu0 %v3849
    %4120 = vmatpush.bf16.msra.mxu0 %v3845
    %4121 = vmatpush.bf16.msra.mxu0 %v3841
    %4122 = vmatpush.bf16.msra.mxu0 %v3837
    %4123 = vmatpush.bf16.msra.mxu0 %v3833
    %4124 = vmatpush.bf16.msra.mxu0 %v3829
    %4125 = vmatmul.bf16.gmra.mxu0 %v3271
    %v4126 = vpop.f32.mrf.mxu0
    %v4127 = vadd.f32 %v4114, %v4126
    %v4128 = vpop.f32.mrf.mxu0
    %4129 = vdwg.mxu0
    %4130 = vmatpush.bf16.msra.mxu0 %v3889
    %4131 = vmatpush.bf16.msra.mxu0 %v3885
    %4132 = vmatpush.bf16.msra.mxu0 %v3881
    %4133 = vmatpush.bf16.msra.mxu0 %v3877
    %4134 = vmatpush.bf16.msra.mxu0 %v3873
    %4135 = vmatpush.bf16.msra.mxu0 %v3869
    %4136 = vmatpush.bf16.msra.mxu0 %v3865
    %4137 = vmatpush.bf16.msra.mxu0 %v3861
    %4138 = vmatmul.bf16.gmra.mxu0 %v3272
    %v4139 = vpop.f32.mrf.mxu0
    %v4140 = vadd.f32 %v4127, %v4139
    %v4141 = vpop.f32.mrf.mxu0
    %4142 = vdwg.mxu0
    %4143 = vmatpush.bf16.msra.mxu0 %v3921
    %4144 = vmatpush.bf16.msra.mxu0 %v3917
    %4145 = vmatpush.bf16.msra.mxu0 %v3913
    %4146 = vmatpush.bf16.msra.mxu0 %v3909
    %4147 = vmatpush.bf16.msra.mxu0 %v3905
    %4148 = vmatpush.bf16.msra.mxu0 %v3901
    %4149 = vmatpush.bf16.msra.mxu0 %v3897
    %4150 = vmatpush.bf16.msra.mxu0 %v3893
    %4151 = vmatmul.bf16.gmra.mxu0 %v3273
    %v4152 = vpop.f32.mrf.mxu0
    %v4153 = vadd.f32 %v4140, %v4152
    %v4154 = vpop.f32.mrf.mxu0
    %4155 = vdwg.mxu0
    %4156 = vmatpush.bf16.msra.mxu0 %v3826
    %4157 = vmatpush.bf16.msra.mxu0 %v3822
    %4158 = vmatpush.bf16.msra.mxu0 %v3818
    %4159 = vmatpush.bf16.msra.mxu0 %v3814
    %4160 = vmatpush.bf16.msra.mxu0 %v3810
    %4161 = vmatpush.bf16.msra.mxu0 %v3806
    %4162 = vmatpush.bf16.msra.mxu0 %v3802
    %4163 = vmatpush.bf16.msra.mxu0 %v3798
    %4164 = vmatmul.bf16.gmra.mxu0 %v3270
    %v4165 = vpop.f32.mrf.mxu0
    %v4166 = vadd.f32 %v3406, %v4165
    %v4167 = vpop.f32.mrf.mxu0
    %4168 = vdwg.mxu0
    %4169 = vmatpush.bf16.msra.mxu0 %v3858
    %4170 = vmatpush.bf16.msra.mxu0 %v3854
    %4171 = vmatpush.bf16.msra.mxu0 %v3850
    %4172 = vmatpush.bf16.msra.mxu0 %v3846
    %4173 = vmatpush.bf16.msra.mxu0 %v3842
    %4174 = vmatpush.bf16.msra.mxu0 %v3838
    %4175 = vmatpush.bf16.msra.mxu0 %v3834
    %4176 = vmatpush.bf16.msra.mxu0 %v3830
    %4177 = vmatmul.bf16.gmra.mxu0 %v3271
    %v4178 = vpop.f32.mrf.mxu0
    %v4179 = vadd.f32 %v4166, %v4178
    %v4180 = vpop.f32.mrf.mxu0
    %4181 = vdwg.mxu0
    %4182 = vmatpush.bf16.msra.mxu0 %v3890
    %4183 = vmatpush.bf16.msra.mxu0 %v3886
    %4184 = vmatpush.bf16.msra.mxu0 %v3882
    %4185 = vmatpush.bf16.msra.mxu0 %v3878
    %4186 = vmatpush.bf16.msra.mxu0 %v3874
    %4187 = vmatpush.bf16.msra.mxu0 %v3870
    %4188 = vmatpush.bf16.msra.mxu0 %v3866
    %4189 = vmatpush.bf16.msra.mxu0 %v3862
    %4190 = vmatmul.bf16.gmra.mxu0 %v3272
    %v4191 = vpop.f32.mrf.mxu0
    %v4192 = vadd.f32 %v4179, %v4191
    %v4193 = vpop.f32.mrf.mxu0
    %4194 = vdwg.mxu0
    %4195 = vmatpush.bf16.msra.mxu0 %v3922
    %4196 = vmatpush.bf16.msra.mxu0 %v3918
    %4197 = vmatpush.bf16.msra.mxu0 %v3914
    %4198 = vmatpush.bf16.msra.mxu0 %v3910
    %4199 = vmatpush.bf16.msra.mxu0 %v3906
    %4200 = vmatpush.bf16.msra.mxu0 %v3902
    %4201 = vmatpush.bf16.msra.mxu0 %v3898
    %4202 = vmatpush.bf16.msra.mxu0 %v3894
    %4203 = vmatmul.bf16.gmra.mxu0 %v3273
    %v4204 = vpop.f32.mrf.mxu0
    %v4205 = vadd.f32 %v4192, %v4204
    %v4206 = vpop.f32.mrf.mxu0
    %4207 = vdwg.mxu0
    %4208 = vmatpush.bf16.msra.mxu0 %v3827
    %4209 = vmatpush.bf16.msra.mxu0 %v3823
    %4210 = vmatpush.bf16.msra.mxu0 %v3819
    %4211 = vmatpush.bf16.msra.mxu0 %v3815
    %4212 = vmatpush.bf16.msra.mxu0 %v3811
    %4213 = vmatpush.bf16.msra.mxu0 %v3807
    %4214 = vmatpush.bf16.msra.mxu0 %v3803
    %4215 = vmatpush.bf16.msra.mxu0 %v3799
    %4216 = vmatmul.bf16.gmra.mxu0 %v3270
    %v4217 = vpop.f32.mrf.mxu0
    %v4218 = vadd.f32 %v3407, %v4217
    %v4219 = vpop.f32.mrf.mxu0
    %4220 = vdwg.mxu0
    %4221 = vmatpush.bf16.msra.mxu0 %v3859
    %4222 = vmatpush.bf16.msra.mxu0 %v3855
    %4223 = vmatpush.bf16.msra.mxu0 %v3851
    %4224 = vmatpush.bf16.msra.mxu0 %v3847
    %4225 = vmatpush.bf16.msra.mxu0 %v3843
    %4226 = vmatpush.bf16.msra.mxu0 %v3839
    %4227 = vmatpush.bf16.msra.mxu0 %v3835
    %4228 = vmatpush.bf16.msra.mxu0 %v3831
    %4229 = vmatmul.bf16.gmra.mxu0 %v3271
    %v4230 = vpop.f32.mrf.mxu0
    %v4231 = vadd.f32 %v4218, %v4230
    %v4232 = vpop.f32.mrf.mxu0
    %4233 = vdwg.mxu0
    %4234 = vmatpush.bf16.msra.mxu0 %v3891
    %4235 = vmatpush.bf16.msra.mxu0 %v3887
    %4236 = vmatpush.bf16.msra.mxu0 %v3883
    %4237 = vmatpush.bf16.msra.mxu0 %v3879
    %4238 = vmatpush.bf16.msra.mxu0 %v3875
    %4239 = vmatpush.bf16.msra.mxu0 %v3871
    %4240 = vmatpush.bf16.msra.mxu0 %v3867
    %4241 = vmatpush.bf16.msra.mxu0 %v3863
    %4242 = vmatmul.bf16.gmra.mxu0 %v3272
    %v4243 = vpop.f32.mrf.mxu0
    %v4244 = vadd.f32 %v4231, %v4243
    %v4245 = vpop.f32.mrf.mxu0
    %4246 = vdwg.mxu0
    %4247 = vmatpush.bf16.msra.mxu0 %v3923
    %4248 = vmatpush.bf16.msra.mxu0 %v3919
    %4249 = vmatpush.bf16.msra.mxu0 %v3915
    %4250 = vmatpush.bf16.msra.mxu0 %v3911
    %4251 = vmatpush.bf16.msra.mxu0 %v3907
    %4252 = vmatpush.bf16.msra.mxu0 %v3903
    %4253 = vmatpush.bf16.msra.mxu0 %v3899
    %4254 = vmatpush.bf16.msra.mxu0 %v3895
    %4255 = vmatmul.bf16.gmra.mxu0 %v3273
    %v4256 = vpop.f32.mrf.mxu0
    %v4257 = vadd.f32 %v4244, %v4256
    %v4258 = vpop.f32.mrf.mxu0
    %4259 = vdwg.mxu0
    %v4260 = vsel %vm2193, %v4101, 0.0
    %v4261 = vsel %vm2193, %v4153, 0.0
    %v4262 = vadd.f32 %v4260, %v4261
    %v4263 = vsel %vm2193, %v4205, 0.0
    %v4264 = vadd.f32 %v4262, %v4263
    %v4265 = vsel %vm2193, %v4257, 0.0
    %v4266 = vadd.f32 %v4264, %v4265
    %4267 = vadd.xlane.f32.xlu0 %v4266
    %v4268 = vpop.xlane.xlu0 %4267
    %v4269 = vmul.f32 %v4268, %v2209
    %v4270 = vsub.f32 %v4101, %v4269
    %v4271 = vsub.f32 %v4153, %v4269
    %v4272 = vsub.f32 %v4205, %v4269
    %v4273 = vsub.f32 %v4257, %v4269
    %v4274 = vmul.f32 %v4270, %v4270
    %v4275 = vmul.f32 %v4271, %v4271
    %v4276 = vmul.f32 %v4272, %v4272
    %v4277 = vmul.f32 %v4273, %v4273
    %v4278 = vsel %vm2193, %v4274, 0.0
    %v4279 = vsel %vm2193, %v4275, 0.0
    %v4280 = vadd.f32 %v4278, %v4279
    %v4281 = vsel %vm2193, %v4276, 0.0
    %v4282 = vadd.f32 %v4280, %v4281
    %v4283 = vsel %vm2193, %v4277, 0.0
    %v4284 = vadd.f32 %v4282, %v4283
    %4285 = vadd.xlane.f32.xlu0 %v4284
    %v4286 = vpop.xlane.xlu0 %4285
    %v4287 = vmul.f32 %v4286, %v2209
    %v4288 = vadd.f32 %v4287, 1e-05
    %v4289 = vrsqrt.pop %v4288
    %v4290 = vmul.f32 %v4289, %v4288
    %v4291 = vmul.f32 %v4290, %v4289
    %v4292 = vmul.f32 0.5, %v4291
    %v4293 = vsub.f32 1.5, %v4292
    %v4294 = vmul.f32 %v4289, %v4293
    %vm4295 = vweird.f32 %v4288
    %vm4296 = vweird.f32 %v4289
    %vm4297 = vmor %vm4295, %vm4296
    %v4298 = vsel %vm4297, %v4289, %v4294
    %v4299 = vmul.f32 %v4270, %v4298
    %v4300 = vmul.f32 %v4271, %v4298
    %v4301 = vmul.f32 %v4272, %v4298
    %v4302 = vmul.f32 %v4273, %v4298
    %v4303 = vld [vmem:[#allocation17] sm:$0xf]
    %v4305 = vperm.slane %v4303, 0
    %v4306 = vperm.slane %v4303, 1
    %v4307 = vperm.slane %v4303, 2
    %v4308 = vperm.slane %v4303, 3
    %v4313 = vmul.f32 %v4299, %v4305
    %v4314 = vmul.f32 %v4300, %v4306
    %v4315 = vmul.f32 %v4301, %v4307
    %v4316 = vmul.f32 %v4302, %v4308
    %v4317 = vld [vmem:[#allocation19] sm:$0xf]
    %v4319 = vperm.slane %v4317, 0
    %v4320 = vperm.slane %v4317, 1
    %v4321 = vperm.slane %v4317, 2
    %v4322 = vperm.slane %v4317, 3
    %v4327 = vadd.f32 %v4313, %v4319
    %v4328 = vadd.f32 %v4314, %v4320
    %v4329 = vadd.f32 %v4315, %v4321
    %v4330 = vadd.f32 %v4316, %v4322
    %vm4331 = vcmp.ge.f32.partialorder %v4327, 0.0
    %vm4332 = vcmp.ge.f32.partialorder %v4328, 0.0
    %vm4333 = vcmp.ge.f32.partialorder %v4329, 0.0
    %vm4334 = vcmp.ge.f32.partialorder %v4330, 0.0
    %v4335 = vmul.f32 %v4327, 0.01
    %v4336 = vmul.f32 %v4328, 0.01
    %v4337 = vmul.f32 %v4329, 0.01
    %v4338 = vmul.f32 %v4330, 0.01
    %v4339 = vsel %vm4331, %v4327, %v4335
    %v4340 = vsel %vm4332, %v4328, %v4336
    %v4341 = vsel %vm4333, %v4329, %v4337
    %v4342 = vsel %vm4334, %v4330, %v4338
    %v4343 = vadd.f32 %v2280, %v4339
    %v4344 = vadd.f32 %v2281, %v4340
    %v4345 = vadd.f32 %v2282, %v4341
    %v4346 = vadd.f32 %v2283, %v4342
    %v4351 = vrot.slane %v4344, 6
    %v4352 = vrot.slane %v4345, 4
    %v4353 = vrot.slane %v4346, 2
    %v4354 = vsel %vm2193, %v4343, %v4351
    %vm4355 = vcmask 1045508
    %v4356 = vsel %vm4355, %v4352, %v4353
    %vm4357 = vcmask 1043456
    %v4358 = vsel %vm4357, %v4354, %v4356
    %4360 = vst [vmem:[#allocation20] sm:$0xff] %v4358
    // Predicated region
    $region98: #{tpu_custom_call.1} parent=1 // pred_check
      _
    $region99: #{tpu_custom_call.1} parent=1 // pred_check_branch
      %4362 = sbr.rel (0) target = $region101
    $region100: #{tpu_custom_call.1} parent=1 // pred_region
      %4364 = vsyncadd [#allocation4], 0
      %s4366 = sshll.u32 [#allocation20], 4
      %s4367 = int_to_ptr.vmem [resolvable:$true] %s4366
      %s4368 = sshll.u32 %s13, 4
      %s4369 = int_to_ptr.hbm [resolvable:$true] %s4368
      %4371 = dma.vmem_to_hbm [thread:$0]  %s4367, 128, %s4369, [#allocation4]
    $region101: #{tpu_custom_call.1} parent=1 // pred_fallthru
      _
    // Predicated region
    $region102: #{tpu_custom_call.1} parent=1 // pred_check
      _
    $region103: #{tpu_custom_call.1} parent=1 // pred_check_branch
      %4373 = sbr.rel (0) target = $region105
    $region104: #{tpu_custom_call.1} parent=1 // pred_region
      %4375 = dma.done [#allocation4], 128
    $region105: #{tpu_custom_call.1} parent=1 // pred_fallthru
      _
    %4376 = vsyncpa [#allocation3], 1
    %4377 = vsyncpa [#allocation6], 1
    %4378 = vsyncpa [#allocation9], 1
    %4379 = vsyncpa [#allocation12], 1
    %4380 = vsyncpa [#allocation15], 1
    %4381 = vsyncpa [#allocation18], 1
    %4382 = vsyncpa [#allocation4], 1

</llo_original>
